<compile_context>
chip_gen: v5e
topology: v5e:2x2
jax: 0.10.0
libtpu: 0.0.40
codegen_flags: <defaults>
</compile_context>

<pallas_src>
import jax
import jax.numpy as jnp
from jax.experimental import pallas as pl
from jax.experimental.pallas import tpu as pltpu

IN_C, OUT_C, K = 3, 6, 3


def conv2d_pallas(x, w, b):
    """x: (N, C, H, W); w: (OC, C, KH, KW) [PyTorch OIHW]; b: (OC,)."""
    N, C, H, W = x.shape
    OC, _, KH, KW = w.shape
    OH, OW = H - KH + 1, W - KW + 1
    HW = H * W

    # Zero-extension size (128-aligned) so every tap offset is a static lane
    # shift that never reads out of bounds.
    max_d = (KH - 1) * W + (KW - 1)
    pad = ((max_d + 127) // 128) * 128

    def kernel(x_ref, w_ref, b_ref, o_ref):
        # x_ref: (N, C, HW)  f32 in VMEM   (lane-dense: HW on lanes)
        # w_ref: (OC*C*KH*KW,) f32 in SMEM (scalar weights)
        # b_ref: (OC,)         f32 in SMEM (scalar biases)
        # o_ref: (OC, N, HW) f32 in VMEM   (lane-dense output slab)
        x = x_ref[...]                                            # (N, C, HW)
        x_ext = jnp.concatenate(
            [x, jnp.zeros((N, C, pad), x.dtype)], axis=-1)        # aligned concat

        # f32 accumulators in "W-space" layout, bias folded into the init.
        accs = [jnp.full((N, HW), b_ref[oc], jnp.float32) for oc in range(OC)]

        # Fully unrolled scalar-broadcast FMA: 27 lane-shifted operands shared
        # by all 6 output channels; 162 VPU multiply-adds on 2-vreg tiles.
        for c in range(C):
            for kh in range(KH):
                for kw in range(KW):
                    d = kh * W + kw
                    xs = x_ext[:, c, d:d + HW]                    # (N, HW) lane shift
                    t = kh * KW + kw
                    for oc in range(OC):
                        w_sc = w_ref[(oc * C + c) * (KH * KW) + t]
                        accs[oc] = accs[oc] + w_sc * xs

        # Full-lane (unmasked) stores, one per output channel.
        for oc in range(OC):
            o_ref[oc] = accs[oc].astype(o_ref.dtype)

    x_flat = x.reshape(N, C, HW)        # contiguous -> metadata-only reshape
    w_flat = w.reshape(-1)              # (54,) scalars for SMEM

    out_flat = pl.pallas_call(
        kernel,
        out_shape=jax.ShapeDtypeStruct((OC, N, HW), x.dtype),
        in_specs=[
            pl.BlockSpec(memory_space=pltpu.MemorySpace.VMEM),
            pl.BlockSpec(memory_space=pltpu.MemorySpace.SMEM),
            pl.BlockSpec(memory_space=pltpu.MemorySpace.SMEM),
        ],
        out_specs=pl.BlockSpec(memory_space=pltpu.MemorySpace.VMEM),
    )(x_flat, w_flat, b)

    # Tiny layout-only epilogue (~12 KB): back to NCHW and crop the valid
    # window out of the W-space rows.  Fused into the same XLA program by jit.
    out = jnp.transpose(out_flat, (1, 0, 2)).reshape(N, OC, H, W)
    return out[:, :, :OH, :OW]


if __name__ == "__main__":
    key = jax.random.PRNGKey(0)
    kx, kw, kb = jax.random.split(key, 3)

    # Input consistent with Conv2d(in_channels=3): (N=2, C=3, H=16, W=16).
    x = jax.random.normal(kx, (2, IN_C, 16, 16), dtype=jnp.float32)

    # Deterministic parameter init (PyTorch-default-style uniform bound).
    fan_in = IN_C * K * K
    bound = 1.0 / jnp.sqrt(jnp.float32(fan_in))
    w = jax.random.uniform(kw, (OUT_C, IN_C, K, K), jnp.float32, -bound, bound)
    b = jax.random.uniform(kb, (OUT_C,), jnp.float32, -bound, bound)

    conv = jax.jit(conv2d_pallas)
    out = jax.block_until_ready(conv(x, w, b))

    # Reference check against XLA's conv (same semantics as nn.Conv2d).
    ref = jax.lax.conv_general_dilated(
        x, w, window_strides=(1, 1), padding="VALID",
        dimension_numbers=("NCHW", "OIHW", "NCHW"),
    ) + b.reshape(1, OUT_C, 1, 1)

    assert out.shape == (2, OUT_C, 14, 14), out.shape
    assert jnp.allclose(out, ref, atol=1e-5, rtol=1e-5), \
        float(jnp.max(jnp.abs(out - ref)))

    print("KERNEL_OK")
</pallas_src>

<mosaic_0001>
module attributes {stable_mosaic.version = 11 : i64} {
  func.func @kernel(%arg0: memref<2x3x256xf32, #tpu.memory_space<vmem>>, %arg1: memref<162xf32, #tpu.memory_space<smem>>, %arg2: memref<6xf32, #tpu.memory_space<smem>>, %arg3: memref<6x2x256xf32, #tpu.memory_space<vmem>>) attributes {dimension_semantics = [], scalar_prefetch = 0 : i64, scratch_operands = 0 : i64, tpu.core_type = #tpu.core_type<tc>} {
    %c0 = arith.constant 0 : index
    %c0_0 = arith.constant 0 : index
    %c0_1 = arith.constant 0 : index
    %0 = vector.load %arg0[%c0, %c0_0, %c0_1] : memref<2x3x256xf32, #tpu.memory_space<vmem>>, vector<2x3x256xf32>
    %cst = arith.constant 0.000000e+00 : f32
    %1 = vector.broadcast %cst : f32 to vector<2x3x128xf32>
    %2 = tpu.concatenate %0, %1 in 2 : vector<2x3x256xf32>, vector<2x3x128xf32> -> vector<2x3x384xf32>
    %c0_2 = arith.constant 0 : index
    %3 = memref.load %arg2[%c0_2] : memref<6xf32, #tpu.memory_space<smem>>
    %4 = vector.broadcast %3 : f32 to vector<2x256xf32>
    %c1 = arith.constant 1 : index
    %5 = memref.load %arg2[%c1] : memref<6xf32, #tpu.memory_space<smem>>
    %6 = vector.broadcast %5 : f32 to vector<2x256xf32>
    %c2 = arith.constant 2 : index
    %7 = memref.load %arg2[%c2] : memref<6xf32, #tpu.memory_space<smem>>
    %8 = vector.broadcast %7 : f32 to vector<2x256xf32>
    %c3 = arith.constant 3 : index
    %9 = memref.load %arg2[%c3] : memref<6xf32, #tpu.memory_space<smem>>
    %10 = vector.broadcast %9 : f32 to vector<2x256xf32>
    %c4 = arith.constant 4 : index
    %11 = memref.load %arg2[%c4] : memref<6xf32, #tpu.memory_space<smem>>
    %12 = vector.broadcast %11 : f32 to vector<2x256xf32>
    %c5 = arith.constant 5 : index
    %13 = memref.load %arg2[%c5] : memref<6xf32, #tpu.memory_space<smem>>
    %14 = vector.broadcast %13 : f32 to vector<2x256xf32>
    %15 = vector.extract_strided_slice %2 {offsets = [0, 0, 0], sizes = [2, 1, 256], strides = [1, 1, 1]} : vector<2x3x384xf32> to vector<2x1x256xf32>
    %16 = vector.shape_cast %15 : vector<2x1x256xf32> to vector<2x256xf32>
    %c0_3 = arith.constant 0 : index
    %17 = memref.load %arg1[%c0_3] : memref<162xf32, #tpu.memory_space<smem>>
    %18 = vector.broadcast %17 : f32 to vector<2x256xf32>
    %19 = arith.mulf %18, %16 : vector<2x256xf32>
    %20 = arith.addf %4, %19 : vector<2x256xf32>
    %c27 = arith.constant 27 : index
    %21 = memref.load %arg1[%c27] : memref<162xf32, #tpu.memory_space<smem>>
    %22 = vector.broadcast %21 : f32 to vector<2x256xf32>
    %23 = arith.mulf %22, %16 : vector<2x256xf32>
    %24 = arith.addf %6, %23 : vector<2x256xf32>
    %c54 = arith.constant 54 : index
    %25 = memref.load %arg1[%c54] : memref<162xf32, #tpu.memory_space<smem>>
    %26 = vector.broadcast %25 : f32 to vector<2x256xf32>
    %27 = arith.mulf %26, %16 : vector<2x256xf32>
    %28 = arith.addf %8, %27 : vector<2x256xf32>
    %c81 = arith.constant 81 : index
    %29 = memref.load %arg1[%c81] : memref<162xf32, #tpu.memory_space<smem>>
    %30 = vector.broadcast %29 : f32 to vector<2x256xf32>
    %31 = arith.mulf %30, %16 : vector<2x256xf32>
    %32 = arith.addf %10, %31 : vector<2x256xf32>
    %c108 = arith.constant 108 : index
    %33 = memref.load %arg1[%c108] : memref<162xf32, #tpu.memory_space<smem>>
    %34 = vector.broadcast %33 : f32 to vector<2x256xf32>
    %35 = arith.mulf %34, %16 : vector<2x256xf32>
    %36 = arith.addf %12, %35 : vector<2x256xf32>
    %c135 = arith.constant 135 : index
    %37 = memref.load %arg1[%c135] : memref<162xf32, #tpu.memory_space<smem>>
    %38 = vector.broadcast %37 : f32 to vector<2x256xf32>
    %39 = arith.mulf %38, %16 : vector<2x256xf32>
    %40 = arith.addf %14, %39 : vector<2x256xf32>
    %41 = vector.extract_strided_slice %2 {offsets = [0, 0, 1], sizes = [2, 1, 256], strides = [1, 1, 1]} : vector<2x3x384xf32> to vector<2x1x256xf32>
    %42 = vector.shape_cast %41 : vector<2x1x256xf32> to vector<2x256xf32>
    %c1_4 = arith.constant 1 : index
    %43 = memref.load %arg1[%c1_4] : memref<162xf32, #tpu.memory_space<smem>>
    %44 = vector.broadcast %43 : f32 to vector<2x256xf32>
    %45 = arith.mulf %44, %42 : vector<2x256xf32>
    %46 = arith.addf %20, %45 : vector<2x256xf32>
    %c28 = arith.constant 28 : index
    %47 = memref.load %arg1[%c28] : memref<162xf32, #tpu.memory_space<smem>>
    %48 = vector.broadcast %47 : f32 to vector<2x256xf32>
    %49 = arith.mulf %48, %42 : vector<2x256xf32>
    %50 = arith.addf %24, %49 : vector<2x256xf32>
    %c55 = arith.constant 55 : index
    %51 = memref.load %arg1[%c55] : memref<162xf32, #tpu.memory_space<smem>>
    %52 = vector.broadcast %51 : f32 to vector<2x256xf32>
    %53 = arith.mulf %52, %42 : vector<2x256xf32>
    %54 = arith.addf %28, %53 : vector<2x256xf32>
    %c82 = arith.constant 82 : index
    %55 = memref.load %arg1[%c82] : memref<162xf32, #tpu.memory_space<smem>>
    %56 = vector.broadcast %55 : f32 to vector<2x256xf32>
    %57 = arith.mulf %56, %42 : vector<2x256xf32>
    %58 = arith.addf %32, %57 : vector<2x256xf32>
    %c109 = arith.constant 109 : index
    %59 = memref.load %arg1[%c109] : memref<162xf32, #tpu.memory_space<smem>>
    %60 = vector.broadcast %59 : f32 to vector<2x256xf32>
    %61 = arith.mulf %60, %42 : vector<2x256xf32>
    %62 = arith.addf %36, %61 : vector<2x256xf32>
    %c136 = arith.constant 136 : index
    %63 = memref.load %arg1[%c136] : memref<162xf32, #tpu.memory_space<smem>>
    %64 = vector.broadcast %63 : f32 to vector<2x256xf32>
    %65 = arith.mulf %64, %42 : vector<2x256xf32>
    %66 = arith.addf %40, %65 : vector<2x256xf32>
    %67 = vector.extract_strided_slice %2 {offsets = [0, 0, 2], sizes = [2, 1, 256], strides = [1, 1, 1]} : vector<2x3x384xf32> to vector<2x1x256xf32>
    %68 = vector.shape_cast %67 : vector<2x1x256xf32> to vector<2x256xf32>
    %c2_5 = arith.constant 2 : index
    %69 = memref.load %arg1[%c2_5] : memref<162xf32, #tpu.memory_space<smem>>
    %70 = vector.broadcast %69 : f32 to vector<2x256xf32>
    %71 = arith.mulf %70, %68 : vector<2x256xf32>
    %72 = arith.addf %46, %71 : vector<2x256xf32>
    %c29 = arith.constant 29 : index
    %73 = memref.load %arg1[%c29] : memref<162xf32, #tpu.memory_space<smem>>
    %74 = vector.broadcast %73 : f32 to vector<2x256xf32>
    %75 = arith.mulf %74, %68 : vector<2x256xf32>
    %76 = arith.addf %50, %75 : vector<2x256xf32>
    %c56 = arith.constant 56 : index
    %77 = memref.load %arg1[%c56] : memref<162xf32, #tpu.memory_space<smem>>
    %78 = vector.broadcast %77 : f32 to vector<2x256xf32>
    %79 = arith.mulf %78, %68 : vector<2x256xf32>
    %80 = arith.addf %54, %79 : vector<2x256xf32>
    %c83 = arith.constant 83 : index
    %81 = memref.load %arg1[%c83] : memref<162xf32, #tpu.memory_space<smem>>
    %82 = vector.broadcast %81 : f32 to vector<2x256xf32>
    %83 = arith.mulf %82, %68 : vector<2x256xf32>
    %84 = arith.addf %58, %83 : vector<2x256xf32>
    %c110 = arith.constant 110 : index
    %85 = memref.load %arg1[%c110] : memref<162xf32, #tpu.memory_space<smem>>
    %86 = vector.broadcast %85 : f32 to vector<2x256xf32>
    %87 = arith.mulf %86, %68 : vector<2x256xf32>
    %88 = arith.addf %62, %87 : vector<2x256xf32>
    %c137 = arith.constant 137 : index
    %89 = memref.load %arg1[%c137] : memref<162xf32, #tpu.memory_space<smem>>
    %90 = vector.broadcast %89 : f32 to vector<2x256xf32>
    %91 = arith.mulf %90, %68 : vector<2x256xf32>
    %92 = arith.addf %66, %91 : vector<2x256xf32>
    %93 = vector.extract_strided_slice %2 {offsets = [0, 0, 16], sizes = [2, 1, 256], strides = [1, 1, 1]} : vector<2x3x384xf32> to vector<2x1x256xf32>
    %94 = vector.shape_cast %93 : vector<2x1x256xf32> to vector<2x256xf32>
    %c3_6 = arith.constant 3 : index
    %95 = memref.load %arg1[%c3_6] : memref<162xf32, #tpu.memory_space<smem>>
    %96 = vector.broadcast %95 : f32 to vector<2x256xf32>
    %97 = arith.mulf %96, %94 : vector<2x256xf32>
    %98 = arith.addf %72, %97 : vector<2x256xf32>
    %c30 = arith.constant 30 : index
    %99 = memref.load %arg1[%c30] : memref<162xf32, #tpu.memory_space<smem>>
    %100 = vector.broadcast %99 : f32 to vector<2x256xf32>
    %101 = arith.mulf %100, %94 : vector<2x256xf32>
    %102 = arith.addf %76, %101 : vector<2x256xf32>
    %c57 = arith.constant 57 : index
    %103 = memref.load %arg1[%c57] : memref<162xf32, #tpu.memory_space<smem>>
    %104 = vector.broadcast %103 : f32 to vector<2x256xf32>
    %105 = arith.mulf %104, %94 : vector<2x256xf32>
    %106 = arith.addf %80, %105 : vector<2x256xf32>
    %c84 = arith.constant 84 : index
    %107 = memref.load %arg1[%c84] : memref<162xf32, #tpu.memory_space<smem>>
    %108 = vector.broadcast %107 : f32 to vector<2x256xf32>
    %109 = arith.mulf %108, %94 : vector<2x256xf32>
    %110 = arith.addf %84, %109 : vector<2x256xf32>
    %c111 = arith.constant 111 : index
    %111 = memref.load %arg1[%c111] : memref<162xf32, #tpu.memory_space<smem>>
    %112 = vector.broadcast %111 : f32 to vector<2x256xf32>
    %113 = arith.mulf %112, %94 : vector<2x256xf32>
    %114 = arith.addf %88, %113 : vector<2x256xf32>
    %c138 = arith.constant 138 : index
    %115 = memref.load %arg1[%c138] : memref<162xf32, #tpu.memory_space<smem>>
    %116 = vector.broadcast %115 : f32 to vector<2x256xf32>
    %117 = arith.mulf %116, %94 : vector<2x256xf32>
    %118 = arith.addf %92, %117 : vector<2x256xf32>
    %119 = vector.extract_strided_slice %2 {offsets = [0, 0, 17], sizes = [2, 1, 256], strides = [1, 1, 1]} : vector<2x3x384xf32> to vector<2x1x256xf32>
    %120 = vector.shape_cast %119 : vector<2x1x256xf32> to vector<2x256xf32>
    %c4_7 = arith.constant 4 : index
    %121 = memref.load %arg1[%c4_7] : memref<162xf32, #tpu.memory_space<smem>>
    %122 = vector.broadcast %121 : f32 to vector<2x256xf32>
    %123 = arith.mulf %122, %120 : vector<2x256xf32>
    %124 = arith.addf %98, %123 : vector<2x256xf32>
    %c31 = arith.constant 31 : index
    %125 = memref.load %arg1[%c31] : memref<162xf32, #tpu.memory_space<smem>>
    %126 = vector.broadcast %125 : f32 to vector<2x256xf32>
    %127 = arith.mulf %126, %120 : vector<2x256xf32>
    %128 = arith.addf %102, %127 : vector<2x256xf32>
    %c58 = arith.constant 58 : index
    %129 = memref.load %arg1[%c58] : memref<162xf32, #tpu.memory_space<smem>>
    %130 = vector.broadcast %129 : f32 to vector<2x256xf32>
    %131 = arith.mulf %130, %120 : vector<2x256xf32>
    %132 = arith.addf %106, %131 : vector<2x256xf32>
    %c85 = arith.constant 85 : index
    %133 = memref.load %arg1[%c85] : memref<162xf32, #tpu.memory_space<smem>>
    %134 = vector.broadcast %133 : f32 to vector<2x256xf32>
    %135 = arith.mulf %134, %120 : vector<2x256xf32>
    %136 = arith.addf %110, %135 : vector<2x256xf32>
    %c112 = arith.constant 112 : index
    %137 = memref.load %arg1[%c112] : memref<162xf32, #tpu.memory_space<smem>>
    %138 = vector.broadcast %137 : f32 to vector<2x256xf32>
    %139 = arith.mulf %138, %120 : vector<2x256xf32>
    %140 = arith.addf %114, %139 : vector<2x256xf32>
    %c139 = arith.constant 139 : index
    %141 = memref.load %arg1[%c139] : memref<162xf32, #tpu.memory_space<smem>>
    %142 = vector.broadcast %141 : f32 to vector<2x256xf32>
    %143 = arith.mulf %142, %120 : vector<2x256xf32>
    %144 = arith.addf %118, %143 : vector<2x256xf32>
    %145 = vector.extract_strided_slice %2 {offsets = [0, 0, 18], sizes = [2, 1, 256], strides = [1, 1, 1]} : vector<2x3x384xf32> to vector<2x1x256xf32>
    %146 = vector.shape_cast %145 : vector<2x1x256xf32> to vector<2x256xf32>
    %c5_8 = arith.constant 5 : index
    %147 = memref.load %arg1[%c5_8] : memref<162xf32, #tpu.memory_space<smem>>
    %148 = vector.broadcast %147 : f32 to vector<2x256xf32>
    %149 = arith.mulf %148, %146 : vector<2x256xf32>
    %150 = arith.addf %124, %149 : vector<2x256xf32>
    %c32 = arith.constant 32 : index
    %151 = memref.load %arg1[%c32] : memref<162xf32, #tpu.memory_space<smem>>
    %152 = vector.broadcast %151 : f32 to vector<2x256xf32>
    %153 = arith.mulf %152, %146 : vector<2x256xf32>
    %154 = arith.addf %128, %153 : vector<2x256xf32>
    %c59 = arith.constant 59 : index
    %155 = memref.load %arg1[%c59] : memref<162xf32, #tpu.memory_space<smem>>
    %156 = vector.broadcast %155 : f32 to vector<2x256xf32>
    %157 = arith.mulf %156, %146 : vector<2x256xf32>
    %158 = arith.addf %132, %157 : vector<2x256xf32>
    %c86 = arith.constant 86 : index
    %159 = memref.load %arg1[%c86] : memref<162xf32, #tpu.memory_space<smem>>
    %160 = vector.broadcast %159 : f32 to vector<2x256xf32>
    %161 = arith.mulf %160, %146 : vector<2x256xf32>
    %162 = arith.addf %136, %161 : vector<2x256xf32>
    %c113 = arith.constant 113 : index
    %163 = memref.load %arg1[%c113] : memref<162xf32, #tpu.memory_space<smem>>
    %164 = vector.broadcast %163 : f32 to vector<2x256xf32>
    %165 = arith.mulf %164, %146 : vector<2x256xf32>
    %166 = arith.addf %140, %165 : vector<2x256xf32>
    %c140 = arith.constant 140 : index
    %167 = memref.load %arg1[%c140] : memref<162xf32, #tpu.memory_space<smem>>
    %168 = vector.broadcast %167 : f32 to vector<2x256xf32>
    %169 = arith.mulf %168, %146 : vector<2x256xf32>
    %170 = arith.addf %144, %169 : vector<2x256xf32>
    %171 = vector.extract_strided_slice %2 {offsets = [0, 0, 32], sizes = [2, 1, 256], strides = [1, 1, 1]} : vector<2x3x384xf32> to vector<2x1x256xf32>
    %172 = vector.shape_cast %171 : vector<2x1x256xf32> to vector<2x256xf32>
    %c6 = arith.constant 6 : index
    %173 = memref.load %arg1[%c6] : memref<162xf32, #tpu.memory_space<smem>>
    %174 = vector.broadcast %173 : f32 to vector<2x256xf32>
    %175 = arith.mulf %174, %172 : vector<2x256xf32>
    %176 = arith.addf %150, %175 : vector<2x256xf32>
    %c33 = arith.constant 33 : index
    %177 = memref.load %arg1[%c33] : memref<162xf32, #tpu.memory_space<smem>>
    %178 = vector.broadcast %177 : f32 to vector<2x256xf32>
    %179 = arith.mulf %178, %172 : vector<2x256xf32>
    %180 = arith.addf %154, %179 : vector<2x256xf32>
    %c60 = arith.constant 60 : index
    %181 = memref.load %arg1[%c60] : memref<162xf32, #tpu.memory_space<smem>>
    %182 = vector.broadcast %181 : f32 to vector<2x256xf32>
    %183 = arith.mulf %182, %172 : vector<2x256xf32>
    %184 = arith.addf %158, %183 : vector<2x256xf32>
    %c87 = arith.constant 87 : index
    %185 = memref.load %arg1[%c87] : memref<162xf32, #tpu.memory_space<smem>>
    %186 = vector.broadcast %185 : f32 to vector<2x256xf32>
    %187 = arith.mulf %186, %172 : vector<2x256xf32>
    %188 = arith.addf %162, %187 : vector<2x256xf32>
    %c114 = arith.constant 114 : index
    %189 = memref.load %arg1[%c114] : memref<162xf32, #tpu.memory_space<smem>>
    %190 = vector.broadcast %189 : f32 to vector<2x256xf32>
    %191 = arith.mulf %190, %172 : vector<2x256xf32>
    %192 = arith.addf %166, %191 : vector<2x256xf32>
    %c141 = arith.constant 141 : index
    %193 = memref.load %arg1[%c141] : memref<162xf32, #tpu.memory_space<smem>>
    %194 = vector.broadcast %193 : f32 to vector<2x256xf32>
    %195 = arith.mulf %194, %172 : vector<2x256xf32>
    %196 = arith.addf %170, %195 : vector<2x256xf32>
    %197 = vector.extract_strided_slice %2 {offsets = [0, 0, 33], sizes = [2, 1, 256], strides = [1, 1, 1]} : vector<2x3x384xf32> to vector<2x1x256xf32>
    %198 = vector.shape_cast %197 : vector<2x1x256xf32> to vector<2x256xf32>
    %c7 = arith.constant 7 : index
    %199 = memref.load %arg1[%c7] : memref<162xf32, #tpu.memory_space<smem>>
    %200 = vector.broadcast %199 : f32 to vector<2x256xf32>
    %201 = arith.mulf %200, %198 : vector<2x256xf32>
    %202 = arith.addf %176, %201 : vector<2x256xf32>
    %c34 = arith.constant 34 : index
    %203 = memref.load %arg1[%c34] : memref<162xf32, #tpu.memory_space<smem>>
    %204 = vector.broadcast %203 : f32 to vector<2x256xf32>
    %205 = arith.mulf %204, %198 : vector<2x256xf32>
    %206 = arith.addf %180, %205 : vector<2x256xf32>
    %c61 = arith.constant 61 : index
    %207 = memref.load %arg1[%c61] : memref<162xf32, #tpu.memory_space<smem>>
    %208 = vector.broadcast %207 : f32 to vector<2x256xf32>
    %209 = arith.mulf %208, %198 : vector<2x256xf32>
    %210 = arith.addf %184, %209 : vector<2x256xf32>
    %c88 = arith.constant 88 : index
    %211 = memref.load %arg1[%c88] : memref<162xf32, #tpu.memory_space<smem>>
    %212 = vector.broadcast %211 : f32 to vector<2x256xf32>
    %213 = arith.mulf %212, %198 : vector<2x256xf32>
    %214 = arith.addf %188, %213 : vector<2x256xf32>
    %c115 = arith.constant 115 : index
    %215 = memref.load %arg1[%c115] : memref<162xf32, #tpu.memory_space<smem>>
    %216 = vector.broadcast %215 : f32 to vector<2x256xf32>
    %217 = arith.mulf %216, %198 : vector<2x256xf32>
    %218 = arith.addf %192, %217 : vector<2x256xf32>
    %c142 = arith.constant 142 : index
    %219 = memref.load %arg1[%c142] : memref<162xf32, #tpu.memory_space<smem>>
    %220 = vector.broadcast %219 : f32 to vector<2x256xf32>
    %221 = arith.mulf %220, %198 : vector<2x256xf32>
    %222 = arith.addf %196, %221 : vector<2x256xf32>
    %223 = vector.extract_strided_slice %2 {offsets = [0, 0, 34], sizes = [2, 1, 256], strides = [1, 1, 1]} : vector<2x3x384xf32> to vector<2x1x256xf32>
    %224 = vector.shape_cast %223 : vector<2x1x256xf32> to vector<2x256xf32>
    %c8 = arith.constant 8 : index
    %225 = memref.load %arg1[%c8] : memref<162xf32, #tpu.memory_space<smem>>
    %226 = vector.broadcast %225 : f32 to vector<2x256xf32>
    %227 = arith.mulf %226, %224 : vector<2x256xf32>
    %228 = arith.addf %202, %227 : vector<2x256xf32>
    %c35 = arith.constant 35 : index
    %229 = memref.load %arg1[%c35] : memref<162xf32, #tpu.memory_space<smem>>
    %230 = vector.broadcast %229 : f32 to vector<2x256xf32>
    %231 = arith.mulf %230, %224 : vector<2x256xf32>
    %232 = arith.addf %206, %231 : vector<2x256xf32>
    %c62 = arith.constant 62 : index
    %233 = memref.load %arg1[%c62] : memref<162xf32, #tpu.memory_space<smem>>
    %234 = vector.broadcast %233 : f32 to vector<2x256xf32>
    %235 = arith.mulf %234, %224 : vector<2x256xf32>
    %236 = arith.addf %210, %235 : vector<2x256xf32>
    %c89 = arith.constant 89 : index
    %237 = memref.load %arg1[%c89] : memref<162xf32, #tpu.memory_space<smem>>
    %238 = vector.broadcast %237 : f32 to vector<2x256xf32>
    %239 = arith.mulf %238, %224 : vector<2x256xf32>
    %240 = arith.addf %214, %239 : vector<2x256xf32>
    %c116 = arith.constant 116 : index
    %241 = memref.load %arg1[%c116] : memref<162xf32, #tpu.memory_space<smem>>
    %242 = vector.broadcast %241 : f32 to vector<2x256xf32>
    %243 = arith.mulf %242, %224 : vector<2x256xf32>
    %244 = arith.addf %218, %243 : vector<2x256xf32>
    %c143 = arith.constant 143 : index
    %245 = memref.load %arg1[%c143] : memref<162xf32, #tpu.memory_space<smem>>
    %246 = vector.broadcast %245 : f32 to vector<2x256xf32>
    %247 = arith.mulf %246, %224 : vector<2x256xf32>
    %248 = arith.addf %222, %247 : vector<2x256xf32>
    %249 = vector.extract_strided_slice %2 {offsets = [0, 1, 0], sizes = [2, 1, 256], strides = [1, 1, 1]} : vector<2x3x384xf32> to vector<2x1x256xf32>
    %250 = vector.shape_cast %249 : vector<2x1x256xf32> to vector<2x256xf32>
    %c9 = arith.constant 9 : index
    %251 = memref.load %arg1[%c9] : memref<162xf32, #tpu.memory_space<smem>>
    %252 = vector.broadcast %251 : f32 to vector<2x256xf32>
    %253 = arith.mulf %252, %250 : vector<2x256xf32>
    %254 = arith.addf %228, %253 : vector<2x256xf32>
    %c36 = arith.constant 36 : index
    %255 = memref.load %arg1[%c36] : memref<162xf32, #tpu.memory_space<smem>>
    %256 = vector.broadcast %255 : f32 to vector<2x256xf32>
    %257 = arith.mulf %256, %250 : vector<2x256xf32>
    %258 = arith.addf %232, %257 : vector<2x256xf32>
    %c63 = arith.constant 63 : index
    %259 = memref.load %arg1[%c63] : memref<162xf32, #tpu.memory_space<smem>>
    %260 = vector.broadcast %259 : f32 to vector<2x256xf32>
    %261 = arith.mulf %260, %250 : vector<2x256xf32>
    %262 = arith.addf %236, %261 : vector<2x256xf32>
    %c90 = arith.constant 90 : index
    %263 = memref.load %arg1[%c90] : memref<162xf32, #tpu.memory_space<smem>>
    %264 = vector.broadcast %263 : f32 to vector<2x256xf32>
    %265 = arith.mulf %264, %250 : vector<2x256xf32>
    %266 = arith.addf %240, %265 : vector<2x256xf32>
    %c117 = arith.constant 117 : index
    %267 = memref.load %arg1[%c117] : memref<162xf32, #tpu.memory_space<smem>>
    %268 = vector.broadcast %267 : f32 to vector<2x256xf32>
    %269 = arith.mulf %268, %250 : vector<2x256xf32>
    %270 = arith.addf %244, %269 : vector<2x256xf32>
    %c144 = arith.constant 144 : index
    %271 = memref.load %arg1[%c144] : memref<162xf32, #tpu.memory_space<smem>>
    %272 = vector.broadcast %271 : f32 to vector<2x256xf32>
    %273 = arith.mulf %272, %250 : vector<2x256xf32>
    %274 = arith.addf %248, %273 : vector<2x256xf32>
    %275 = vector.extract_strided_slice %2 {offsets = [0, 1, 1], sizes = [2, 1, 256], strides = [1, 1, 1]} : vector<2x3x384xf32> to vector<2x1x256xf32>
    %276 = vector.shape_cast %275 : vector<2x1x256xf32> to vector<2x256xf32>
    %c10 = arith.constant 10 : index
    %277 = memref.load %arg1[%c10] : memref<162xf32, #tpu.memory_space<smem>>
    %278 = vector.broadcast %277 : f32 to vector<2x256xf32>
    %279 = arith.mulf %278, %276 : vector<2x256xf32>
    %280 = arith.addf %254, %279 : vector<2x256xf32>
    %c37 = arith.constant 37 : index
    %281 = memref.load %arg1[%c37] : memref<162xf32, #tpu.memory_space<smem>>
    %282 = vector.broadcast %281 : f32 to vector<2x256xf32>
    %283 = arith.mulf %282, %276 : vector<2x256xf32>
    %284 = arith.addf %258, %283 : vector<2x256xf32>
    %c64 = arith.constant 64 : index
    %285 = memref.load %arg1[%c64] : memref<162xf32, #tpu.memory_space<smem>>
    %286 = vector.broadcast %285 : f32 to vector<2x256xf32>
    %287 = arith.mulf %286, %276 : vector<2x256xf32>
    %288 = arith.addf %262, %287 : vector<2x256xf32>
    %c91 = arith.constant 91 : index
    %289 = memref.load %arg1[%c91] : memref<162xf32, #tpu.memory_space<smem>>
    %290 = vector.broadcast %289 : f32 to vector<2x256xf32>
    %291 = arith.mulf %290, %276 : vector<2x256xf32>
    %292 = arith.addf %266, %291 : vector<2x256xf32>
    %c118 = arith.constant 118 : index
    %293 = memref.load %arg1[%c118] : memref<162xf32, #tpu.memory_space<smem>>
    %294 = vector.broadcast %293 : f32 to vector<2x256xf32>
    %295 = arith.mulf %294, %276 : vector<2x256xf32>
    %296 = arith.addf %270, %295 : vector<2x256xf32>
    %c145 = arith.constant 145 : index
    %297 = memref.load %arg1[%c145] : memref<162xf32, #tpu.memory_space<smem>>
    %298 = vector.broadcast %297 : f32 to vector<2x256xf32>
    %299 = arith.mulf %298, %276 : vector<2x256xf32>
    %300 = arith.addf %274, %299 : vector<2x256xf32>
    %301 = vector.extract_strided_slice %2 {offsets = [0, 1, 2], sizes = [2, 1, 256], strides = [1, 1, 1]} : vector<2x3x384xf32> to vector<2x1x256xf32>
    %302 = vector.shape_cast %301 : vector<2x1x256xf32> to vector<2x256xf32>
    %c11 = arith.constant 11 : index
    %303 = memref.load %arg1[%c11] : memref<162xf32, #tpu.memory_space<smem>>
    %304 = vector.broadcast %303 : f32 to vector<2x256xf32>
    %305 = arith.mulf %304, %302 : vector<2x256xf32>
    %306 = arith.addf %280, %305 : vector<2x256xf32>
    %c38 = arith.constant 38 : index
    %307 = memref.load %arg1[%c38] : memref<162xf32, #tpu.memory_space<smem>>
    %308 = vector.broadcast %307 : f32 to vector<2x256xf32>
    %309 = arith.mulf %308, %302 : vector<2x256xf32>
    %310 = arith.addf %284, %309 : vector<2x256xf32>
    %c65 = arith.constant 65 : index
    %311 = memref.load %arg1[%c65] : memref<162xf32, #tpu.memory_space<smem>>
    %312 = vector.broadcast %311 : f32 to vector<2x256xf32>
    %313 = arith.mulf %312, %302 : vector<2x256xf32>
    %314 = arith.addf %288, %313 : vector<2x256xf32>
    %c92 = arith.constant 92 : index
    %315 = memref.load %arg1[%c92] : memref<162xf32, #tpu.memory_space<smem>>
    %316 = vector.broadcast %315 : f32 to vector<2x256xf32>
    %317 = arith.mulf %316, %302 : vector<2x256xf32>
    %318 = arith.addf %292, %317 : vector<2x256xf32>
    %c119 = arith.constant 119 : index
    %319 = memref.load %arg1[%c119] : memref<162xf32, #tpu.memory_space<smem>>
    %320 = vector.broadcast %319 : f32 to vector<2x256xf32>
    %321 = arith.mulf %320, %302 : vector<2x256xf32>
    %322 = arith.addf %296, %321 : vector<2x256xf32>
    %c146 = arith.constant 146 : index
    %323 = memref.load %arg1[%c146] : memref<162xf32, #tpu.memory_space<smem>>
    %324 = vector.broadcast %323 : f32 to vector<2x256xf32>
    %325 = arith.mulf %324, %302 : vector<2x256xf32>
    %326 = arith.addf %300, %325 : vector<2x256xf32>
    %327 = vector.extract_strided_slice %2 {offsets = [0, 1, 16], sizes = [2, 1, 256], strides = [1, 1, 1]} : vector<2x3x384xf32> to vector<2x1x256xf32>
    %328 = vector.shape_cast %327 : vector<2x1x256xf32> to vector<2x256xf32>
    %c12 = arith.constant 12 : index
    %329 = memref.load %arg1[%c12] : memref<162xf32, #tpu.memory_space<smem>>
    %330 = vector.broadcast %329 : f32 to vector<2x256xf32>
    %331 = arith.mulf %330, %328 : vector<2x256xf32>
    %332 = arith.addf %306, %331 : vector<2x256xf32>
    %c39 = arith.constant 39 : index
    %333 = memref.load %arg1[%c39] : memref<162xf32, #tpu.memory_space<smem>>
    %334 = vector.broadcast %333 : f32 to vector<2x256xf32>
    %335 = arith.mulf %334, %328 : vector<2x256xf32>
    %336 = arith.addf %310, %335 : vector<2x256xf32>
    %c66 = arith.constant 66 : index
    %337 = memref.load %arg1[%c66] : memref<162xf32, #tpu.memory_space<smem>>
    %338 = vector.broadcast %337 : f32 to vector<2x256xf32>
    %339 = arith.mulf %338, %328 : vector<2x256xf32>
    %340 = arith.addf %314, %339 : vector<2x256xf32>
    %c93 = arith.constant 93 : index
    %341 = memref.load %arg1[%c93] : memref<162xf32, #tpu.memory_space<smem>>
    %342 = vector.broadcast %341 : f32 to vector<2x256xf32>
    %343 = arith.mulf %342, %328 : vector<2x256xf32>
    %344 = arith.addf %318, %343 : vector<2x256xf32>
    %c120 = arith.constant 120 : index
    %345 = memref.load %arg1[%c120] : memref<162xf32, #tpu.memory_space<smem>>
    %346 = vector.broadcast %345 : f32 to vector<2x256xf32>
    %347 = arith.mulf %346, %328 : vector<2x256xf32>
    %348 = arith.addf %322, %347 : vector<2x256xf32>
    %c147 = arith.constant 147 : index
    %349 = memref.load %arg1[%c147] : memref<162xf32, #tpu.memory_space<smem>>
    %350 = vector.broadcast %349 : f32 to vector<2x256xf32>
    %351 = arith.mulf %350, %328 : vector<2x256xf32>
    %352 = arith.addf %326, %351 : vector<2x256xf32>
    %353 = vector.extract_strided_slice %2 {offsets = [0, 1, 17], sizes = [2, 1, 256], strides = [1, 1, 1]} : vector<2x3x384xf32> to vector<2x1x256xf32>
    %354 = vector.shape_cast %353 : vector<2x1x256xf32> to vector<2x256xf32>
    %c13 = arith.constant 13 : index
    %355 = memref.load %arg1[%c13] : memref<162xf32, #tpu.memory_space<smem>>
    %356 = vector.broadcast %355 : f32 to vector<2x256xf32>
    %357 = arith.mulf %356, %354 : vector<2x256xf32>
    %358 = arith.addf %332, %357 : vector<2x256xf32>
    %c40 = arith.constant 40 : index
    %359 = memref.load %arg1[%c40] : memref<162xf32, #tpu.memory_space<smem>>
    %360 = vector.broadcast %359 : f32 to vector<2x256xf32>
    %361 = arith.mulf %360, %354 : vector<2x256xf32>
    %362 = arith.addf %336, %361 : vector<2x256xf32>
    %c67 = arith.constant 67 : index
    %363 = memref.load %arg1[%c67] : memref<162xf32, #tpu.memory_space<smem>>
    %364 = vector.broadcast %363 : f32 to vector<2x256xf32>
    %365 = arith.mulf %364, %354 : vector<2x256xf32>
    %366 = arith.addf %340, %365 : vector<2x256xf32>
    %c94 = arith.constant 94 : index
    %367 = memref.load %arg1[%c94] : memref<162xf32, #tpu.memory_space<smem>>
    %368 = vector.broadcast %367 : f32 to vector<2x256xf32>
    %369 = arith.mulf %368, %354 : vector<2x256xf32>
    %370 = arith.addf %344, %369 : vector<2x256xf32>
    %c121 = arith.constant 121 : index
    %371 = memref.load %arg1[%c121] : memref<162xf32, #tpu.memory_space<smem>>
    %372 = vector.broadcast %371 : f32 to vector<2x256xf32>
    %373 = arith.mulf %372, %354 : vector<2x256xf32>
    %374 = arith.addf %348, %373 : vector<2x256xf32>
    %c148 = arith.constant 148 : index
    %375 = memref.load %arg1[%c148] : memref<162xf32, #tpu.memory_space<smem>>
    %376 = vector.broadcast %375 : f32 to vector<2x256xf32>
    %377 = arith.mulf %376, %354 : vector<2x256xf32>
    %378 = arith.addf %352, %377 : vector<2x256xf32>
    %379 = vector.extract_strided_slice %2 {offsets = [0, 1, 18], sizes = [2, 1, 256], strides = [1, 1, 1]} : vector<2x3x384xf32> to vector<2x1x256xf32>
    %380 = vector.shape_cast %379 : vector<2x1x256xf32> to vector<2x256xf32>
    %c14 = arith.constant 14 : index
    %381 = memref.load %arg1[%c14] : memref<162xf32, #tpu.memory_space<smem>>
    %382 = vector.broadcast %381 : f32 to vector<2x256xf32>
    %383 = arith.mulf %382, %380 : vector<2x256xf32>
    %384 = arith.addf %358, %383 : vector<2x256xf32>
    %c41 = arith.constant 41 : index
    %385 = memref.load %arg1[%c41] : memref<162xf32, #tpu.memory_space<smem>>
    %386 = vector.broadcast %385 : f32 to vector<2x256xf32>
    %387 = arith.mulf %386, %380 : vector<2x256xf32>
    %388 = arith.addf %362, %387 : vector<2x256xf32>
    %c68 = arith.constant 68 : index
    %389 = memref.load %arg1[%c68] : memref<162xf32, #tpu.memory_space<smem>>
    %390 = vector.broadcast %389 : f32 to vector<2x256xf32>
    %391 = arith.mulf %390, %380 : vector<2x256xf32>
    %392 = arith.addf %366, %391 : vector<2x256xf32>
    %c95 = arith.constant 95 : index
    %393 = memref.load %arg1[%c95] : memref<162xf32, #tpu.memory_space<smem>>
    %394 = vector.broadcast %393 : f32 to vector<2x256xf32>
    %395 = arith.mulf %394, %380 : vector<2x256xf32>
    %396 = arith.addf %370, %395 : vector<2x256xf32>
    %c122 = arith.constant 122 : index
    %397 = memref.load %arg1[%c122] : memref<162xf32, #tpu.memory_space<smem>>
    %398 = vector.broadcast %397 : f32 to vector<2x256xf32>
    %399 = arith.mulf %398, %380 : vector<2x256xf32>
    %400 = arith.addf %374, %399 : vector<2x256xf32>
    %c149 = arith.constant 149 : index
    %401 = memref.load %arg1[%c149] : memref<162xf32, #tpu.memory_space<smem>>
    %402 = vector.broadcast %401 : f32 to vector<2x256xf32>
    %403 = arith.mulf %402, %380 : vector<2x256xf32>
    %404 = arith.addf %378, %403 : vector<2x256xf32>
    %405 = vector.extract_strided_slice %2 {offsets = [0, 1, 32], sizes = [2, 1, 256], strides = [1, 1, 1]} : vector<2x3x384xf32> to vector<2x1x256xf32>
    %406 = vector.shape_cast %405 : vector<2x1x256xf32> to vector<2x256xf32>
    %c15 = arith.constant 15 : index
    %407 = memref.load %arg1[%c15] : memref<162xf32, #tpu.memory_space<smem>>
    %408 = vector.broadcast %407 : f32 to vector<2x256xf32>
    %409 = arith.mulf %408, %406 : vector<2x256xf32>
    %410 = arith.addf %384, %409 : vector<2x256xf32>
    %c42 = arith.constant 42 : index
    %411 = memref.load %arg1[%c42] : memref<162xf32, #tpu.memory_space<smem>>
    %412 = vector.broadcast %411 : f32 to vector<2x256xf32>
    %413 = arith.mulf %412, %406 : vector<2x256xf32>
    %414 = arith.addf %388, %413 : vector<2x256xf32>
    %c69 = arith.constant 69 : index
    %415 = memref.load %arg1[%c69] : memref<162xf32, #tpu.memory_space<smem>>
    %416 = vector.broadcast %415 : f32 to vector<2x256xf32>
    %417 = arith.mulf %416, %406 : vector<2x256xf32>
    %418 = arith.addf %392, %417 : vector<2x256xf32>
    %c96 = arith.constant 96 : index
    %419 = memref.load %arg1[%c96] : memref<162xf32, #tpu.memory_space<smem>>
    %420 = vector.broadcast %419 : f32 to vector<2x256xf32>
    %421 = arith.mulf %420, %406 : vector<2x256xf32>
    %422 = arith.addf %396, %421 : vector<2x256xf32>
    %c123 = arith.constant 123 : index
    %423 = memref.load %arg1[%c123] : memref<162xf32, #tpu.memory_space<smem>>
    %424 = vector.broadcast %423 : f32 to vector<2x256xf32>
    %425 = arith.mulf %424, %406 : vector<2x256xf32>
    %426 = arith.addf %400, %425 : vector<2x256xf32>
    %c150 = arith.constant 150 : index
    %427 = memref.load %arg1[%c150] : memref<162xf32, #tpu.memory_space<smem>>
    %428 = vector.broadcast %427 : f32 to vector<2x256xf32>
    %429 = arith.mulf %428, %406 : vector<2x256xf32>
    %430 = arith.addf %404, %429 : vector<2x256xf32>
    %431 = vector.extract_strided_slice %2 {offsets = [0, 1, 33], sizes = [2, 1, 256], strides = [1, 1, 1]} : vector<2x3x384xf32> to vector<2x1x256xf32>
    %432 = vector.shape_cast %431 : vector<2x1x256xf32> to vector<2x256xf32>
    %c16 = arith.constant 16 : index
    %433 = memref.load %arg1[%c16] : memref<162xf32, #tpu.memory_space<smem>>
    %434 = vector.broadcast %433 : f32 to vector<2x256xf32>
    %435 = arith.mulf %434, %432 : vector<2x256xf32>
    %436 = arith.addf %410, %435 : vector<2x256xf32>
    %c43 = arith.constant 43 : index
    %437 = memref.load %arg1[%c43] : memref<162xf32, #tpu.memory_space<smem>>
    %438 = vector.broadcast %437 : f32 to vector<2x256xf32>
    %439 = arith.mulf %438, %432 : vector<2x256xf32>
    %440 = arith.addf %414, %439 : vector<2x256xf32>
    %c70 = arith.constant 70 : index
    %441 = memref.load %arg1[%c70] : memref<162xf32, #tpu.memory_space<smem>>
    %442 = vector.broadcast %441 : f32 to vector<2x256xf32>
    %443 = arith.mulf %442, %432 : vector<2x256xf32>
    %444 = arith.addf %418, %443 : vector<2x256xf32>
    %c97 = arith.constant 97 : index
    %445 = memref.load %arg1[%c97] : memref<162xf32, #tpu.memory_space<smem>>
    %446 = vector.broadcast %445 : f32 to vector<2x256xf32>
    %447 = arith.mulf %446, %432 : vector<2x256xf32>
    %448 = arith.addf %422, %447 : vector<2x256xf32>
    %c124 = arith.constant 124 : index
    %449 = memref.load %arg1[%c124] : memref<162xf32, #tpu.memory_space<smem>>
    %450 = vector.broadcast %449 : f32 to vector<2x256xf32>
    %451 = arith.mulf %450, %432 : vector<2x256xf32>
    %452 = arith.addf %426, %451 : vector<2x256xf32>
    %c151 = arith.constant 151 : index
    %453 = memref.load %arg1[%c151] : memref<162xf32, #tpu.memory_space<smem>>
    %454 = vector.broadcast %453 : f32 to vector<2x256xf32>
    %455 = arith.mulf %454, %432 : vector<2x256xf32>
    %456 = arith.addf %430, %455 : vector<2x256xf32>
    %457 = vector.extract_strided_slice %2 {offsets = [0, 1, 34], sizes = [2, 1, 256], strides = [1, 1, 1]} : vector<2x3x384xf32> to vector<2x1x256xf32>
    %458 = vector.shape_cast %457 : vector<2x1x256xf32> to vector<2x256xf32>
    %c17 = arith.constant 17 : index
    %459 = memref.load %arg1[%c17] : memref<162xf32, #tpu.memory_space<smem>>
    %460 = vector.broadcast %459 : f32 to vector<2x256xf32>
    %461 = arith.mulf %460, %458 : vector<2x256xf32>
    %462 = arith.addf %436, %461 : vector<2x256xf32>
    %c44 = arith.constant 44 : index
    %463 = memref.load %arg1[%c44] : memref<162xf32, #tpu.memory_space<smem>>
    %464 = vector.broadcast %463 : f32 to vector<2x256xf32>
    %465 = arith.mulf %464, %458 : vector<2x256xf32>
    %466 = arith.addf %440, %465 : vector<2x256xf32>
    %c71 = arith.constant 71 : index
    %467 = memref.load %arg1[%c71] : memref<162xf32, #tpu.memory_space<smem>>
    %468 = vector.broadcast %467 : f32 to vector<2x256xf32>
    %469 = arith.mulf %468, %458 : vector<2x256xf32>
    %470 = arith.addf %444, %469 : vector<2x256xf32>
    %c98 = arith.constant 98 : index
    %471 = memref.load %arg1[%c98] : memref<162xf32, #tpu.memory_space<smem>>
    %472 = vector.broadcast %471 : f32 to vector<2x256xf32>
    %473 = arith.mulf %472, %458 : vector<2x256xf32>
    %474 = arith.addf %448, %473 : vector<2x256xf32>
    %c125 = arith.constant 125 : index
    %475 = memref.load %arg1[%c125] : memref<162xf32, #tpu.memory_space<smem>>
    %476 = vector.broadcast %475 : f32 to vector<2x256xf32>
    %477 = arith.mulf %476, %458 : vector<2x256xf32>
    %478 = arith.addf %452, %477 : vector<2x256xf32>
    %c152 = arith.constant 152 : index
    %479 = memref.load %arg1[%c152] : memref<162xf32, #tpu.memory_space<smem>>
    %480 = vector.broadcast %479 : f32 to vector<2x256xf32>
    %481 = arith.mulf %480, %458 : vector<2x256xf32>
    %482 = arith.addf %456, %481 : vector<2x256xf32>
    %483 = vector.extract_strided_slice %2 {offsets = [0, 2, 0], sizes = [2, 1, 256], strides = [1, 1, 1]} : vector<2x3x384xf32> to vector<2x1x256xf32>
    %484 = vector.shape_cast %483 : vector<2x1x256xf32> to vector<2x256xf32>
    %c18 = arith.constant 18 : index
    %485 = memref.load %arg1[%c18] : memref<162xf32, #tpu.memory_space<smem>>
    %486 = vector.broadcast %485 : f32 to vector<2x256xf32>
    %487 = arith.mulf %486, %484 : vector<2x256xf32>
    %488 = arith.addf %462, %487 : vector<2x256xf32>
    %c45 = arith.constant 45 : index
    %489 = memref.load %arg1[%c45] : memref<162xf32, #tpu.memory_space<smem>>
    %490 = vector.broadcast %489 : f32 to vector<2x256xf32>
    %491 = arith.mulf %490, %484 : vector<2x256xf32>
    %492 = arith.addf %466, %491 : vector<2x256xf32>
    %c72 = arith.constant 72 : index
    %493 = memref.load %arg1[%c72] : memref<162xf32, #tpu.memory_space<smem>>
    %494 = vector.broadcast %493 : f32 to vector<2x256xf32>
    %495 = arith.mulf %494, %484 : vector<2x256xf32>
    %496 = arith.addf %470, %495 : vector<2x256xf32>
    %c99 = arith.constant 99 : index
    %497 = memref.load %arg1[%c99] : memref<162xf32, #tpu.memory_space<smem>>
    %498 = vector.broadcast %497 : f32 to vector<2x256xf32>
    %499 = arith.mulf %498, %484 : vector<2x256xf32>
    %500 = arith.addf %474, %499 : vector<2x256xf32>
    %c126 = arith.constant 126 : index
    %501 = memref.load %arg1[%c126] : memref<162xf32, #tpu.memory_space<smem>>
    %502 = vector.broadcast %501 : f32 to vector<2x256xf32>
    %503 = arith.mulf %502, %484 : vector<2x256xf32>
    %504 = arith.addf %478, %503 : vector<2x256xf32>
    %c153 = arith.constant 153 : index
    %505 = memref.load %arg1[%c153] : memref<162xf32, #tpu.memory_space<smem>>
    %506 = vector.broadcast %505 : f32 to vector<2x256xf32>
    %507 = arith.mulf %506, %484 : vector<2x256xf32>
    %508 = arith.addf %482, %507 : vector<2x256xf32>
    %509 = vector.extract_strided_slice %2 {offsets = [0, 2, 1], sizes = [2, 1, 256], strides = [1, 1, 1]} : vector<2x3x384xf32> to vector<2x1x256xf32>
    %510 = vector.shape_cast %509 : vector<2x1x256xf32> to vector<2x256xf32>
    %c19 = arith.constant 19 : index
    %511 = memref.load %arg1[%c19] : memref<162xf32, #tpu.memory_space<smem>>
    %512 = vector.broadcast %511 : f32 to vector<2x256xf32>
    %513 = arith.mulf %512, %510 : vector<2x256xf32>
    %514 = arith.addf %488, %513 : vector<2x256xf32>
    %c46 = arith.constant 46 : index
    %515 = memref.load %arg1[%c46] : memref<162xf32, #tpu.memory_space<smem>>
    %516 = vector.broadcast %515 : f32 to vector<2x256xf32>
    %517 = arith.mulf %516, %510 : vector<2x256xf32>
    %518 = arith.addf %492, %517 : vector<2x256xf32>
    %c73 = arith.constant 73 : index
    %519 = memref.load %arg1[%c73] : memref<162xf32, #tpu.memory_space<smem>>
    %520 = vector.broadcast %519 : f32 to vector<2x256xf32>
    %521 = arith.mulf %520, %510 : vector<2x256xf32>
    %522 = arith.addf %496, %521 : vector<2x256xf32>
    %c100 = arith.constant 100 : index
    %523 = memref.load %arg1[%c100] : memref<162xf32, #tpu.memory_space<smem>>
    %524 = vector.broadcast %523 : f32 to vector<2x256xf32>
    %525 = arith.mulf %524, %510 : vector<2x256xf32>
    %526 = arith.addf %500, %525 : vector<2x256xf32>
    %c127 = arith.constant 127 : index
    %527 = memref.load %arg1[%c127] : memref<162xf32, #tpu.memory_space<smem>>
    %528 = vector.broadcast %527 : f32 to vector<2x256xf32>
    %529 = arith.mulf %528, %510 : vector<2x256xf32>
    %530 = arith.addf %504, %529 : vector<2x256xf32>
    %c154 = arith.constant 154 : index
    %531 = memref.load %arg1[%c154] : memref<162xf32, #tpu.memory_space<smem>>
    %532 = vector.broadcast %531 : f32 to vector<2x256xf32>
    %533 = arith.mulf %532, %510 : vector<2x256xf32>
    %534 = arith.addf %508, %533 : vector<2x256xf32>
    %535 = vector.extract_strided_slice %2 {offsets = [0, 2, 2], sizes = [2, 1, 256], strides = [1, 1, 1]} : vector<2x3x384xf32> to vector<2x1x256xf32>
    %536 = vector.shape_cast %535 : vector<2x1x256xf32> to vector<2x256xf32>
    %c20 = arith.constant 20 : index
    %537 = memref.load %arg1[%c20] : memref<162xf32, #tpu.memory_space<smem>>
    %538 = vector.broadcast %537 : f32 to vector<2x256xf32>
    %539 = arith.mulf %538, %536 : vector<2x256xf32>
    %540 = arith.addf %514, %539 : vector<2x256xf32>
    %c47 = arith.constant 47 : index
    %541 = memref.load %arg1[%c47] : memref<162xf32, #tpu.memory_space<smem>>
    %542 = vector.broadcast %541 : f32 to vector<2x256xf32>
    %543 = arith.mulf %542, %536 : vector<2x256xf32>
    %544 = arith.addf %518, %543 : vector<2x256xf32>
    %c74 = arith.constant 74 : index
    %545 = memref.load %arg1[%c74] : memref<162xf32, #tpu.memory_space<smem>>
    %546 = vector.broadcast %545 : f32 to vector<2x256xf32>
    %547 = arith.mulf %546, %536 : vector<2x256xf32>
    %548 = arith.addf %522, %547 : vector<2x256xf32>
    %c101 = arith.constant 101 : index
    %549 = memref.load %arg1[%c101] : memref<162xf32, #tpu.memory_space<smem>>
    %550 = vector.broadcast %549 : f32 to vector<2x256xf32>
    %551 = arith.mulf %550, %536 : vector<2x256xf32>
    %552 = arith.addf %526, %551 : vector<2x256xf32>
    %c128 = arith.constant 128 : index
    %553 = memref.load %arg1[%c128] : memref<162xf32, #tpu.memory_space<smem>>
    %554 = vector.broadcast %553 : f32 to vector<2x256xf32>
    %555 = arith.mulf %554, %536 : vector<2x256xf32>
    %556 = arith.addf %530, %555 : vector<2x256xf32>
    %c155 = arith.constant 155 : index
    %557 = memref.load %arg1[%c155] : memref<162xf32, #tpu.memory_space<smem>>
    %558 = vector.broadcast %557 : f32 to vector<2x256xf32>
    %559 = arith.mulf %558, %536 : vector<2x256xf32>
    %560 = arith.addf %534, %559 : vector<2x256xf32>
    %561 = vector.extract_strided_slice %2 {offsets = [0, 2, 16], sizes = [2, 1, 256], strides = [1, 1, 1]} : vector<2x3x384xf32> to vector<2x1x256xf32>
    %562 = vector.shape_cast %561 : vector<2x1x256xf32> to vector<2x256xf32>
    %c21 = arith.constant 21 : index
    %563 = memref.load %arg1[%c21] : memref<162xf32, #tpu.memory_space<smem>>
    %564 = vector.broadcast %563 : f32 to vector<2x256xf32>
    %565 = arith.mulf %564, %562 : vector<2x256xf32>
    %566 = arith.addf %540, %565 : vector<2x256xf32>
    %c48 = arith.constant 48 : index
    %567 = memref.load %arg1[%c48] : memref<162xf32, #tpu.memory_space<smem>>
    %568 = vector.broadcast %567 : f32 to vector<2x256xf32>
    %569 = arith.mulf %568, %562 : vector<2x256xf32>
    %570 = arith.addf %544, %569 : vector<2x256xf32>
    %c75 = arith.constant 75 : index
    %571 = memref.load %arg1[%c75] : memref<162xf32, #tpu.memory_space<smem>>
    %572 = vector.broadcast %571 : f32 to vector<2x256xf32>
    %573 = arith.mulf %572, %562 : vector<2x256xf32>
    %574 = arith.addf %548, %573 : vector<2x256xf32>
    %c102 = arith.constant 102 : index
    %575 = memref.load %arg1[%c102] : memref<162xf32, #tpu.memory_space<smem>>
    %576 = vector.broadcast %575 : f32 to vector<2x256xf32>
    %577 = arith.mulf %576, %562 : vector<2x256xf32>
    %578 = arith.addf %552, %577 : vector<2x256xf32>
    %c129 = arith.constant 129 : index
    %579 = memref.load %arg1[%c129] : memref<162xf32, #tpu.memory_space<smem>>
    %580 = vector.broadcast %579 : f32 to vector<2x256xf32>
    %581 = arith.mulf %580, %562 : vector<2x256xf32>
    %582 = arith.addf %556, %581 : vector<2x256xf32>
    %c156 = arith.constant 156 : index
    %583 = memref.load %arg1[%c156] : memref<162xf32, #tpu.memory_space<smem>>
    %584 = vector.broadcast %583 : f32 to vector<2x256xf32>
    %585 = arith.mulf %584, %562 : vector<2x256xf32>
    %586 = arith.addf %560, %585 : vector<2x256xf32>
    %587 = vector.extract_strided_slice %2 {offsets = [0, 2, 17], sizes = [2, 1, 256], strides = [1, 1, 1]} : vector<2x3x384xf32> to vector<2x1x256xf32>
    %588 = vector.shape_cast %587 : vector<2x1x256xf32> to vector<2x256xf32>
    %c22 = arith.constant 22 : index
    %589 = memref.load %arg1[%c22] : memref<162xf32, #tpu.memory_space<smem>>
    %590 = vector.broadcast %589 : f32 to vector<2x256xf32>
    %591 = arith.mulf %590, %588 : vector<2x256xf32>
    %592 = arith.addf %566, %591 : vector<2x256xf32>
    %c49 = arith.constant 49 : index
    %593 = memref.load %arg1[%c49] : memref<162xf32, #tpu.memory_space<smem>>
    %594 = vector.broadcast %593 : f32 to vector<2x256xf32>
    %595 = arith.mulf %594, %588 : vector<2x256xf32>
    %596 = arith.addf %570, %595 : vector<2x256xf32>
    %c76 = arith.constant 76 : index
    %597 = memref.load %arg1[%c76] : memref<162xf32, #tpu.memory_space<smem>>
    %598 = vector.broadcast %597 : f32 to vector<2x256xf32>
    %599 = arith.mulf %598, %588 : vector<2x256xf32>
    %600 = arith.addf %574, %599 : vector<2x256xf32>
    %c103 = arith.constant 103 : index
    %601 = memref.load %arg1[%c103] : memref<162xf32, #tpu.memory_space<smem>>
    %602 = vector.broadcast %601 : f32 to vector<2x256xf32>
    %603 = arith.mulf %602, %588 : vector<2x256xf32>
    %604 = arith.addf %578, %603 : vector<2x256xf32>
    %c130 = arith.constant 130 : index
    %605 = memref.load %arg1[%c130] : memref<162xf32, #tpu.memory_space<smem>>
    %606 = vector.broadcast %605 : f32 to vector<2x256xf32>
    %607 = arith.mulf %606, %588 : vector<2x256xf32>
    %608 = arith.addf %582, %607 : vector<2x256xf32>
    %c157 = arith.constant 157 : index
    %609 = memref.load %arg1[%c157] : memref<162xf32, #tpu.memory_space<smem>>
    %610 = vector.broadcast %609 : f32 to vector<2x256xf32>
    %611 = arith.mulf %610, %588 : vector<2x256xf32>
    %612 = arith.addf %586, %611 : vector<2x256xf32>
    %613 = vector.extract_strided_slice %2 {offsets = [0, 2, 18], sizes = [2, 1, 256], strides = [1, 1, 1]} : vector<2x3x384xf32> to vector<2x1x256xf32>
    %614 = vector.shape_cast %613 : vector<2x1x256xf32> to vector<2x256xf32>
    %c23 = arith.constant 23 : index
    %615 = memref.load %arg1[%c23] : memref<162xf32, #tpu.memory_space<smem>>
    %616 = vector.broadcast %615 : f32 to vector<2x256xf32>
    %617 = arith.mulf %616, %614 : vector<2x256xf32>
    %618 = arith.addf %592, %617 : vector<2x256xf32>
    %c50 = arith.constant 50 : index
    %619 = memref.load %arg1[%c50] : memref<162xf32, #tpu.memory_space<smem>>
    %620 = vector.broadcast %619 : f32 to vector<2x256xf32>
    %621 = arith.mulf %620, %614 : vector<2x256xf32>
    %622 = arith.addf %596, %621 : vector<2x256xf32>
    %c77 = arith.constant 77 : index
    %623 = memref.load %arg1[%c77] : memref<162xf32, #tpu.memory_space<smem>>
    %624 = vector.broadcast %623 : f32 to vector<2x256xf32>
    %625 = arith.mulf %624, %614 : vector<2x256xf32>
    %626 = arith.addf %600, %625 : vector<2x256xf32>
    %c104 = arith.constant 104 : index
    %627 = memref.load %arg1[%c104] : memref<162xf32, #tpu.memory_space<smem>>
    %628 = vector.broadcast %627 : f32 to vector<2x256xf32>
    %629 = arith.mulf %628, %614 : vector<2x256xf32>
    %630 = arith.addf %604, %629 : vector<2x256xf32>
    %c131 = arith.constant 131 : index
    %631 = memref.load %arg1[%c131] : memref<162xf32, #tpu.memory_space<smem>>
    %632 = vector.broadcast %631 : f32 to vector<2x256xf32>
    %633 = arith.mulf %632, %614 : vector<2x256xf32>
    %634 = arith.addf %608, %633 : vector<2x256xf32>
    %c158 = arith.constant 158 : index
    %635 = memref.load %arg1[%c158] : memref<162xf32, #tpu.memory_space<smem>>
    %636 = vector.broadcast %635 : f32 to vector<2x256xf32>
    %637 = arith.mulf %636, %614 : vector<2x256xf32>
    %638 = arith.addf %612, %637 : vector<2x256xf32>
    %639 = vector.extract_strided_slice %2 {offsets = [0, 2, 32], sizes = [2, 1, 256], strides = [1, 1, 1]} : vector<2x3x384xf32> to vector<2x1x256xf32>
    %640 = vector.shape_cast %639 : vector<2x1x256xf32> to vector<2x256xf32>
    %c24 = arith.constant 24 : index
    %641 = memref.load %arg1[%c24] : memref<162xf32, #tpu.memory_space<smem>>
    %642 = vector.broadcast %641 : f32 to vector<2x256xf32>
    %643 = arith.mulf %642, %640 : vector<2x256xf32>
    %644 = arith.addf %618, %643 : vector<2x256xf32>
    %c51 = arith.constant 51 : index
    %645 = memref.load %arg1[%c51] : memref<162xf32, #tpu.memory_space<smem>>
    %646 = vector.broadcast %645 : f32 to vector<2x256xf32>
    %647 = arith.mulf %646, %640 : vector<2x256xf32>
    %648 = arith.addf %622, %647 : vector<2x256xf32>
    %c78 = arith.constant 78 : index
    %649 = memref.load %arg1[%c78] : memref<162xf32, #tpu.memory_space<smem>>
    %650 = vector.broadcast %649 : f32 to vector<2x256xf32>
    %651 = arith.mulf %650, %640 : vector<2x256xf32>
    %652 = arith.addf %626, %651 : vector<2x256xf32>
    %c105 = arith.constant 105 : index
    %653 = memref.load %arg1[%c105] : memref<162xf32, #tpu.memory_space<smem>>
    %654 = vector.broadcast %653 : f32 to vector<2x256xf32>
    %655 = arith.mulf %654, %640 : vector<2x256xf32>
    %656 = arith.addf %630, %655 : vector<2x256xf32>
    %c132 = arith.constant 132 : index
    %657 = memref.load %arg1[%c132] : memref<162xf32, #tpu.memory_space<smem>>
    %658 = vector.broadcast %657 : f32 to vector<2x256xf32>
    %659 = arith.mulf %658, %640 : vector<2x256xf32>
    %660 = arith.addf %634, %659 : vector<2x256xf32>
    %c159 = arith.constant 159 : index
    %661 = memref.load %arg1[%c159] : memref<162xf32, #tpu.memory_space<smem>>
    %662 = vector.broadcast %661 : f32 to vector<2x256xf32>
    %663 = arith.mulf %662, %640 : vector<2x256xf32>
    %664 = arith.addf %638, %663 : vector<2x256xf32>
    %665 = vector.extract_strided_slice %2 {offsets = [0, 2, 33], sizes = [2, 1, 256], strides = [1, 1, 1]} : vector<2x3x384xf32> to vector<2x1x256xf32>
    %666 = vector.shape_cast %665 : vector<2x1x256xf32> to vector<2x256xf32>
    %c25 = arith.constant 25 : index
    %667 = memref.load %arg1[%c25] : memref<162xf32, #tpu.memory_space<smem>>
    %668 = vector.broadcast %667 : f32 to vector<2x256xf32>
    %669 = arith.mulf %668, %666 : vector<2x256xf32>
    %670 = arith.addf %644, %669 : vector<2x256xf32>
    %c52 = arith.constant 52 : index
    %671 = memref.load %arg1[%c52] : memref<162xf32, #tpu.memory_space<smem>>
    %672 = vector.broadcast %671 : f32 to vector<2x256xf32>
    %673 = arith.mulf %672, %666 : vector<2x256xf32>
    %674 = arith.addf %648, %673 : vector<2x256xf32>
    %c79 = arith.constant 79 : index
    %675 = memref.load %arg1[%c79] : memref<162xf32, #tpu.memory_space<smem>>
    %676 = vector.broadcast %675 : f32 to vector<2x256xf32>
    %677 = arith.mulf %676, %666 : vector<2x256xf32>
    %678 = arith.addf %652, %677 : vector<2x256xf32>
    %c106 = arith.constant 106 : index
    %679 = memref.load %arg1[%c106] : memref<162xf32, #tpu.memory_space<smem>>
    %680 = vector.broadcast %679 : f32 to vector<2x256xf32>
    %681 = arith.mulf %680, %666 : vector<2x256xf32>
    %682 = arith.addf %656, %681 : vector<2x256xf32>
    %c133 = arith.constant 133 : index
    %683 = memref.load %arg1[%c133] : memref<162xf32, #tpu.memory_space<smem>>
    %684 = vector.broadcast %683 : f32 to vector<2x256xf32>
    %685 = arith.mulf %684, %666 : vector<2x256xf32>
    %686 = arith.addf %660, %685 : vector<2x256xf32>
    %c160 = arith.constant 160 : index
    %687 = memref.load %arg1[%c160] : memref<162xf32, #tpu.memory_space<smem>>
    %688 = vector.broadcast %687 : f32 to vector<2x256xf32>
    %689 = arith.mulf %688, %666 : vector<2x256xf32>
    %690 = arith.addf %664, %689 : vector<2x256xf32>
    %691 = vector.extract_strided_slice %2 {offsets = [0, 2, 34], sizes = [2, 1, 256], strides = [1, 1, 1]} : vector<2x3x384xf32> to vector<2x1x256xf32>
    %692 = vector.shape_cast %691 : vector<2x1x256xf32> to vector<2x256xf32>
    %c26 = arith.constant 26 : index
    %693 = memref.load %arg1[%c26] : memref<162xf32, #tpu.memory_space<smem>>
    %694 = vector.broadcast %693 : f32 to vector<2x256xf32>
    %695 = arith.mulf %694, %692 : vector<2x256xf32>
    %696 = arith.addf %670, %695 : vector<2x256xf32>
    %c53 = arith.constant 53 : index
    %697 = memref.load %arg1[%c53] : memref<162xf32, #tpu.memory_space<smem>>
    %698 = vector.broadcast %697 : f32 to vector<2x256xf32>
    %699 = arith.mulf %698, %692 : vector<2x256xf32>
    %700 = arith.addf %674, %699 : vector<2x256xf32>
    %c80 = arith.constant 80 : index
    %701 = memref.load %arg1[%c80] : memref<162xf32, #tpu.memory_space<smem>>
    %702 = vector.broadcast %701 : f32 to vector<2x256xf32>
    %703 = arith.mulf %702, %692 : vector<2x256xf32>
    %704 = arith.addf %678, %703 : vector<2x256xf32>
    %c107 = arith.constant 107 : index
    %705 = memref.load %arg1[%c107] : memref<162xf32, #tpu.memory_space<smem>>
    %706 = vector.broadcast %705 : f32 to vector<2x256xf32>
    %707 = arith.mulf %706, %692 : vector<2x256xf32>
    %708 = arith.addf %682, %707 : vector<2x256xf32>
    %c134 = arith.constant 134 : index
    %709 = memref.load %arg1[%c134] : memref<162xf32, #tpu.memory_space<smem>>
    %710 = vector.broadcast %709 : f32 to vector<2x256xf32>
    %711 = arith.mulf %710, %692 : vector<2x256xf32>
    %712 = arith.addf %686, %711 : vector<2x256xf32>
    %c161 = arith.constant 161 : index
    %713 = memref.load %arg1[%c161] : memref<162xf32, #tpu.memory_space<smem>>
    %714 = vector.broadcast %713 : f32 to vector<2x256xf32>
    %715 = arith.mulf %714, %692 : vector<2x256xf32>
    %716 = arith.addf %690, %715 : vector<2x256xf32>
    %c0_9 = arith.constant 0 : index
    %c0_10 = arith.constant 0 : index
    %c0_11 = arith.constant 0 : index
    %717 = vector.load %arg3[%c0_9, %c0_10, %c0_11] : memref<6x2x256xf32, #tpu.memory_space<vmem>>, vector<1x2x256xf32>
    %718 = vector.shape_cast %717 : vector<1x2x256xf32> to vector<2x256xf32>
    %719 = vector.shape_cast %696 : vector<2x256xf32> to vector<1x2x256xf32>
    tpu.vector_store %arg3[%c0_9, %c0_10, %c0_11], %719 {strides = array<i32>} : memref<6x2x256xf32, #tpu.memory_space<vmem>>, vector<1x2x256xf32>,
    %c1_12 = arith.constant 1 : index
    %c0_13 = arith.constant 0 : index
    %c0_14 = arith.constant 0 : index
    %720 = vector.load %arg3[%c1_12, %c0_13, %c0_14] : memref<6x2x256xf32, #tpu.memory_space<vmem>>, vector<1x2x256xf32>
    %721 = vector.shape_cast %720 : vector<1x2x256xf32> to vector<2x256xf32>
    %722 = vector.shape_cast %700 : vector<2x256xf32> to vector<1x2x256xf32>
    tpu.vector_store %arg3[%c1_12, %c0_13, %c0_14], %722 {strides = array<i32>} : memref<6x2x256xf32, #tpu.memory_space<vmem>>, vector<1x2x256xf32>,
    %c2_15 = arith.constant 2 : index
    %c0_16 = arith.constant 0 : index
    %c0_17 = arith.constant 0 : index
    %723 = vector.load %arg3[%c2_15, %c0_16, %c0_17] : memref<6x2x256xf32, #tpu.memory_space<vmem>>, vector<1x2x256xf32>
    %724 = vector.shape_cast %723 : vector<1x2x256xf32> to vector<2x256xf32>
    %725 = vector.shape_cast %704 : vector<2x256xf32> to vector<1x2x256xf32>
    tpu.vector_store %arg3[%c2_15, %c0_16, %c0_17], %725 {strides = array<i32>} : memref<6x2x256xf32, #tpu.memory_space<vmem>>, vector<1x2x256xf32>,
    %c3_18 = arith.constant 3 : index
    %c0_19 = arith.constant 0 : index
    %c0_20 = arith.constant 0 : index
    %726 = vector.load %arg3[%c3_18, %c0_19, %c0_20] : memref<6x2x256xf32, #tpu.memory_space<vmem>>, vector<1x2x256xf32>
    %727 = vector.shape_cast %726 : vector<1x2x256xf32> to vector<2x256xf32>
    %728 = vector.shape_cast %708 : vector<2x256xf32> to vector<1x2x256xf32>
    tpu.vector_store %arg3[%c3_18, %c0_19, %c0_20], %728 {strides = array<i32>} : memref<6x2x256xf32, #tpu.memory_space<vmem>>, vector<1x2x256xf32>,
    %c4_21 = arith.constant 4 : index
    %c0_22 = arith.constant 0 : index
    %c0_23 = arith.constant 0 : index
    %729 = vector.load %arg3[%c4_21, %c0_22, %c0_23] : memref<6x2x256xf32, #tpu.memory_space<vmem>>, vector<1x2x256xf32>
    %730 = vector.shape_cast %729 : vector<1x2x256xf32> to vector<2x256xf32>
    %731 = vector.shape_cast %712 : vector<2x256xf32> to vector<1x2x256xf32>
    tpu.vector_store %arg3[%c4_21, %c0_22, %c0_23], %731 {strides = array<i32>} : memref<6x2x256xf32, #tpu.memory_space<vmem>>, vector<1x2x256xf32>,
    %c5_24 = arith.constant 5 : index
    %c0_25 = arith.constant 0 : index
    %c0_26 = arith.constant 0 : index
    %732 = vector.load %arg3[%c5_24, %c0_25, %c0_26] : memref<6x2x256xf32, #tpu.memory_space<vmem>>, vector<1x2x256xf32>
    %733 = vector.shape_cast %732 : vector<1x2x256xf32> to vector<2x256xf32>
    %734 = vector.shape_cast %716 : vector<2x256xf32> to vector<1x2x256xf32>
    tpu.vector_store %arg3[%c5_24, %c0_25, %c0_26], %734 {strides = array<i32>} : memref<6x2x256xf32, #tpu.memory_space<vmem>>, vector<1x2x256xf32>,
    return
  }
}

</mosaic_0001>

<llo_original>
// kernel: conv2d_pallas.1
$region0: #{conv2d_pallas.1}
  #allocation0 [shape = 'u32[]', space=smem, size = 0x4, offset = 0x4, fixed_abs, tag = 'smem constant byte address 0x4 - core index']
  #allocation1 [shape = 'u32[72,128]{1,0:T(1,128)}', space=vmem, size = 0x9000, scoped, tag = 'internal scratch']
  %s0 = inlined_call_operand.vmem [shape: f32[2,3,256], index: 0, kind: input, shape index: {}]
  %s1 = inlined_call_operand.vmem [shape: f32[162], index: 1, kind: input, shape index: {}]
  %s2 = inlined_call_operand.vmem [shape: f32[6], index: 2, kind: input, shape index: {}]
  %s3 = inlined_call_operand.vmem [shape: f32[6,2,256], index: 3, kind: output, shape index: {}]
  %s4 = sld [smem:[#allocation0]]
  $region30: #{conv2d_pallas.1} parent=0
    _
  %s6 = ssub.s32 1, %s4
  %s7 = scalar_select 0, %s6, %s4
  $region1: #{conv2d_pallas.1} parent=0
    #allocation2 [shape = 'u8[1024]{0}', space=smem, size = 0x400, scoped, tag = 'input window, operand 1, single buffered']
    #allocation3 [shape = 's32[1]{0}', space=sflag, size = 0x4, scoped, tag = 'scoped memory for conv2d_pallas.1']
    #allocation4 [shape = 'u8[512]{0}', space=smem, size = 0x200, scoped, tag = 'input window, operand 2, single buffered']
    #allocation5 [shape = 's32[1]{0}', space=sflag, size = 0x4, scoped, tag = 'scoped memory for conv2d_pallas.1']
    %8 = vsyncpa [#allocation3], 0
    %9 = vsyncpa [#allocation5], 0
    // Predicated region
    $region2: #{conv2d_pallas.1} parent=1 // pred_check
      _
    $region3: #{conv2d_pallas.1} parent=1 // pred_check_branch
      %11 = sbr.rel (0) target = $region5
    $region4: #{conv2d_pallas.1} parent=1 // pred_region
      _
    $region5: #{conv2d_pallas.1} parent=1 // pred_fallthru
      _
    // Predicated region
    $region6: #{conv2d_pallas.1} parent=1 // pred_check
      _
    $region7: #{conv2d_pallas.1} parent=1 // pred_check_branch
      %13 = sbr.rel (0) target = $region9
    $region8: #{conv2d_pallas.1} parent=1 // pred_region
      %15 = vsyncadd [#allocation3], 0
      %s17 = sshll.u32 %s1, 4
      %s18 = int_to_ptr.vmem [resolvable:$true] %s17
      %20 = dma.vmem_to_smem %s18, 32, [#allocation2], [#allocation3]
    $region9: #{conv2d_pallas.1} parent=1 // pred_fallthru
      _
    // Predicated region
    $region10: #{conv2d_pallas.1} parent=1 // pred_check
      _
    $region11: #{conv2d_pallas.1} parent=1 // pred_check_branch
      %22 = sbr.rel (0) target = $region13
    $region12: #{conv2d_pallas.1} parent=1 // pred_region
      %24 = vsyncadd [#allocation5], 0
      %s26 = sshll.u32 %s2, 4
      %s27 = int_to_ptr.vmem [resolvable:$true] %s26
      %29 = dma.vmem_to_smem %s27, 16, [#allocation4], [#allocation5]
    $region13: #{conv2d_pallas.1} parent=1 // pred_fallthru
      _
    // Predicated region
    $region14: #{conv2d_pallas.1} parent=1 // pred_check
      _
    $region15: #{conv2d_pallas.1} parent=1 // pred_check_branch
      %31 = sbr.rel (0) target = $region17
    $region16: #{conv2d_pallas.1} parent=1 // pred_region
      %33 = dma.done [#allocation3], 32
    $region17: #{conv2d_pallas.1} parent=1 // pred_fallthru
      _
    // Predicated region
    $region18: #{conv2d_pallas.1} parent=1 // pred_check
      _
    $region19: #{conv2d_pallas.1} parent=1 // pred_check_branch
      %35 = sbr.rel (0) target = $region21
    $region20: #{conv2d_pallas.1} parent=1 // pred_region
      %37 = dma.done [#allocation5], 16
    $region21: #{conv2d_pallas.1} parent=1 // pred_fallthru
      _
    %38 = sfence
    %v39 = vld [vmem:[%s0] sm:$0x77]
    %v40 = vld [vmem:[%s0 + $0x8] sm:$0x77]
    %43 = vst [vmem:[#allocation1] ss:$2 sm:$0xff] %v39
    %v44 = vld.sshfl [vmem:[#allocation1] sm:$0xff pattern:$0x75316420]
    %v45 = vld.sshfl [vmem:[#allocation1 + $0x8] sm:$0xff pattern:$0x75316420]
    %s46 = scalar_lea.vmem [#allocation1], 16
    %47 = vst [vmem:[%s46] ss:$2 sm:$0xff] %v40
    %v48 = vld.sshfl [vmem:[#allocation1 + $0x10] sm:$0xff pattern:$0x75316420]
    %v49 = vld.sshfl [vmem:[#allocation1 + $0x18] sm:$0xff pattern:$0x75316420]
    %s54 = sld [smem:[#allocation4]]
    %v55 = vstv %s54
    %s56 = sld [smem:[#allocation4 + $0x1]]
    %v57 = vstv %s56
    %s58 = sld [smem:[#allocation4 + $0x2]]
    %v59 = vstv %s58
    %s60 = sld [smem:[#allocation4 + $0x3]]
    %v61 = vstv %s60
    %s62 = sld [smem:[#allocation4 + $0x4]]
    %v63 = vstv %s62
    %s64 = sld [smem:[#allocation4 + $0x5]]
    %v65 = vstv %s64
    %s66 = sld [smem:[#allocation2]]
    %v67 = vstv %s66
    %v68 = vmul.f32 %v67, %v44
    %v69 = vmul.f32 %v67, %v45
    %v70 = vmul.f32 %v67, %v48
    %v71 = vmul.f32 %v67, %v49
    %v72 = vadd.f32 %v55, %v68
    %v73 = vadd.f32 %v55, %v69
    %v74 = vadd.f32 %v55, %v70
    %v75 = vadd.f32 %v55, %v71
    %s76 = sld [smem:[#allocation2 + $0x1b]]
    %v77 = vstv %s76
    %v78 = vmul.f32 %v77, %v44
    %v79 = vmul.f32 %v77, %v45
    %v80 = vmul.f32 %v77, %v48
    %v81 = vmul.f32 %v77, %v49
    %v82 = vadd.f32 %v57, %v78
    %v83 = vadd.f32 %v57, %v79
    %v84 = vadd.f32 %v57, %v80
    %v85 = vadd.f32 %v57, %v81
    %s86 = sld [smem:[#allocation2 + $0x36]]
    %v87 = vstv %s86
    %v88 = vmul.f32 %v87, %v44
    %v89 = vmul.f32 %v87, %v45
    %v90 = vmul.f32 %v87, %v48
    %v91 = vmul.f32 %v87, %v49
    %v92 = vadd.f32 %v59, %v88
    %v93 = vadd.f32 %v59, %v89
    %v94 = vadd.f32 %v59, %v90
    %v95 = vadd.f32 %v59, %v91
    %s96 = sld [smem:[#allocation2 + $0x51]]
    %v97 = vstv %s96
    %v98 = vmul.f32 %v97, %v44
    %v99 = vmul.f32 %v97, %v45
    %v100 = vmul.f32 %v97, %v48
    %v101 = vmul.f32 %v97, %v49
    %v102 = vadd.f32 %v61, %v98
    %v103 = vadd.f32 %v61, %v99
    %v104 = vadd.f32 %v61, %v100
    %v105 = vadd.f32 %v61, %v101
    %s106 = sld [smem:[#allocation2 + $0x6c]]
    %v107 = vstv %s106
    %v108 = vmul.f32 %v107, %v44
    %v109 = vmul.f32 %v107, %v45
    %v110 = vmul.f32 %v107, %v48
    %v111 = vmul.f32 %v107, %v49
    %v112 = vadd.f32 %v63, %v108
    %v113 = vadd.f32 %v63, %v109
    %v114 = vadd.f32 %v63, %v110
    %v115 = vadd.f32 %v63, %v111
    %s116 = sld [smem:[#allocation2 + $0x87]]
    %v117 = vstv %s116
    %v118 = vmul.f32 %v117, %v44
    %v119 = vmul.f32 %v117, %v45
    %v120 = vmul.f32 %v117, %v48
    %v121 = vmul.f32 %v117, %v49
    %v122 = vadd.f32 %v65, %v118
    %v123 = vadd.f32 %v65, %v119
    %v124 = vadd.f32 %v65, %v120
    %v125 = vadd.f32 %v65, %v121
    %s126 = sld [smem:[#allocation2 + $0x1]]
    %v127 = vstv %s126
    %v128 = vmul.f32 %v127, %v44
    %v129 = vmul.f32 %v127, %v45
    %v130 = vmul.f32 %v127, 0.0
    %v131 = vmul.f32 %v127, %v48
    %v132 = vmul.f32 %v127, %v49
    %138 = vrot.lane.b32.xlu0 %v128, 127
    %v139 = vpop.permute.xlu0 %138
    %140 = vrot.lane.b32.xlu0 %v129, 127
    %v141 = vpop.permute.xlu0 %140
    %142 = vrot.lane.b32.xlu0 %v130, 127
    %v143 = vpop.permute.xlu0 %142
    %144 = vrot.lane.b32.xlu0 %v131, 127
    %v145 = vpop.permute.xlu0 %144
    %146 = vrot.lane.b32.xlu0 %v132, 127
    %v147 = vpop.permute.xlu0 %146
    %vm148 = vcmask 1039360
    %v149 = vsel %vm148, %v139, %v141
    %v150 = vsel %vm148, %v141, %v143
    %v151 = vsel %vm148, %v145, %v147
    %v152 = vsel %vm148, %v147, %v143
    %v157 = vadd.f32 %v72, %v149
    %v158 = vadd.f32 %v73, %v150
    %v159 = vadd.f32 %v74, %v151
    %v160 = vadd.f32 %v75, %v152
    %s161 = sld [smem:[#allocation2 + $0x1c]]
    %v162 = vstv %s161
    %v163 = vmul.f32 %v162, %v44
    %v164 = vmul.f32 %v162, %v45
    %v165 = vmul.f32 %v162, 0.0
    %v166 = vmul.f32 %v162, %v48
    %v167 = vmul.f32 %v162, %v49
    %173 = vrot.lane.b32.xlu0 %v163, 127
    %v174 = vpop.permute.xlu0 %173
    %175 = vrot.lane.b32.xlu0 %v164, 127
    %v176 = vpop.permute.xlu0 %175
    %177 = vrot.lane.b32.xlu0 %v165, 127
    %v178 = vpop.permute.xlu0 %177
    %179 = vrot.lane.b32.xlu0 %v166, 127
    %v180 = vpop.permute.xlu0 %179
    %181 = vrot.lane.b32.xlu0 %v167, 127
    %v182 = vpop.permute.xlu0 %181
    %v183 = vsel %vm148, %v174, %v176
    %v184 = vsel %vm148, %v176, %v178
    %v185 = vsel %vm148, %v180, %v182
    %v186 = vsel %vm148, %v182, %v178
    %v191 = vadd.f32 %v82, %v183
    %v192 = vadd.f32 %v83, %v184
    %v193 = vadd.f32 %v84, %v185
    %v194 = vadd.f32 %v85, %v186
    %s195 = sld [smem:[#allocation2 + $0x37]]
    %v196 = vstv %s195
    %v197 = vmul.f32 %v196, %v44
    %v198 = vmul.f32 %v196, %v45
    %v199 = vmul.f32 %v196, 0.0
    %v200 = vmul.f32 %v196, %v48
    %v201 = vmul.f32 %v196, %v49
    %207 = vrot.lane.b32.xlu0 %v197, 127
    %v208 = vpop.permute.xlu0 %207
    %209 = vrot.lane.b32.xlu0 %v198, 127
    %v210 = vpop.permute.xlu0 %209
    %211 = vrot.lane.b32.xlu0 %v199, 127
    %v212 = vpop.permute.xlu0 %211
    %213 = vrot.lane.b32.xlu0 %v200, 127
    %v214 = vpop.permute.xlu0 %213
    %215 = vrot.lane.b32.xlu0 %v201, 127
    %v216 = vpop.permute.xlu0 %215
    %v217 = vsel %vm148, %v208, %v210
    %v218 = vsel %vm148, %v210, %v212
    %v219 = vsel %vm148, %v214, %v216
    %v220 = vsel %vm148, %v216, %v212
    %v225 = vadd.f32 %v92, %v217
    %v226 = vadd.f32 %v93, %v218
    %v227 = vadd.f32 %v94, %v219
    %v228 = vadd.f32 %v95, %v220
    %s229 = sld [smem:[#allocation2 + $0x52]]
    %v230 = vstv %s229
    %v231 = vmul.f32 %v230, %v44
    %v232 = vmul.f32 %v230, %v45
    %v233 = vmul.f32 %v230, 0.0
    %v234 = vmul.f32 %v230, %v48
    %v235 = vmul.f32 %v230, %v49
    %241 = vrot.lane.b32.xlu0 %v231, 127
    %v242 = vpop.permute.xlu0 %241
    %243 = vrot.lane.b32.xlu0 %v232, 127
    %v244 = vpop.permute.xlu0 %243
    %245 = vrot.lane.b32.xlu0 %v233, 127
    %v246 = vpop.permute.xlu0 %245
    %247 = vrot.lane.b32.xlu0 %v234, 127
    %v248 = vpop.permute.xlu0 %247
    %249 = vrot.lane.b32.xlu0 %v235, 127
    %v250 = vpop.permute.xlu0 %249
    %v251 = vsel %vm148, %v242, %v244
    %v252 = vsel %vm148, %v244, %v246
    %v253 = vsel %vm148, %v248, %v250
    %v254 = vsel %vm148, %v250, %v246
    %v259 = vadd.f32 %v102, %v251
    %v260 = vadd.f32 %v103, %v252
    %v261 = vadd.f32 %v104, %v253
    %v262 = vadd.f32 %v105, %v254
    %s263 = sld [smem:[#allocation2 + $0x6d]]
    %v264 = vstv %s263
    %v265 = vmul.f32 %v264, %v44
    %v266 = vmul.f32 %v264, %v45
    %v267 = vmul.f32 %v264, 0.0
    %v268 = vmul.f32 %v264, %v48
    %v269 = vmul.f32 %v264, %v49
    %275 = vrot.lane.b32.xlu0 %v265, 127
    %v276 = vpop.permute.xlu0 %275
    %277 = vrot.lane.b32.xlu0 %v266, 127
    %v278 = vpop.permute.xlu0 %277
    %279 = vrot.lane.b32.xlu0 %v267, 127
    %v280 = vpop.permute.xlu0 %279
    %281 = vrot.lane.b32.xlu0 %v268, 127
    %v282 = vpop.permute.xlu0 %281
    %283 = vrot.lane.b32.xlu0 %v269, 127
    %v284 = vpop.permute.xlu0 %283
    %v285 = vsel %vm148, %v276, %v278
    %v286 = vsel %vm148, %v278, %v280
    %v287 = vsel %vm148, %v282, %v284
    %v288 = vsel %vm148, %v284, %v280
    %v293 = vadd.f32 %v112, %v285
    %v294 = vadd.f32 %v113, %v286
    %v295 = vadd.f32 %v114, %v287
    %v296 = vadd.f32 %v115, %v288
    %s297 = sld [smem:[#allocation2 + $0x88]]
    %v298 = vstv %s297
    %v299 = vmul.f32 %v298, %v44
    %v300 = vmul.f32 %v298, %v45
    %v301 = vmul.f32 %v298, 0.0
    %v302 = vmul.f32 %v298, %v48
    %v303 = vmul.f32 %v298, %v49
    %309 = vrot.lane.b32.xlu0 %v299, 127
    %v310 = vpop.permute.xlu0 %309
    %311 = vrot.lane.b32.xlu0 %v300, 127
    %v312 = vpop.permute.xlu0 %311
    %313 = vrot.lane.b32.xlu0 %v301, 127
    %v314 = vpop.permute.xlu0 %313
    %315 = vrot.lane.b32.xlu0 %v302, 127
    %v316 = vpop.permute.xlu0 %315
    %317 = vrot.lane.b32.xlu0 %v303, 127
    %v318 = vpop.permute.xlu0 %317
    %v319 = vsel %vm148, %v310, %v312
    %v320 = vsel %vm148, %v312, %v314
    %v321 = vsel %vm148, %v316, %v318
    %v322 = vsel %vm148, %v318, %v314
    %v327 = vadd.f32 %v122, %v319
    %v328 = vadd.f32 %v123, %v320
    %v329 = vadd.f32 %v124, %v321
    %v330 = vadd.f32 %v125, %v322
    %s331 = sld [smem:[#allocation2 + $0x2]]
    %v332 = vstv %s331
    %v333 = vmul.f32 %v332, %v44
    %v334 = vmul.f32 %v332, %v45
    %v335 = vmul.f32 %v332, 0.0
    %v336 = vmul.f32 %v332, %v48
    %v337 = vmul.f32 %v332, %v49
    %343 = vrot.lane.b32.xlu0 %v333, 126
    %v344 = vpop.permute.xlu0 %343
    %345 = vrot.lane.b32.xlu0 %v334, 126
    %v346 = vpop.permute.xlu0 %345
    %347 = vrot.lane.b32.xlu0 %v335, 126
    %v348 = vpop.permute.xlu0 %347
    %349 = vrot.lane.b32.xlu0 %v336, 126
    %v350 = vpop.permute.xlu0 %349
    %351 = vrot.lane.b32.xlu0 %v337, 126
    %v352 = vpop.permute.xlu0 %351
    %vm353 = vcmask 1031168
    %v354 = vsel %vm353, %v344, %v346
    %v355 = vsel %vm353, %v346, %v348
    %v356 = vsel %vm353, %v350, %v352
    %v357 = vsel %vm353, %v352, %v348
    %v362 = vadd.f32 %v157, %v354
    %v363 = vadd.f32 %v158, %v355
    %v364 = vadd.f32 %v159, %v356
    %v365 = vadd.f32 %v160, %v357
    %s366 = sld [smem:[#allocation2 + $0x1d]]
    %v367 = vstv %s366
    %v368 = vmul.f32 %v367, %v44
    %v369 = vmul.f32 %v367, %v45
    %v370 = vmul.f32 %v367, 0.0
    %v371 = vmul.f32 %v367, %v48
    %v372 = vmul.f32 %v367, %v49
    %378 = vrot.lane.b32.xlu0 %v368, 126
    %v379 = vpop.permute.xlu0 %378
    %380 = vrot.lane.b32.xlu0 %v369, 126
    %v381 = vpop.permute.xlu0 %380
    %382 = vrot.lane.b32.xlu0 %v370, 126
    %v383 = vpop.permute.xlu0 %382
    %384 = vrot.lane.b32.xlu0 %v371, 126
    %v385 = vpop.permute.xlu0 %384
    %386 = vrot.lane.b32.xlu0 %v372, 126
    %v387 = vpop.permute.xlu0 %386
    %v388 = vsel %vm353, %v379, %v381
    %v389 = vsel %vm353, %v381, %v383
    %v390 = vsel %vm353, %v385, %v387
    %v391 = vsel %vm353, %v387, %v383
    %v396 = vadd.f32 %v191, %v388
    %v397 = vadd.f32 %v192, %v389
    %v398 = vadd.f32 %v193, %v390
    %v399 = vadd.f32 %v194, %v391
    %s400 = sld [smem:[#allocation2 + $0x38]]
    %v401 = vstv %s400
    %v402 = vmul.f32 %v401, %v44
    %v403 = vmul.f32 %v401, %v45
    %v404 = vmul.f32 %v401, 0.0
    %v405 = vmul.f32 %v401, %v48
    %v406 = vmul.f32 %v401, %v49
    %412 = vrot.lane.b32.xlu0 %v402, 126
    %v413 = vpop.permute.xlu0 %412
    %414 = vrot.lane.b32.xlu0 %v403, 126
    %v415 = vpop.permute.xlu0 %414
    %416 = vrot.lane.b32.xlu0 %v404, 126
    %v417 = vpop.permute.xlu0 %416
    %418 = vrot.lane.b32.xlu0 %v405, 126
    %v419 = vpop.permute.xlu0 %418
    %420 = vrot.lane.b32.xlu0 %v406, 126
    %v421 = vpop.permute.xlu0 %420
    %v422 = vsel %vm353, %v413, %v415
    %v423 = vsel %vm353, %v415, %v417
    %v424 = vsel %vm353, %v419, %v421
    %v425 = vsel %vm353, %v421, %v417
    %v430 = vadd.f32 %v225, %v422
    %v431 = vadd.f32 %v226, %v423
    %v432 = vadd.f32 %v227, %v424
    %v433 = vadd.f32 %v228, %v425
    %s434 = sld [smem:[#allocation2 + $0x53]]
    %v435 = vstv %s434
    %v436 = vmul.f32 %v435, %v44
    %v437 = vmul.f32 %v435, %v45
    %v438 = vmul.f32 %v435, 0.0
    %v439 = vmul.f32 %v435, %v48
    %v440 = vmul.f32 %v435, %v49
    %446 = vrot.lane.b32.xlu0 %v436, 126
    %v447 = vpop.permute.xlu0 %446
    %448 = vrot.lane.b32.xlu0 %v437, 126
    %v449 = vpop.permute.xlu0 %448
    %450 = vrot.lane.b32.xlu0 %v438, 126
    %v451 = vpop.permute.xlu0 %450
    %452 = vrot.lane.b32.xlu0 %v439, 126
    %v453 = vpop.permute.xlu0 %452
    %454 = vrot.lane.b32.xlu0 %v440, 126
    %v455 = vpop.permute.xlu0 %454
    %v456 = vsel %vm353, %v447, %v449
    %v457 = vsel %vm353, %v449, %v451
    %v458 = vsel %vm353, %v453, %v455
    %v459 = vsel %vm353, %v455, %v451
    %v464 = vadd.f32 %v259, %v456
    %v465 = vadd.f32 %v260, %v457
    %v466 = vadd.f32 %v261, %v458
    %v467 = vadd.f32 %v262, %v459
    %s468 = sld [smem:[#allocation2 + $0x6e]]
    %v469 = vstv %s468
    %v470 = vmul.f32 %v469, %v44
    %v471 = vmul.f32 %v469, %v45
    %v472 = vmul.f32 %v469, 0.0
    %v473 = vmul.f32 %v469, %v48
    %v474 = vmul.f32 %v469, %v49
    %480 = vrot.lane.b32.xlu0 %v470, 126
    %v481 = vpop.permute.xlu0 %480
    %482 = vrot.lane.b32.xlu0 %v471, 126
    %v483 = vpop.permute.xlu0 %482
    %484 = vrot.lane.b32.xlu0 %v472, 126
    %v485 = vpop.permute.xlu0 %484
    %486 = vrot.lane.b32.xlu0 %v473, 126
    %v487 = vpop.permute.xlu0 %486
    %488 = vrot.lane.b32.xlu0 %v474, 126
    %v489 = vpop.permute.xlu0 %488
    %v490 = vsel %vm353, %v481, %v483
    %v491 = vsel %vm353, %v483, %v485
    %v492 = vsel %vm353, %v487, %v489
    %v493 = vsel %vm353, %v489, %v485
    %v498 = vadd.f32 %v293, %v490
    %v499 = vadd.f32 %v294, %v491
    %v500 = vadd.f32 %v295, %v492
    %v501 = vadd.f32 %v296, %v493
    %s502 = sld [smem:[#allocation2 + $0x89]]
    %v503 = vstv %s502
    %v504 = vmul.f32 %v503, %v44
    %v505 = vmul.f32 %v503, %v45
    %v506 = vmul.f32 %v503, 0.0
    %v507 = vmul.f32 %v503, %v48
    %v508 = vmul.f32 %v503, %v49
    %514 = vrot.lane.b32.xlu0 %v504, 126
    %v515 = vpop.permute.xlu0 %514
    %516 = vrot.lane.b32.xlu0 %v505, 126
    %v517 = vpop.permute.xlu0 %516
    %518 = vrot.lane.b32.xlu0 %v506, 126
    %v519 = vpop.permute.xlu0 %518
    %520 = vrot.lane.b32.xlu0 %v507, 126
    %v521 = vpop.permute.xlu0 %520
    %522 = vrot.lane.b32.xlu0 %v508, 126
    %v523 = vpop.permute.xlu0 %522
    %v524 = vsel %vm353, %v515, %v517
    %v525 = vsel %vm353, %v517, %v519
    %v526 = vsel %vm353, %v521, %v523
    %v527 = vsel %vm353, %v523, %v519
    %v532 = vadd.f32 %v327, %v524
    %v533 = vadd.f32 %v328, %v525
    %v534 = vadd.f32 %v329, %v526
    %v535 = vadd.f32 %v330, %v527
    %s536 = sld [smem:[#allocation2 + $0x3]]
    %v537 = vstv %s536
    %v538 = vmul.f32 %v537, %v44
    %v539 = vmul.f32 %v537, %v45
    %v540 = vmul.f32 %v537, 0.0
    %v541 = vmul.f32 %v537, %v48
    %v542 = vmul.f32 %v537, %v49
    %548 = vrot.lane.b32.xlu0 %v538, 112
    %v549 = vpop.permute.xlu0 %548
    %550 = vrot.lane.b32.xlu0 %v539, 112
    %v551 = vpop.permute.xlu0 %550
    %552 = vrot.lane.b32.xlu0 %v540, 112
    %v553 = vpop.permute.xlu0 %552
    %554 = vrot.lane.b32.xlu0 %v541, 112
    %v555 = vpop.permute.xlu0 %554
    %556 = vrot.lane.b32.xlu0 %v542, 112
    %v557 = vpop.permute.xlu0 %556
    %vm558 = vcmask 916480
    %v559 = vsel %vm558, %v549, %v551
    %v560 = vsel %vm558, %v551, %v553
    %v561 = vsel %vm558, %v555, %v557
    %v562 = vsel %vm558, %v557, %v553
    %v567 = vadd.f32 %v362, %v559
    %v568 = vadd.f32 %v363, %v560
    %v569 = vadd.f32 %v364, %v561
    %v570 = vadd.f32 %v365, %v562
    %s571 = sld [smem:[#allocation2 + $0x1e]]
    %v572 = vstv %s571
    %v573 = vmul.f32 %v572, %v44
    %v574 = vmul.f32 %v572, %v45
    %v575 = vmul.f32 %v572, 0.0
    %v576 = vmul.f32 %v572, %v48
    %v577 = vmul.f32 %v572, %v49
    %583 = vrot.lane.b32.xlu0 %v573, 112
    %v584 = vpop.permute.xlu0 %583
    %585 = vrot.lane.b32.xlu0 %v574, 112
    %v586 = vpop.permute.xlu0 %585
    %587 = vrot.lane.b32.xlu0 %v575, 112
    %v588 = vpop.permute.xlu0 %587
    %589 = vrot.lane.b32.xlu0 %v576, 112
    %v590 = vpop.permute.xlu0 %589
    %591 = vrot.lane.b32.xlu0 %v577, 112
    %v592 = vpop.permute.xlu0 %591
    %v593 = vsel %vm558, %v584, %v586
    %v594 = vsel %vm558, %v586, %v588
    %v595 = vsel %vm558, %v590, %v592
    %v596 = vsel %vm558, %v592, %v588
    %v601 = vadd.f32 %v396, %v593
    %v602 = vadd.f32 %v397, %v594
    %v603 = vadd.f32 %v398, %v595
    %v604 = vadd.f32 %v399, %v596
    %s605 = sld [smem:[#allocation2 + $0x39]]
    %v606 = vstv %s605
    %v607 = vmul.f32 %v606, %v44
    %v608 = vmul.f32 %v606, %v45
    %v609 = vmul.f32 %v606, 0.0
    %v610 = vmul.f32 %v606, %v48
    %v611 = vmul.f32 %v606, %v49
    %617 = vrot.lane.b32.xlu0 %v607, 112
    %v618 = vpop.permute.xlu0 %617
    %619 = vrot.lane.b32.xlu0 %v608, 112
    %v620 = vpop.permute.xlu0 %619
    %621 = vrot.lane.b32.xlu0 %v609, 112
    %v622 = vpop.permute.xlu0 %621
    %623 = vrot.lane.b32.xlu0 %v610, 112
    %v624 = vpop.permute.xlu0 %623
    %625 = vrot.lane.b32.xlu0 %v611, 112
    %v626 = vpop.permute.xlu0 %625
    %v627 = vsel %vm558, %v618, %v620
    %v628 = vsel %vm558, %v620, %v622
    %v629 = vsel %vm558, %v624, %v626
    %v630 = vsel %vm558, %v626, %v622
    %v635 = vadd.f32 %v430, %v627
    %v636 = vadd.f32 %v431, %v628
    %v637 = vadd.f32 %v432, %v629
    %v638 = vadd.f32 %v433, %v630
    %s639 = sld [smem:[#allocation2 + $0x54]]
    %v640 = vstv %s639
    %v641 = vmul.f32 %v640, %v44
    %v642 = vmul.f32 %v640, %v45
    %v643 = vmul.f32 %v640, 0.0
    %v644 = vmul.f32 %v640, %v48
    %v645 = vmul.f32 %v640, %v49
    %651 = vrot.lane.b32.xlu0 %v641, 112
    %v652 = vpop.permute.xlu0 %651
    %653 = vrot.lane.b32.xlu0 %v642, 112
    %v654 = vpop.permute.xlu0 %653
    %655 = vrot.lane.b32.xlu0 %v643, 112
    %v656 = vpop.permute.xlu0 %655
    %657 = vrot.lane.b32.xlu0 %v644, 112
    %v658 = vpop.permute.xlu0 %657
    %659 = vrot.lane.b32.xlu0 %v645, 112
    %v660 = vpop.permute.xlu0 %659
    %v661 = vsel %vm558, %v652, %v654
    %v662 = vsel %vm558, %v654, %v656
    %v663 = vsel %vm558, %v658, %v660
    %v664 = vsel %vm558, %v660, %v656
    %v669 = vadd.f32 %v464, %v661
    %v670 = vadd.f32 %v465, %v662
    %v671 = vadd.f32 %v466, %v663
    %v672 = vadd.f32 %v467, %v664
    %s673 = sld [smem:[#allocation2 + $0x6f]]
    %v674 = vstv %s673
    %v675 = vmul.f32 %v674, %v44
    %v676 = vmul.f32 %v674, %v45
    %v677 = vmul.f32 %v674, 0.0
    %v678 = vmul.f32 %v674, %v48
    %v679 = vmul.f32 %v674, %v49
    %685 = vrot.lane.b32.xlu0 %v675, 112
    %v686 = vpop.permute.xlu0 %685
    %687 = vrot.lane.b32.xlu0 %v676, 112
    %v688 = vpop.permute.xlu0 %687
    %689 = vrot.lane.b32.xlu0 %v677, 112
    %v690 = vpop.permute.xlu0 %689
    %691 = vrot.lane.b32.xlu0 %v678, 112
    %v692 = vpop.permute.xlu0 %691
    %693 = vrot.lane.b32.xlu0 %v679, 112
    %v694 = vpop.permute.xlu0 %693
    %v695 = vsel %vm558, %v686, %v688
    %v696 = vsel %vm558, %v688, %v690
    %v697 = vsel %vm558, %v692, %v694
    %v698 = vsel %vm558, %v694, %v690
    %v703 = vadd.f32 %v498, %v695
    %v704 = vadd.f32 %v499, %v696
    %v705 = vadd.f32 %v500, %v697
    %v706 = vadd.f32 %v501, %v698
    %s707 = sld [smem:[#allocation2 + $0x8a]]
    %v708 = vstv %s707
    %v709 = vmul.f32 %v708, %v44
    %v710 = vmul.f32 %v708, %v45
    %v711 = vmul.f32 %v708, 0.0
    %v712 = vmul.f32 %v708, %v48
    %v713 = vmul.f32 %v708, %v49
    %719 = vrot.lane.b32.xlu0 %v709, 112
    %v720 = vpop.permute.xlu0 %719
    %721 = vrot.lane.b32.xlu0 %v710, 112
    %v722 = vpop.permute.xlu0 %721
    %723 = vrot.lane.b32.xlu0 %v711, 112
    %v724 = vpop.permute.xlu0 %723
    %725 = vrot.lane.b32.xlu0 %v712, 112
    %v726 = vpop.permute.xlu0 %725
    %727 = vrot.lane.b32.xlu0 %v713, 112
    %v728 = vpop.permute.xlu0 %727
    %v729 = vsel %vm558, %v720, %v722
    %v730 = vsel %vm558, %v722, %v724
    %v731 = vsel %vm558, %v726, %v728
    %v732 = vsel %vm558, %v728, %v724
    %v737 = vadd.f32 %v532, %v729
    %v738 = vadd.f32 %v533, %v730
    %v739 = vadd.f32 %v534, %v731
    %v740 = vadd.f32 %v535, %v732
    %s741 = sld [smem:[#allocation2 + $0x4]]
    %v742 = vstv %s741
    %v743 = vmul.f32 %v742, %v44
    %v744 = vmul.f32 %v742, %v45
    %v745 = vmul.f32 %v742, 0.0
    %v746 = vmul.f32 %v742, %v48
    %v747 = vmul.f32 %v742, %v49
    %753 = vrot.lane.b32.xlu0 %v743, 111
    %v754 = vpop.permute.xlu0 %753
    %755 = vrot.lane.b32.xlu0 %v744, 111
    %v756 = vpop.permute.xlu0 %755
    %757 = vrot.lane.b32.xlu0 %v745, 111
    %v758 = vpop.permute.xlu0 %757
    %759 = vrot.lane.b32.xlu0 %v746, 111
    %v760 = vpop.permute.xlu0 %759
    %761 = vrot.lane.b32.xlu0 %v747, 111
    %v762 = vpop.permute.xlu0 %761
    %vm763 = vcmask 908288
    %v764 = vsel %vm763, %v754, %v756
    %v765 = vsel %vm763, %v756, %v758
    %v766 = vsel %vm763, %v760, %v762
    %v767 = vsel %vm763, %v762, %v758
    %v772 = vadd.f32 %v567, %v764
    %v773 = vadd.f32 %v568, %v765
    %v774 = vadd.f32 %v569, %v766
    %v775 = vadd.f32 %v570, %v767
    %s776 = sld [smem:[#allocation2 + $0x1f]]
    %v777 = vstv %s776
    %v778 = vmul.f32 %v777, %v44
    %v779 = vmul.f32 %v777, %v45
    %v780 = vmul.f32 %v777, 0.0
    %v781 = vmul.f32 %v777, %v48
    %v782 = vmul.f32 %v777, %v49
    %788 = vrot.lane.b32.xlu0 %v778, 111
    %v789 = vpop.permute.xlu0 %788
    %790 = vrot.lane.b32.xlu0 %v779, 111
    %v791 = vpop.permute.xlu0 %790
    %792 = vrot.lane.b32.xlu0 %v780, 111
    %v793 = vpop.permute.xlu0 %792
    %794 = vrot.lane.b32.xlu0 %v781, 111
    %v795 = vpop.permute.xlu0 %794
    %796 = vrot.lane.b32.xlu0 %v782, 111
    %v797 = vpop.permute.xlu0 %796
    %v798 = vsel %vm763, %v789, %v791
    %v799 = vsel %vm763, %v791, %v793
    %v800 = vsel %vm763, %v795, %v797
    %v801 = vsel %vm763, %v797, %v793
    %v806 = vadd.f32 %v601, %v798
    %v807 = vadd.f32 %v602, %v799
    %v808 = vadd.f32 %v603, %v800
    %v809 = vadd.f32 %v604, %v801
    %s810 = sld [smem:[#allocation2 + $0x3a]]
    %v811 = vstv %s810
    %v812 = vmul.f32 %v811, %v44
    %v813 = vmul.f32 %v811, %v45
    %v814 = vmul.f32 %v811, 0.0
    %v815 = vmul.f32 %v811, %v48
    %v816 = vmul.f32 %v811, %v49
    %822 = vrot.lane.b32.xlu0 %v812, 111
    %v823 = vpop.permute.xlu0 %822
    %824 = vrot.lane.b32.xlu0 %v813, 111
    %v825 = vpop.permute.xlu0 %824
    %826 = vrot.lane.b32.xlu0 %v814, 111
    %v827 = vpop.permute.xlu0 %826
    %828 = vrot.lane.b32.xlu0 %v815, 111
    %v829 = vpop.permute.xlu0 %828
    %830 = vrot.lane.b32.xlu0 %v816, 111
    %v831 = vpop.permute.xlu0 %830
    %v832 = vsel %vm763, %v823, %v825
    %v833 = vsel %vm763, %v825, %v827
    %v834 = vsel %vm763, %v829, %v831
    %v835 = vsel %vm763, %v831, %v827
    %v840 = vadd.f32 %v635, %v832
    %v841 = vadd.f32 %v636, %v833
    %v842 = vadd.f32 %v637, %v834
    %v843 = vadd.f32 %v638, %v835
    %s844 = sld [smem:[#allocation2 + $0x55]]
    %v845 = vstv %s844
    %v846 = vmul.f32 %v845, %v44
    %v847 = vmul.f32 %v845, %v45
    %v848 = vmul.f32 %v845, 0.0
    %v849 = vmul.f32 %v845, %v48
    %v850 = vmul.f32 %v845, %v49
    %856 = vrot.lane.b32.xlu0 %v846, 111
    %v857 = vpop.permute.xlu0 %856
    %858 = vrot.lane.b32.xlu0 %v847, 111
    %v859 = vpop.permute.xlu0 %858
    %860 = vrot.lane.b32.xlu0 %v848, 111
    %v861 = vpop.permute.xlu0 %860
    %862 = vrot.lane.b32.xlu0 %v849, 111
    %v863 = vpop.permute.xlu0 %862
    %864 = vrot.lane.b32.xlu0 %v850, 111
    %v865 = vpop.permute.xlu0 %864
    %v866 = vsel %vm763, %v857, %v859
    %v867 = vsel %vm763, %v859, %v861
    %v868 = vsel %vm763, %v863, %v865
    %v869 = vsel %vm763, %v865, %v861
    %v874 = vadd.f32 %v669, %v866
    %v875 = vadd.f32 %v670, %v867
    %v876 = vadd.f32 %v671, %v868
    %v877 = vadd.f32 %v672, %v869
    %s878 = sld [smem:[#allocation2 + $0x70]]
    %v879 = vstv %s878
    %v880 = vmul.f32 %v879, %v44
    %v881 = vmul.f32 %v879, %v45
    %v882 = vmul.f32 %v879, 0.0
    %v883 = vmul.f32 %v879, %v48
    %v884 = vmul.f32 %v879, %v49
    %890 = vrot.lane.b32.xlu0 %v880, 111
    %v891 = vpop.permute.xlu0 %890
    %892 = vrot.lane.b32.xlu0 %v881, 111
    %v893 = vpop.permute.xlu0 %892
    %894 = vrot.lane.b32.xlu0 %v882, 111
    %v895 = vpop.permute.xlu0 %894
    %896 = vrot.lane.b32.xlu0 %v883, 111
    %v897 = vpop.permute.xlu0 %896
    %898 = vrot.lane.b32.xlu0 %v884, 111
    %v899 = vpop.permute.xlu0 %898
    %v900 = vsel %vm763, %v891, %v893
    %v901 = vsel %vm763, %v893, %v895
    %v902 = vsel %vm763, %v897, %v899
    %v903 = vsel %vm763, %v899, %v895
    %v908 = vadd.f32 %v703, %v900
    %v909 = vadd.f32 %v704, %v901
    %v910 = vadd.f32 %v705, %v902
    %v911 = vadd.f32 %v706, %v903
    %s912 = sld [smem:[#allocation2 + $0x8b]]
    %v913 = vstv %s912
    %v914 = vmul.f32 %v913, %v44
    %v915 = vmul.f32 %v913, %v45
    %v916 = vmul.f32 %v913, 0.0
    %v917 = vmul.f32 %v913, %v48
    %v918 = vmul.f32 %v913, %v49
    %924 = vrot.lane.b32.xlu0 %v914, 111
    %v925 = vpop.permute.xlu0 %924
    %926 = vrot.lane.b32.xlu0 %v915, 111
    %v927 = vpop.permute.xlu0 %926
    %928 = vrot.lane.b32.xlu0 %v916, 111
    %v929 = vpop.permute.xlu0 %928
    %930 = vrot.lane.b32.xlu0 %v917, 111
    %v931 = vpop.permute.xlu0 %930
    %932 = vrot.lane.b32.xlu0 %v918, 111
    %v933 = vpop.permute.xlu0 %932
    %v934 = vsel %vm763, %v925, %v927
    %v935 = vsel %vm763, %v927, %v929
    %v936 = vsel %vm763, %v931, %v933
    %v937 = vsel %vm763, %v933, %v929
    %v942 = vadd.f32 %v737, %v934
    %v943 = vadd.f32 %v738, %v935
    %v944 = vadd.f32 %v739, %v936
    %v945 = vadd.f32 %v740, %v937
    %s946 = sld [smem:[#allocation2 + $0x5]]
    %v947 = vstv %s946
    %v948 = vmul.f32 %v947, %v44
    %v949 = vmul.f32 %v947, %v45
    %v950 = vmul.f32 %v947, 0.0
    %v951 = vmul.f32 %v947, %v48
    %v952 = vmul.f32 %v947, %v49
    %958 = vrot.lane.b32.xlu0 %v948, 110
    %v959 = vpop.permute.xlu0 %958
    %960 = vrot.lane.b32.xlu0 %v949, 110
    %v961 = vpop.permute.xlu0 %960
    %962 = vrot.lane.b32.xlu0 %v950, 110
    %v963 = vpop.permute.xlu0 %962
    %964 = vrot.lane.b32.xlu0 %v951, 110
    %v965 = vpop.permute.xlu0 %964
    %966 = vrot.lane.b32.xlu0 %v952, 110
    %v967 = vpop.permute.xlu0 %966
    %vm968 = vcmask 900096
    %v969 = vsel %vm968, %v959, %v961
    %v970 = vsel %vm968, %v961, %v963
    %v971 = vsel %vm968, %v965, %v967
    %v972 = vsel %vm968, %v967, %v963
    %v977 = vadd.f32 %v772, %v969
    %v978 = vadd.f32 %v773, %v970
    %v979 = vadd.f32 %v774, %v971
    %v980 = vadd.f32 %v775, %v972
    %s981 = sld [smem:[#allocation2 + $0x20]]
    %v982 = vstv %s981
    %v983 = vmul.f32 %v982, %v44
    %v984 = vmul.f32 %v982, %v45
    %v985 = vmul.f32 %v982, 0.0
    %v986 = vmul.f32 %v982, %v48
    %v987 = vmul.f32 %v982, %v49
    %993 = vrot.lane.b32.xlu0 %v983, 110
    %v994 = vpop.permute.xlu0 %993
    %995 = vrot.lane.b32.xlu0 %v984, 110
    %v996 = vpop.permute.xlu0 %995
    %997 = vrot.lane.b32.xlu0 %v985, 110
    %v998 = vpop.permute.xlu0 %997
    %999 = vrot.lane.b32.xlu0 %v986, 110
    %v1000 = vpop.permute.xlu0 %999
    %1001 = vrot.lane.b32.xlu0 %v987, 110
    %v1002 = vpop.permute.xlu0 %1001
    %v1003 = vsel %vm968, %v994, %v996
    %v1004 = vsel %vm968, %v996, %v998
    %v1005 = vsel %vm968, %v1000, %v1002
    %v1006 = vsel %vm968, %v1002, %v998
    %v1011 = vadd.f32 %v806, %v1003
    %v1012 = vadd.f32 %v807, %v1004
    %v1013 = vadd.f32 %v808, %v1005
    %v1014 = vadd.f32 %v809, %v1006
    %s1015 = sld [smem:[#allocation2 + $0x3b]]
    %v1016 = vstv %s1015
    %v1017 = vmul.f32 %v1016, %v44
    %v1018 = vmul.f32 %v1016, %v45
    %v1019 = vmul.f32 %v1016, 0.0
    %v1020 = vmul.f32 %v1016, %v48
    %v1021 = vmul.f32 %v1016, %v49
    %1027 = vrot.lane.b32.xlu0 %v1017, 110
    %v1028 = vpop.permute.xlu0 %1027
    %1029 = vrot.lane.b32.xlu0 %v1018, 110
    %v1030 = vpop.permute.xlu0 %1029
    %1031 = vrot.lane.b32.xlu0 %v1019, 110
    %v1032 = vpop.permute.xlu0 %1031
    %1033 = vrot.lane.b32.xlu0 %v1020, 110
    %v1034 = vpop.permute.xlu0 %1033
    %1035 = vrot.lane.b32.xlu0 %v1021, 110
    %v1036 = vpop.permute.xlu0 %1035
    %v1037 = vsel %vm968, %v1028, %v1030
    %v1038 = vsel %vm968, %v1030, %v1032
    %v1039 = vsel %vm968, %v1034, %v1036
    %v1040 = vsel %vm968, %v1036, %v1032
    %v1045 = vadd.f32 %v840, %v1037
    %v1046 = vadd.f32 %v841, %v1038
    %v1047 = vadd.f32 %v842, %v1039
    %v1048 = vadd.f32 %v843, %v1040
    %s1049 = sld [smem:[#allocation2 + $0x56]]
    %v1050 = vstv %s1049
    %v1051 = vmul.f32 %v1050, %v44
    %v1052 = vmul.f32 %v1050, %v45
    %v1053 = vmul.f32 %v1050, 0.0
    %v1054 = vmul.f32 %v1050, %v48
    %v1055 = vmul.f32 %v1050, %v49
    %1061 = vrot.lane.b32.xlu0 %v1051, 110
    %v1062 = vpop.permute.xlu0 %1061
    %1063 = vrot.lane.b32.xlu0 %v1052, 110
    %v1064 = vpop.permute.xlu0 %1063
    %1065 = vrot.lane.b32.xlu0 %v1053, 110
    %v1066 = vpop.permute.xlu0 %1065
    %1067 = vrot.lane.b32.xlu0 %v1054, 110
    %v1068 = vpop.permute.xlu0 %1067
    %1069 = vrot.lane.b32.xlu0 %v1055, 110
    %v1070 = vpop.permute.xlu0 %1069
    %v1071 = vsel %vm968, %v1062, %v1064
    %v1072 = vsel %vm968, %v1064, %v1066
    %v1073 = vsel %vm968, %v1068, %v1070
    %v1074 = vsel %vm968, %v1070, %v1066
    %v1079 = vadd.f32 %v874, %v1071
    %v1080 = vadd.f32 %v875, %v1072
    %v1081 = vadd.f32 %v876, %v1073
    %v1082 = vadd.f32 %v877, %v1074
    %s1083 = sld [smem:[#allocation2 + $0x71]]
    %v1084 = vstv %s1083
    %v1085 = vmul.f32 %v1084, %v44
    %v1086 = vmul.f32 %v1084, %v45
    %v1087 = vmul.f32 %v1084, 0.0
    %v1088 = vmul.f32 %v1084, %v48
    %v1089 = vmul.f32 %v1084, %v49
    %1095 = vrot.lane.b32.xlu0 %v1085, 110
    %v1096 = vpop.permute.xlu0 %1095
    %1097 = vrot.lane.b32.xlu0 %v1086, 110
    %v1098 = vpop.permute.xlu0 %1097
    %1099 = vrot.lane.b32.xlu0 %v1087, 110
    %v1100 = vpop.permute.xlu0 %1099
    %1101 = vrot.lane.b32.xlu0 %v1088, 110
    %v1102 = vpop.permute.xlu0 %1101
    %1103 = vrot.lane.b32.xlu0 %v1089, 110
    %v1104 = vpop.permute.xlu0 %1103
    %v1105 = vsel %vm968, %v1096, %v1098
    %v1106 = vsel %vm968, %v1098, %v1100
    %v1107 = vsel %vm968, %v1102, %v1104
    %v1108 = vsel %vm968, %v1104, %v1100
    %v1113 = vadd.f32 %v908, %v1105
    %v1114 = vadd.f32 %v909, %v1106
    %v1115 = vadd.f32 %v910, %v1107
    %v1116 = vadd.f32 %v911, %v1108
    %s1117 = sld [smem:[#allocation2 + $0x8c]]
    %v1118 = vstv %s1117
    %v1119 = vmul.f32 %v1118, %v44
    %v1120 = vmul.f32 %v1118, %v45
    %v1121 = vmul.f32 %v1118, 0.0
    %v1122 = vmul.f32 %v1118, %v48
    %v1123 = vmul.f32 %v1118, %v49
    %1129 = vrot.lane.b32.xlu0 %v1119, 110
    %v1130 = vpop.permute.xlu0 %1129
    %1131 = vrot.lane.b32.xlu0 %v1120, 110
    %v1132 = vpop.permute.xlu0 %1131
    %1133 = vrot.lane.b32.xlu0 %v1121, 110
    %v1134 = vpop.permute.xlu0 %1133
    %1135 = vrot.lane.b32.xlu0 %v1122, 110
    %v1136 = vpop.permute.xlu0 %1135
    %1137 = vrot.lane.b32.xlu0 %v1123, 110
    %v1138 = vpop.permute.xlu0 %1137
    %v1139 = vsel %vm968, %v1130, %v1132
    %v1140 = vsel %vm968, %v1132, %v1134
    %v1141 = vsel %vm968, %v1136, %v1138
    %v1142 = vsel %vm968, %v1138, %v1134
    %v1147 = vadd.f32 %v942, %v1139
    %v1148 = vadd.f32 %v943, %v1140
    %v1149 = vadd.f32 %v944, %v1141
    %v1150 = vadd.f32 %v945, %v1142
    %s1151 = sld [smem:[#allocation2 + $0x6]]
    %v1152 = vstv %s1151
    %v1153 = vmul.f32 %v1152, %v44
    %v1154 = vmul.f32 %v1152, %v45
    %v1155 = vmul.f32 %v1152, 0.0
    %v1156 = vmul.f32 %v1152, %v48
    %v1157 = vmul.f32 %v1152, %v49
    %1163 = vrot.lane.b32.xlu0 %v1153, 96
    %v1164 = vpop.permute.xlu0 %1163
    %1165 = vrot.lane.b32.xlu0 %v1154, 96
    %v1166 = vpop.permute.xlu0 %1165
    %1167 = vrot.lane.b32.xlu0 %v1155, 96
    %v1168 = vpop.permute.xlu0 %1167
    %1169 = vrot.lane.b32.xlu0 %v1156, 96
    %v1170 = vpop.permute.xlu0 %1169
    %1171 = vrot.lane.b32.xlu0 %v1157, 96
    %v1172 = vpop.permute.xlu0 %1171
    %vm1173 = vcmask 785408
    %v1174 = vsel %vm1173, %v1164, %v1166
    %v1175 = vsel %vm1173, %v1166, %v1168
    %v1176 = vsel %vm1173, %v1170, %v1172
    %v1177 = vsel %vm1173, %v1172, %v1168
    %v1182 = vadd.f32 %v977, %v1174
    %v1183 = vadd.f32 %v978, %v1175
    %v1184 = vadd.f32 %v979, %v1176
    %v1185 = vadd.f32 %v980, %v1177
    %s1186 = sld [smem:[#allocation2 + $0x21]]
    %v1187 = vstv %s1186
    %v1188 = vmul.f32 %v1187, %v44
    %v1189 = vmul.f32 %v1187, %v45
    %v1190 = vmul.f32 %v1187, 0.0
    %v1191 = vmul.f32 %v1187, %v48
    %v1192 = vmul.f32 %v1187, %v49
    %1198 = vrot.lane.b32.xlu0 %v1188, 96
    %v1199 = vpop.permute.xlu0 %1198
    %1200 = vrot.lane.b32.xlu0 %v1189, 96
    %v1201 = vpop.permute.xlu0 %1200
    %1202 = vrot.lane.b32.xlu0 %v1190, 96
    %v1203 = vpop.permute.xlu0 %1202
    %1204 = vrot.lane.b32.xlu0 %v1191, 96
    %v1205 = vpop.permute.xlu0 %1204
    %1206 = vrot.lane.b32.xlu0 %v1192, 96
    %v1207 = vpop.permute.xlu0 %1206
    %v1208 = vsel %vm1173, %v1199, %v1201
    %v1209 = vsel %vm1173, %v1201, %v1203
    %v1210 = vsel %vm1173, %v1205, %v1207
    %v1211 = vsel %vm1173, %v1207, %v1203
    %v1216 = vadd.f32 %v1011, %v1208
    %v1217 = vadd.f32 %v1012, %v1209
    %v1218 = vadd.f32 %v1013, %v1210
    %v1219 = vadd.f32 %v1014, %v1211
    %s1220 = sld [smem:[#allocation2 + $0x3c]]
    %v1221 = vstv %s1220
    %v1222 = vmul.f32 %v1221, %v44
    %v1223 = vmul.f32 %v1221, %v45
    %v1224 = vmul.f32 %v1221, 0.0
    %v1225 = vmul.f32 %v1221, %v48
    %v1226 = vmul.f32 %v1221, %v49
    %1232 = vrot.lane.b32.xlu0 %v1222, 96
    %v1233 = vpop.permute.xlu0 %1232
    %1234 = vrot.lane.b32.xlu0 %v1223, 96
    %v1235 = vpop.permute.xlu0 %1234
    %1236 = vrot.lane.b32.xlu0 %v1224, 96
    %v1237 = vpop.permute.xlu0 %1236
    %1238 = vrot.lane.b32.xlu0 %v1225, 96
    %v1239 = vpop.permute.xlu0 %1238
    %1240 = vrot.lane.b32.xlu0 %v1226, 96
    %v1241 = vpop.permute.xlu0 %1240
    %v1242 = vsel %vm1173, %v1233, %v1235
    %v1243 = vsel %vm1173, %v1235, %v1237
    %v1244 = vsel %vm1173, %v1239, %v1241
    %v1245 = vsel %vm1173, %v1241, %v1237
    %v1250 = vadd.f32 %v1045, %v1242
    %v1251 = vadd.f32 %v1046, %v1243
    %v1252 = vadd.f32 %v1047, %v1244
    %v1253 = vadd.f32 %v1048, %v1245
    %s1254 = sld [smem:[#allocation2 + $0x57]]
    %v1255 = vstv %s1254
    %v1256 = vmul.f32 %v1255, %v44
    %v1257 = vmul.f32 %v1255, %v45
    %v1258 = vmul.f32 %v1255, 0.0
    %v1259 = vmul.f32 %v1255, %v48
    %v1260 = vmul.f32 %v1255, %v49
    %1266 = vrot.lane.b32.xlu0 %v1256, 96
    %v1267 = vpop.permute.xlu0 %1266
    %1268 = vrot.lane.b32.xlu0 %v1257, 96
    %v1269 = vpop.permute.xlu0 %1268
    %1270 = vrot.lane.b32.xlu0 %v1258, 96
    %v1271 = vpop.permute.xlu0 %1270
    %1272 = vrot.lane.b32.xlu0 %v1259, 96
    %v1273 = vpop.permute.xlu0 %1272
    %1274 = vrot.lane.b32.xlu0 %v1260, 96
    %v1275 = vpop.permute.xlu0 %1274
    %v1276 = vsel %vm1173, %v1267, %v1269
    %v1277 = vsel %vm1173, %v1269, %v1271
    %v1278 = vsel %vm1173, %v1273, %v1275
    %v1279 = vsel %vm1173, %v1275, %v1271
    %v1284 = vadd.f32 %v1079, %v1276
    %v1285 = vadd.f32 %v1080, %v1277
    %v1286 = vadd.f32 %v1081, %v1278
    %v1287 = vadd.f32 %v1082, %v1279
    %s1288 = sld [smem:[#allocation2 + $0x72]]
    %v1289 = vstv %s1288
    %v1290 = vmul.f32 %v1289, %v44
    %v1291 = vmul.f32 %v1289, %v45
    %v1292 = vmul.f32 %v1289, 0.0
    %v1293 = vmul.f32 %v1289, %v48
    %v1294 = vmul.f32 %v1289, %v49
    %1300 = vrot.lane.b32.xlu0 %v1290, 96
    %v1301 = vpop.permute.xlu0 %1300
    %1302 = vrot.lane.b32.xlu0 %v1291, 96
    %v1303 = vpop.permute.xlu0 %1302
    %1304 = vrot.lane.b32.xlu0 %v1292, 96
    %v1305 = vpop.permute.xlu0 %1304
    %1306 = vrot.lane.b32.xlu0 %v1293, 96
    %v1307 = vpop.permute.xlu0 %1306
    %1308 = vrot.lane.b32.xlu0 %v1294, 96
    %v1309 = vpop.permute.xlu0 %1308
    %v1310 = vsel %vm1173, %v1301, %v1303
    %v1311 = vsel %vm1173, %v1303, %v1305
    %v1312 = vsel %vm1173, %v1307, %v1309
    %v1313 = vsel %vm1173, %v1309, %v1305
    %v1318 = vadd.f32 %v1113, %v1310
    %v1319 = vadd.f32 %v1114, %v1311
    %v1320 = vadd.f32 %v1115, %v1312
    %v1321 = vadd.f32 %v1116, %v1313
    %s1322 = sld [smem:[#allocation2 + $0x8d]]
    %v1323 = vstv %s1322
    %v1324 = vmul.f32 %v1323, %v44
    %v1325 = vmul.f32 %v1323, %v45
    %v1326 = vmul.f32 %v1323, 0.0
    %v1327 = vmul.f32 %v1323, %v48
    %v1328 = vmul.f32 %v1323, %v49
    %1334 = vrot.lane.b32.xlu0 %v1324, 96
    %v1335 = vpop.permute.xlu0 %1334
    %1336 = vrot.lane.b32.xlu0 %v1325, 96
    %v1337 = vpop.permute.xlu0 %1336
    %1338 = vrot.lane.b32.xlu0 %v1326, 96
    %v1339 = vpop.permute.xlu0 %1338
    %1340 = vrot.lane.b32.xlu0 %v1327, 96
    %v1341 = vpop.permute.xlu0 %1340
    %1342 = vrot.lane.b32.xlu0 %v1328, 96
    %v1343 = vpop.permute.xlu0 %1342
    %v1344 = vsel %vm1173, %v1335, %v1337
    %v1345 = vsel %vm1173, %v1337, %v1339
    %v1346 = vsel %vm1173, %v1341, %v1343
    %v1347 = vsel %vm1173, %v1343, %v1339
    %v1352 = vadd.f32 %v1147, %v1344
    %v1353 = vadd.f32 %v1148, %v1345
    %v1354 = vadd.f32 %v1149, %v1346
    %v1355 = vadd.f32 %v1150, %v1347
    %s1356 = sld [smem:[#allocation2 + $0x7]]
    %v1357 = vstv %s1356
    %v1358 = vmul.f32 %v1357, %v44
    %v1359 = vmul.f32 %v1357, %v45
    %v1360 = vmul.f32 %v1357, 0.0
    %v1361 = vmul.f32 %v1357, %v48
    %v1362 = vmul.f32 %v1357, %v49
    %1368 = vrot.lane.b32.xlu0 %v1358, 95
    %v1369 = vpop.permute.xlu0 %1368
    %1370 = vrot.lane.b32.xlu0 %v1359, 95
    %v1371 = vpop.permute.xlu0 %1370
    %1372 = vrot.lane.b32.xlu0 %v1360, 95
    %v1373 = vpop.permute.xlu0 %1372
    %1374 = vrot.lane.b32.xlu0 %v1361, 95
    %v1375 = vpop.permute.xlu0 %1374
    %1376 = vrot.lane.b32.xlu0 %v1362, 95
    %v1377 = vpop.permute.xlu0 %1376
    %vm1378 = vcmask 777216
    %v1379 = vsel %vm1378, %v1369, %v1371
    %v1380 = vsel %vm1378, %v1371, %v1373
    %v1381 = vsel %vm1378, %v1375, %v1377
    %v1382 = vsel %vm1378, %v1377, %v1373
    %v1387 = vadd.f32 %v1182, %v1379
    %v1388 = vadd.f32 %v1183, %v1380
    %v1389 = vadd.f32 %v1184, %v1381
    %v1390 = vadd.f32 %v1185, %v1382
    %s1391 = sld [smem:[#allocation2 + $0x22]]
    %v1392 = vstv %s1391
    %v1393 = vmul.f32 %v1392, %v44
    %v1394 = vmul.f32 %v1392, %v45
    %v1395 = vmul.f32 %v1392, 0.0
    %v1396 = vmul.f32 %v1392, %v48
    %v1397 = vmul.f32 %v1392, %v49
    %1403 = vrot.lane.b32.xlu0 %v1393, 95
    %v1404 = vpop.permute.xlu0 %1403
    %1405 = vrot.lane.b32.xlu0 %v1394, 95
    %v1406 = vpop.permute.xlu0 %1405
    %1407 = vrot.lane.b32.xlu0 %v1395, 95
    %v1408 = vpop.permute.xlu0 %1407
    %1409 = vrot.lane.b32.xlu0 %v1396, 95
    %v1410 = vpop.permute.xlu0 %1409
    %1411 = vrot.lane.b32.xlu0 %v1397, 95
    %v1412 = vpop.permute.xlu0 %1411
    %v1413 = vsel %vm1378, %v1404, %v1406
    %v1414 = vsel %vm1378, %v1406, %v1408
    %v1415 = vsel %vm1378, %v1410, %v1412
    %v1416 = vsel %vm1378, %v1412, %v1408
    %v1421 = vadd.f32 %v1216, %v1413
    %v1422 = vadd.f32 %v1217, %v1414
    %v1423 = vadd.f32 %v1218, %v1415
    %v1424 = vadd.f32 %v1219, %v1416
    %s1425 = sld [smem:[#allocation2 + $0x3d]]
    %v1426 = vstv %s1425
    %v1427 = vmul.f32 %v1426, %v44
    %v1428 = vmul.f32 %v1426, %v45
    %v1429 = vmul.f32 %v1426, 0.0
    %v1430 = vmul.f32 %v1426, %v48
    %v1431 = vmul.f32 %v1426, %v49
    %1437 = vrot.lane.b32.xlu0 %v1427, 95
    %v1438 = vpop.permute.xlu0 %1437
    %1439 = vrot.lane.b32.xlu0 %v1428, 95
    %v1440 = vpop.permute.xlu0 %1439
    %1441 = vrot.lane.b32.xlu0 %v1429, 95
    %v1442 = vpop.permute.xlu0 %1441
    %1443 = vrot.lane.b32.xlu0 %v1430, 95
    %v1444 = vpop.permute.xlu0 %1443
    %1445 = vrot.lane.b32.xlu0 %v1431, 95
    %v1446 = vpop.permute.xlu0 %1445
    %v1447 = vsel %vm1378, %v1438, %v1440
    %v1448 = vsel %vm1378, %v1440, %v1442
    %v1449 = vsel %vm1378, %v1444, %v1446
    %v1450 = vsel %vm1378, %v1446, %v1442
    %v1455 = vadd.f32 %v1250, %v1447
    %v1456 = vadd.f32 %v1251, %v1448
    %v1457 = vadd.f32 %v1252, %v1449
    %v1458 = vadd.f32 %v1253, %v1450
    %s1459 = sld [smem:[#allocation2 + $0x58]]
    %v1460 = vstv %s1459
    %v1461 = vmul.f32 %v1460, %v44
    %v1462 = vmul.f32 %v1460, %v45
    %v1463 = vmul.f32 %v1460, 0.0
    %v1464 = vmul.f32 %v1460, %v48
    %v1465 = vmul.f32 %v1460, %v49
    %1471 = vrot.lane.b32.xlu0 %v1461, 95
    %v1472 = vpop.permute.xlu0 %1471
    %1473 = vrot.lane.b32.xlu0 %v1462, 95
    %v1474 = vpop.permute.xlu0 %1473
    %1475 = vrot.lane.b32.xlu0 %v1463, 95
    %v1476 = vpop.permute.xlu0 %1475
    %1477 = vrot.lane.b32.xlu0 %v1464, 95
    %v1478 = vpop.permute.xlu0 %1477
    %1479 = vrot.lane.b32.xlu0 %v1465, 95
    %v1480 = vpop.permute.xlu0 %1479
    %v1481 = vsel %vm1378, %v1472, %v1474
    %v1482 = vsel %vm1378, %v1474, %v1476
    %v1483 = vsel %vm1378, %v1478, %v1480
    %v1484 = vsel %vm1378, %v1480, %v1476
    %v1489 = vadd.f32 %v1284, %v1481
    %v1490 = vadd.f32 %v1285, %v1482
    %v1491 = vadd.f32 %v1286, %v1483
    %v1492 = vadd.f32 %v1287, %v1484
    %s1493 = sld [smem:[#allocation2 + $0x73]]
    %v1494 = vstv %s1493
    %v1495 = vmul.f32 %v1494, %v44
    %v1496 = vmul.f32 %v1494, %v45
    %v1497 = vmul.f32 %v1494, 0.0
    %v1498 = vmul.f32 %v1494, %v48
    %v1499 = vmul.f32 %v1494, %v49
    %1505 = vrot.lane.b32.xlu0 %v1495, 95
    %v1506 = vpop.permute.xlu0 %1505
    %1507 = vrot.lane.b32.xlu0 %v1496, 95
    %v1508 = vpop.permute.xlu0 %1507
    %1509 = vrot.lane.b32.xlu0 %v1497, 95
    %v1510 = vpop.permute.xlu0 %1509
    %1511 = vrot.lane.b32.xlu0 %v1498, 95
    %v1512 = vpop.permute.xlu0 %1511
    %1513 = vrot.lane.b32.xlu0 %v1499, 95
    %v1514 = vpop.permute.xlu0 %1513
    %v1515 = vsel %vm1378, %v1506, %v1508
    %v1516 = vsel %vm1378, %v1508, %v1510
    %v1517 = vsel %vm1378, %v1512, %v1514
    %v1518 = vsel %vm1378, %v1514, %v1510
    %v1523 = vadd.f32 %v1318, %v1515
    %v1524 = vadd.f32 %v1319, %v1516
    %v1525 = vadd.f32 %v1320, %v1517
    %v1526 = vadd.f32 %v1321, %v1518
    %s1527 = sld [smem:[#allocation2 + $0x8e]]
    %v1528 = vstv %s1527
    %v1529 = vmul.f32 %v1528, %v44
    %v1530 = vmul.f32 %v1528, %v45
    %v1531 = vmul.f32 %v1528, 0.0
    %v1532 = vmul.f32 %v1528, %v48
    %v1533 = vmul.f32 %v1528, %v49
    %1539 = vrot.lane.b32.xlu0 %v1529, 95
    %v1540 = vpop.permute.xlu0 %1539
    %1541 = vrot.lane.b32.xlu0 %v1530, 95
    %v1542 = vpop.permute.xlu0 %1541
    %1543 = vrot.lane.b32.xlu0 %v1531, 95
    %v1544 = vpop.permute.xlu0 %1543
    %1545 = vrot.lane.b32.xlu0 %v1532, 95
    %v1546 = vpop.permute.xlu0 %1545
    %1547 = vrot.lane.b32.xlu0 %v1533, 95
    %v1548 = vpop.permute.xlu0 %1547
    %v1549 = vsel %vm1378, %v1540, %v1542
    %v1550 = vsel %vm1378, %v1542, %v1544
    %v1551 = vsel %vm1378, %v1546, %v1548
    %v1552 = vsel %vm1378, %v1548, %v1544
    %v1557 = vadd.f32 %v1352, %v1549
    %v1558 = vadd.f32 %v1353, %v1550
    %v1559 = vadd.f32 %v1354, %v1551
    %v1560 = vadd.f32 %v1355, %v1552
    %s1561 = sld [smem:[#allocation2 + $0x8]]
    %v1562 = vstv %s1561
    %v1563 = vmul.f32 %v1562, %v44
    %v1564 = vmul.f32 %v1562, %v45
    %v1565 = vmul.f32 %v1562, 0.0
    %v1566 = vmul.f32 %v1562, %v48
    %v1567 = vmul.f32 %v1562, %v49
    %1573 = vrot.lane.b32.xlu0 %v1563, 94
    %v1574 = vpop.permute.xlu0 %1573
    %1575 = vrot.lane.b32.xlu0 %v1564, 94
    %v1576 = vpop.permute.xlu0 %1575
    %1577 = vrot.lane.b32.xlu0 %v1565, 94
    %v1578 = vpop.permute.xlu0 %1577
    %1579 = vrot.lane.b32.xlu0 %v1566, 94
    %v1580 = vpop.permute.xlu0 %1579
    %1581 = vrot.lane.b32.xlu0 %v1567, 94
    %v1582 = vpop.permute.xlu0 %1581
    %vm1583 = vcmask 769024
    %v1584 = vsel %vm1583, %v1574, %v1576
    %v1585 = vsel %vm1583, %v1576, %v1578
    %v1586 = vsel %vm1583, %v1580, %v1582
    %v1587 = vsel %vm1583, %v1582, %v1578
    %v1592 = vadd.f32 %v1387, %v1584
    %v1593 = vadd.f32 %v1388, %v1585
    %v1594 = vadd.f32 %v1389, %v1586
    %v1595 = vadd.f32 %v1390, %v1587
    %s1596 = sld [smem:[#allocation2 + $0x23]]
    %v1597 = vstv %s1596
    %v1598 = vmul.f32 %v1597, %v44
    %v1599 = vmul.f32 %v1597, %v45
    %v1600 = vmul.f32 %v1597, 0.0
    %v1601 = vmul.f32 %v1597, %v48
    %v1602 = vmul.f32 %v1597, %v49
    %1608 = vrot.lane.b32.xlu0 %v1598, 94
    %v1609 = vpop.permute.xlu0 %1608
    %1610 = vrot.lane.b32.xlu0 %v1599, 94
    %v1611 = vpop.permute.xlu0 %1610
    %1612 = vrot.lane.b32.xlu0 %v1600, 94
    %v1613 = vpop.permute.xlu0 %1612
    %1614 = vrot.lane.b32.xlu0 %v1601, 94
    %v1615 = vpop.permute.xlu0 %1614
    %1616 = vrot.lane.b32.xlu0 %v1602, 94
    %v1617 = vpop.permute.xlu0 %1616
    %v1618 = vsel %vm1583, %v1609, %v1611
    %v1619 = vsel %vm1583, %v1611, %v1613
    %v1620 = vsel %vm1583, %v1615, %v1617
    %v1621 = vsel %vm1583, %v1617, %v1613
    %v1626 = vadd.f32 %v1421, %v1618
    %v1627 = vadd.f32 %v1422, %v1619
    %v1628 = vadd.f32 %v1423, %v1620
    %v1629 = vadd.f32 %v1424, %v1621
    %s1630 = sld [smem:[#allocation2 + $0x3e]]
    %v1631 = vstv %s1630
    %v1632 = vmul.f32 %v1631, %v44
    %v1633 = vmul.f32 %v1631, %v45
    %v1634 = vmul.f32 %v1631, 0.0
    %v1635 = vmul.f32 %v1631, %v48
    %v1636 = vmul.f32 %v1631, %v49
    %1642 = vrot.lane.b32.xlu0 %v1632, 94
    %v1643 = vpop.permute.xlu0 %1642
    %1644 = vrot.lane.b32.xlu0 %v1633, 94
    %v1645 = vpop.permute.xlu0 %1644
    %1646 = vrot.lane.b32.xlu0 %v1634, 94
    %v1647 = vpop.permute.xlu0 %1646
    %1648 = vrot.lane.b32.xlu0 %v1635, 94
    %v1649 = vpop.permute.xlu0 %1648
    %1650 = vrot.lane.b32.xlu0 %v1636, 94
    %v1651 = vpop.permute.xlu0 %1650
    %v1652 = vsel %vm1583, %v1643, %v1645
    %v1653 = vsel %vm1583, %v1645, %v1647
    %v1654 = vsel %vm1583, %v1649, %v1651
    %v1655 = vsel %vm1583, %v1651, %v1647
    %v1660 = vadd.f32 %v1455, %v1652
    %v1661 = vadd.f32 %v1456, %v1653
    %v1662 = vadd.f32 %v1457, %v1654
    %v1663 = vadd.f32 %v1458, %v1655
    %s1664 = sld [smem:[#allocation2 + $0x59]]
    %v1665 = vstv %s1664
    %v1666 = vmul.f32 %v1665, %v44
    %v1667 = vmul.f32 %v1665, %v45
    %v1668 = vmul.f32 %v1665, 0.0
    %v1669 = vmul.f32 %v1665, %v48
    %v1670 = vmul.f32 %v1665, %v49
    %1676 = vrot.lane.b32.xlu0 %v1666, 94
    %v1677 = vpop.permute.xlu0 %1676
    %1678 = vrot.lane.b32.xlu0 %v1667, 94
    %v1679 = vpop.permute.xlu0 %1678
    %1680 = vrot.lane.b32.xlu0 %v1668, 94
    %v1681 = vpop.permute.xlu0 %1680
    %1682 = vrot.lane.b32.xlu0 %v1669, 94
    %v1683 = vpop.permute.xlu0 %1682
    %1684 = vrot.lane.b32.xlu0 %v1670, 94
    %v1685 = vpop.permute.xlu0 %1684
    %v1686 = vsel %vm1583, %v1677, %v1679
    %v1687 = vsel %vm1583, %v1679, %v1681
    %v1688 = vsel %vm1583, %v1683, %v1685
    %v1689 = vsel %vm1583, %v1685, %v1681
    %v1694 = vadd.f32 %v1489, %v1686
    %v1695 = vadd.f32 %v1490, %v1687
    %v1696 = vadd.f32 %v1491, %v1688
    %v1697 = vadd.f32 %v1492, %v1689
    %s1698 = sld [smem:[#allocation2 + $0x74]]
    %v1699 = vstv %s1698
    %v1700 = vmul.f32 %v1699, %v44
    %v1701 = vmul.f32 %v1699, %v45
    %v1702 = vmul.f32 %v1699, 0.0
    %v1703 = vmul.f32 %v1699, %v48
    %v1704 = vmul.f32 %v1699, %v49
    %1710 = vrot.lane.b32.xlu0 %v1700, 94
    %v1711 = vpop.permute.xlu0 %1710
    %1712 = vrot.lane.b32.xlu0 %v1701, 94
    %v1713 = vpop.permute.xlu0 %1712
    %1714 = vrot.lane.b32.xlu0 %v1702, 94
    %v1715 = vpop.permute.xlu0 %1714
    %1716 = vrot.lane.b32.xlu0 %v1703, 94
    %v1717 = vpop.permute.xlu0 %1716
    %1718 = vrot.lane.b32.xlu0 %v1704, 94
    %v1719 = vpop.permute.xlu0 %1718
    %v1720 = vsel %vm1583, %v1711, %v1713
    %v1721 = vsel %vm1583, %v1713, %v1715
    %v1722 = vsel %vm1583, %v1717, %v1719
    %v1723 = vsel %vm1583, %v1719, %v1715
    %v1728 = vadd.f32 %v1523, %v1720
    %v1729 = vadd.f32 %v1524, %v1721
    %v1730 = vadd.f32 %v1525, %v1722
    %v1731 = vadd.f32 %v1526, %v1723
    %s1732 = sld [smem:[#allocation2 + $0x8f]]
    %v1733 = vstv %s1732
    %v1734 = vmul.f32 %v1733, %v44
    %v1735 = vmul.f32 %v1733, %v45
    %v1736 = vmul.f32 %v1733, 0.0
    %v1737 = vmul.f32 %v1733, %v48
    %v1738 = vmul.f32 %v1733, %v49
    %1744 = vrot.lane.b32.xlu0 %v1734, 94
    %v1745 = vpop.permute.xlu0 %1744
    %1746 = vrot.lane.b32.xlu0 %v1735, 94
    %v1747 = vpop.permute.xlu0 %1746
    %1748 = vrot.lane.b32.xlu0 %v1736, 94
    %v1749 = vpop.permute.xlu0 %1748
    %1750 = vrot.lane.b32.xlu0 %v1737, 94
    %v1751 = vpop.permute.xlu0 %1750
    %1752 = vrot.lane.b32.xlu0 %v1738, 94
    %v1753 = vpop.permute.xlu0 %1752
    %v1754 = vsel %vm1583, %v1745, %v1747
    %v1755 = vsel %vm1583, %v1747, %v1749
    %v1756 = vsel %vm1583, %v1751, %v1753
    %v1757 = vsel %vm1583, %v1753, %v1749
    %v1762 = vadd.f32 %v1557, %v1754
    %v1763 = vadd.f32 %v1558, %v1755
    %v1764 = vadd.f32 %v1559, %v1756
    %v1765 = vadd.f32 %v1560, %v1757
    %s1766 = sld [smem:[#allocation2 + $0x9]]
    %v1767 = vstv %s1766
    %v1768 = vmul.f32 %v1767, %v44
    %v1769 = vmul.f32 %v1767, %v45
    %v1770 = vmul.f32 %v1767, %v48
    %v1771 = vmul.f32 %v1767, %v49
    %v1776 = vrot.slane %v1768, 1
    %v1777 = vrot.slane %v1769, 1
    %v1778 = vrot.slane %v1770, 1
    %v1779 = vrot.slane %v1771, 1
    %v1784 = vadd.f32 %v1592, %v1776
    %v1785 = vadd.f32 %v1593, %v1777
    %v1786 = vadd.f32 %v1594, %v1778
    %v1787 = vadd.f32 %v1595, %v1779
    %s1788 = sld [smem:[#allocation2 + $0x24]]
    %v1789 = vstv %s1788
    %v1790 = vmul.f32 %v1789, %v44
    %v1791 = vmul.f32 %v1789, %v45
    %v1792 = vmul.f32 %v1789, %v48
    %v1793 = vmul.f32 %v1789, %v49
    %v1798 = vrot.slane %v1790, 1
    %v1799 = vrot.slane %v1791, 1
    %v1800 = vrot.slane %v1792, 1
    %v1801 = vrot.slane %v1793, 1
    %v1806 = vadd.f32 %v1626, %v1798
    %v1807 = vadd.f32 %v1627, %v1799
    %v1808 = vadd.f32 %v1628, %v1800
    %v1809 = vadd.f32 %v1629, %v1801
    %s1810 = sld [smem:[#allocation2 + $0x3f]]
    %v1811 = vstv %s1810
    %v1812 = vmul.f32 %v1811, %v44
    %v1813 = vmul.f32 %v1811, %v45
    %v1814 = vmul.f32 %v1811, %v48
    %v1815 = vmul.f32 %v1811, %v49
    %v1820 = vrot.slane %v1812, 1
    %v1821 = vrot.slane %v1813, 1
    %v1822 = vrot.slane %v1814, 1
    %v1823 = vrot.slane %v1815, 1
    %v1828 = vadd.f32 %v1660, %v1820
    %v1829 = vadd.f32 %v1661, %v1821
    %v1830 = vadd.f32 %v1662, %v1822
    %v1831 = vadd.f32 %v1663, %v1823
    %s1832 = sld [smem:[#allocation2 + $0x5a]]
    %v1833 = vstv %s1832
    %v1834 = vmul.f32 %v1833, %v44
    %v1835 = vmul.f32 %v1833, %v45
    %v1836 = vmul.f32 %v1833, %v48
    %v1837 = vmul.f32 %v1833, %v49
    %v1842 = vrot.slane %v1834, 1
    %v1843 = vrot.slane %v1835, 1
    %v1844 = vrot.slane %v1836, 1
    %v1845 = vrot.slane %v1837, 1
    %v1850 = vadd.f32 %v1694, %v1842
    %v1851 = vadd.f32 %v1695, %v1843
    %v1852 = vadd.f32 %v1696, %v1844
    %v1853 = vadd.f32 %v1697, %v1845
    %s1854 = sld [smem:[#allocation2 + $0x75]]
    %v1855 = vstv %s1854
    %v1856 = vmul.f32 %v1855, %v44
    %v1857 = vmul.f32 %v1855, %v45
    %v1858 = vmul.f32 %v1855, %v48
    %v1859 = vmul.f32 %v1855, %v49
    %v1864 = vrot.slane %v1856, 1
    %v1865 = vrot.slane %v1857, 1
    %v1866 = vrot.slane %v1858, 1
    %v1867 = vrot.slane %v1859, 1
    %v1872 = vadd.f32 %v1728, %v1864
    %v1873 = vadd.f32 %v1729, %v1865
    %v1874 = vadd.f32 %v1730, %v1866
    %v1875 = vadd.f32 %v1731, %v1867
    %s1876 = sld [smem:[#allocation2 + $0x90]]
    %v1877 = vstv %s1876
    %v1878 = vmul.f32 %v1877, %v44
    %v1879 = vmul.f32 %v1877, %v45
    %v1880 = vmul.f32 %v1877, %v48
    %v1881 = vmul.f32 %v1877, %v49
    %v1886 = vrot.slane %v1878, 1
    %v1887 = vrot.slane %v1879, 1
    %v1888 = vrot.slane %v1880, 1
    %v1889 = vrot.slane %v1881, 1
    %v1894 = vadd.f32 %v1762, %v1886
    %v1895 = vadd.f32 %v1763, %v1887
    %v1896 = vadd.f32 %v1764, %v1888
    %v1897 = vadd.f32 %v1765, %v1889
    %s1898 = sld [smem:[#allocation2 + $0xa]]
    %v1899 = vstv %s1898
    %v1900 = vmul.f32 %v1899, %v44
    %v1901 = vmul.f32 %v1899, %v45
    %v1902 = vmul.f32 %v1899, 0.0
    %v1903 = vmul.f32 %v1899, %v48
    %v1904 = vmul.f32 %v1899, %v49
    %v1910 = vrot.slane %v1900, 1
    %v1911 = vrot.slane %v1901, 1
    %v1912 = vrot.slane %v1902, 1
    %v1913 = vrot.slane %v1903, 1
    %v1914 = vrot.slane %v1904, 1
    %1915 = vrot.lane.b32.xlu0 %v1910, 127
    %v1916 = vpop.permute.xlu0 %1915
    %1917 = vrot.lane.b32.xlu0 %v1911, 127
    %v1918 = vpop.permute.xlu0 %1917
    %1919 = vrot.lane.b32.xlu0 %v1912, 127
    %v1920 = vpop.permute.xlu0 %1919
    %1921 = vrot.lane.b32.xlu0 %v1913, 127
    %v1922 = vpop.permute.xlu0 %1921
    %1923 = vrot.lane.b32.xlu0 %v1914, 127
    %v1924 = vpop.permute.xlu0 %1923
    %v1925 = vsel %vm148, %v1916, %v1918
    %v1926 = vsel %vm148, %v1918, %v1920
    %v1927 = vsel %vm148, %v1922, %v1924
    %v1928 = vsel %vm148, %v1924, %v1920
    %v1933 = vadd.f32 %v1784, %v1925
    %v1934 = vadd.f32 %v1785, %v1926
    %v1935 = vadd.f32 %v1786, %v1927
    %v1936 = vadd.f32 %v1787, %v1928
    %s1937 = sld [smem:[#allocation2 + $0x25]]
    %v1938 = vstv %s1937
    %v1939 = vmul.f32 %v1938, %v44
    %v1940 = vmul.f32 %v1938, %v45
    %v1941 = vmul.f32 %v1938, 0.0
    %v1942 = vmul.f32 %v1938, %v48
    %v1943 = vmul.f32 %v1938, %v49
    %v1949 = vrot.slane %v1939, 1
    %v1950 = vrot.slane %v1940, 1
    %v1951 = vrot.slane %v1941, 1
    %v1952 = vrot.slane %v1942, 1
    %v1953 = vrot.slane %v1943, 1
    %1954 = vrot.lane.b32.xlu0 %v1949, 127
    %v1955 = vpop.permute.xlu0 %1954
    %1956 = vrot.lane.b32.xlu0 %v1950, 127
    %v1957 = vpop.permute.xlu0 %1956
    %1958 = vrot.lane.b32.xlu0 %v1951, 127
    %v1959 = vpop.permute.xlu0 %1958
    %1960 = vrot.lane.b32.xlu0 %v1952, 127
    %v1961 = vpop.permute.xlu0 %1960
    %1962 = vrot.lane.b32.xlu0 %v1953, 127
    %v1963 = vpop.permute.xlu0 %1962
    %v1964 = vsel %vm148, %v1955, %v1957
    %v1965 = vsel %vm148, %v1957, %v1959
    %v1966 = vsel %vm148, %v1961, %v1963
    %v1967 = vsel %vm148, %v1963, %v1959
    %v1972 = vadd.f32 %v1806, %v1964
    %v1973 = vadd.f32 %v1807, %v1965
    %v1974 = vadd.f32 %v1808, %v1966
    %v1975 = vadd.f32 %v1809, %v1967
    %s1976 = sld [smem:[#allocation2 + $0x40]]
    %v1977 = vstv %s1976
    %v1978 = vmul.f32 %v1977, %v44
    %v1979 = vmul.f32 %v1977, %v45
    %v1980 = vmul.f32 %v1977, 0.0
    %v1981 = vmul.f32 %v1977, %v48
    %v1982 = vmul.f32 %v1977, %v49
    %v1988 = vrot.slane %v1978, 1
    %v1989 = vrot.slane %v1979, 1
    %v1990 = vrot.slane %v1980, 1
    %v1991 = vrot.slane %v1981, 1
    %v1992 = vrot.slane %v1982, 1
    %1993 = vrot.lane.b32.xlu0 %v1988, 127
    %v1994 = vpop.permute.xlu0 %1993
    %1995 = vrot.lane.b32.xlu0 %v1989, 127
    %v1996 = vpop.permute.xlu0 %1995
    %1997 = vrot.lane.b32.xlu0 %v1990, 127
    %v1998 = vpop.permute.xlu0 %1997
    %1999 = vrot.lane.b32.xlu0 %v1991, 127
    %v2000 = vpop.permute.xlu0 %1999
    %2001 = vrot.lane.b32.xlu0 %v1992, 127
    %v2002 = vpop.permute.xlu0 %2001
    %v2003 = vsel %vm148, %v1994, %v1996
    %v2004 = vsel %vm148, %v1996, %v1998
    %v2005 = vsel %vm148, %v2000, %v2002
    %v2006 = vsel %vm148, %v2002, %v1998
    %v2011 = vadd.f32 %v1828, %v2003
    %v2012 = vadd.f32 %v1829, %v2004
    %v2013 = vadd.f32 %v1830, %v2005
    %v2014 = vadd.f32 %v1831, %v2006
    %s2015 = sld [smem:[#allocation2 + $0x5b]]
    %v2016 = vstv %s2015
    %v2017 = vmul.f32 %v2016, %v44
    %v2018 = vmul.f32 %v2016, %v45
    %v2019 = vmul.f32 %v2016, 0.0
    %v2020 = vmul.f32 %v2016, %v48
    %v2021 = vmul.f32 %v2016, %v49
    %v2027 = vrot.slane %v2017, 1
    %v2028 = vrot.slane %v2018, 1
    %v2029 = vrot.slane %v2019, 1
    %v2030 = vrot.slane %v2020, 1
    %v2031 = vrot.slane %v2021, 1
    %2032 = vrot.lane.b32.xlu0 %v2027, 127
    %v2033 = vpop.permute.xlu0 %2032
    %2034 = vrot.lane.b32.xlu0 %v2028, 127
    %v2035 = vpop.permute.xlu0 %2034
    %2036 = vrot.lane.b32.xlu0 %v2029, 127
    %v2037 = vpop.permute.xlu0 %2036
    %2038 = vrot.lane.b32.xlu0 %v2030, 127
    %v2039 = vpop.permute.xlu0 %2038
    %2040 = vrot.lane.b32.xlu0 %v2031, 127
    %v2041 = vpop.permute.xlu0 %2040
    %v2042 = vsel %vm148, %v2033, %v2035
    %v2043 = vsel %vm148, %v2035, %v2037
    %v2044 = vsel %vm148, %v2039, %v2041
    %v2045 = vsel %vm148, %v2041, %v2037
    %v2050 = vadd.f32 %v1850, %v2042
    %v2051 = vadd.f32 %v1851, %v2043
    %v2052 = vadd.f32 %v1852, %v2044
    %v2053 = vadd.f32 %v1853, %v2045
    %s2054 = sld [smem:[#allocation2 + $0x76]]
    %v2055 = vstv %s2054
    %v2056 = vmul.f32 %v2055, %v44
    %v2057 = vmul.f32 %v2055, %v45
    %v2058 = vmul.f32 %v2055, 0.0
    %v2059 = vmul.f32 %v2055, %v48
    %v2060 = vmul.f32 %v2055, %v49
    %v2066 = vrot.slane %v2056, 1
    %v2067 = vrot.slane %v2057, 1
    %v2068 = vrot.slane %v2058, 1
    %v2069 = vrot.slane %v2059, 1
    %v2070 = vrot.slane %v2060, 1
    %2071 = vrot.lane.b32.xlu0 %v2066, 127
    %v2072 = vpop.permute.xlu0 %2071
    %2073 = vrot.lane.b32.xlu0 %v2067, 127
    %v2074 = vpop.permute.xlu0 %2073
    %2075 = vrot.lane.b32.xlu0 %v2068, 127
    %v2076 = vpop.permute.xlu0 %2075
    %2077 = vrot.lane.b32.xlu0 %v2069, 127
    %v2078 = vpop.permute.xlu0 %2077
    %2079 = vrot.lane.b32.xlu0 %v2070, 127
    %v2080 = vpop.permute.xlu0 %2079
    %v2081 = vsel %vm148, %v2072, %v2074
    %v2082 = vsel %vm148, %v2074, %v2076
    %v2083 = vsel %vm148, %v2078, %v2080
    %v2084 = vsel %vm148, %v2080, %v2076
    %v2089 = vadd.f32 %v1872, %v2081
    %v2090 = vadd.f32 %v1873, %v2082
    %v2091 = vadd.f32 %v1874, %v2083
    %v2092 = vadd.f32 %v1875, %v2084
    %s2093 = sld [smem:[#allocation2 + $0x91]]
    %v2094 = vstv %s2093
    %v2095 = vmul.f32 %v2094, %v44
    %v2096 = vmul.f32 %v2094, %v45
    %v2097 = vmul.f32 %v2094, 0.0
    %v2098 = vmul.f32 %v2094, %v48
    %v2099 = vmul.f32 %v2094, %v49
    %v2105 = vrot.slane %v2095, 1
    %v2106 = vrot.slane %v2096, 1
    %v2107 = vrot.slane %v2097, 1
    %v2108 = vrot.slane %v2098, 1
    %v2109 = vrot.slane %v2099, 1
    %2110 = vrot.lane.b32.xlu0 %v2105, 127
    %v2111 = vpop.permute.xlu0 %2110
    %2112 = vrot.lane.b32.xlu0 %v2106, 127
    %v2113 = vpop.permute.xlu0 %2112
    %2114 = vrot.lane.b32.xlu0 %v2107, 127
    %v2115 = vpop.permute.xlu0 %2114
    %2116 = vrot.lane.b32.xlu0 %v2108, 127
    %v2117 = vpop.permute.xlu0 %2116
    %2118 = vrot.lane.b32.xlu0 %v2109, 127
    %v2119 = vpop.permute.xlu0 %2118
    %v2120 = vsel %vm148, %v2111, %v2113
    %v2121 = vsel %vm148, %v2113, %v2115
    %v2122 = vsel %vm148, %v2117, %v2119
    %v2123 = vsel %vm148, %v2119, %v2115
    %v2128 = vadd.f32 %v1894, %v2120
    %v2129 = vadd.f32 %v1895, %v2121
    %v2130 = vadd.f32 %v1896, %v2122
    %v2131 = vadd.f32 %v1897, %v2123
    %s2132 = sld [smem:[#allocation2 + $0xb]]
    %v2133 = vstv %s2132
    %v2134 = vmul.f32 %v2133, %v44
    %v2135 = vmul.f32 %v2133, %v45
    %v2136 = vmul.f32 %v2133, 0.0
    %v2137 = vmul.f32 %v2133, %v48
    %v2138 = vmul.f32 %v2133, %v49
    %v2144 = vrot.slane %v2134, 1
    %v2145 = vrot.slane %v2135, 1
    %v2146 = vrot.slane %v2136, 1
    %v2147 = vrot.slane %v2137, 1
    %v2148 = vrot.slane %v2138, 1
    %2149 = vrot.lane.b32.xlu0 %v2144, 126
    %v2150 = vpop.permute.xlu0 %2149
    %2151 = vrot.lane.b32.xlu0 %v2145, 126
    %v2152 = vpop.permute.xlu0 %2151
    %2153 = vrot.lane.b32.xlu0 %v2146, 126
    %v2154 = vpop.permute.xlu0 %2153
    %2155 = vrot.lane.b32.xlu0 %v2147, 126
    %v2156 = vpop.permute.xlu0 %2155
    %2157 = vrot.lane.b32.xlu0 %v2148, 126
    %v2158 = vpop.permute.xlu0 %2157
    %v2159 = vsel %vm353, %v2150, %v2152
    %v2160 = vsel %vm353, %v2152, %v2154
    %v2161 = vsel %vm353, %v2156, %v2158
    %v2162 = vsel %vm353, %v2158, %v2154
    %v2167 = vadd.f32 %v1933, %v2159
    %v2168 = vadd.f32 %v1934, %v2160
    %v2169 = vadd.f32 %v1935, %v2161
    %v2170 = vadd.f32 %v1936, %v2162
    %s2171 = sld [smem:[#allocation2 + $0x26]]
    %v2172 = vstv %s2171
    %v2173 = vmul.f32 %v2172, %v44
    %v2174 = vmul.f32 %v2172, %v45
    %v2175 = vmul.f32 %v2172, 0.0
    %v2176 = vmul.f32 %v2172, %v48
    %v2177 = vmul.f32 %v2172, %v49
    %v2183 = vrot.slane %v2173, 1
    %v2184 = vrot.slane %v2174, 1
    %v2185 = vrot.slane %v2175, 1
    %v2186 = vrot.slane %v2176, 1
    %v2187 = vrot.slane %v2177, 1
    %2188 = vrot.lane.b32.xlu0 %v2183, 126
    %v2189 = vpop.permute.xlu0 %2188
    %2190 = vrot.lane.b32.xlu0 %v2184, 126
    %v2191 = vpop.permute.xlu0 %2190
    %2192 = vrot.lane.b32.xlu0 %v2185, 126
    %v2193 = vpop.permute.xlu0 %2192
    %2194 = vrot.lane.b32.xlu0 %v2186, 126
    %v2195 = vpop.permute.xlu0 %2194
    %2196 = vrot.lane.b32.xlu0 %v2187, 126
    %v2197 = vpop.permute.xlu0 %2196
    %v2198 = vsel %vm353, %v2189, %v2191
    %v2199 = vsel %vm353, %v2191, %v2193
    %v2200 = vsel %vm353, %v2195, %v2197
    %v2201 = vsel %vm353, %v2197, %v2193
    %v2206 = vadd.f32 %v1972, %v2198
    %v2207 = vadd.f32 %v1973, %v2199
    %v2208 = vadd.f32 %v1974, %v2200
    %v2209 = vadd.f32 %v1975, %v2201
    %s2210 = sld [smem:[#allocation2 + $0x41]]
    %v2211 = vstv %s2210
    %v2212 = vmul.f32 %v2211, %v44
    %v2213 = vmul.f32 %v2211, %v45
    %v2214 = vmul.f32 %v2211, 0.0
    %v2215 = vmul.f32 %v2211, %v48
    %v2216 = vmul.f32 %v2211, %v49
    %v2222 = vrot.slane %v2212, 1
    %v2223 = vrot.slane %v2213, 1
    %v2224 = vrot.slane %v2214, 1
    %v2225 = vrot.slane %v2215, 1
    %v2226 = vrot.slane %v2216, 1
    %2227 = vrot.lane.b32.xlu0 %v2222, 126
    %v2228 = vpop.permute.xlu0 %2227
    %2229 = vrot.lane.b32.xlu0 %v2223, 126
    %v2230 = vpop.permute.xlu0 %2229
    %2231 = vrot.lane.b32.xlu0 %v2224, 126
    %v2232 = vpop.permute.xlu0 %2231
    %2233 = vrot.lane.b32.xlu0 %v2225, 126
    %v2234 = vpop.permute.xlu0 %2233
    %2235 = vrot.lane.b32.xlu0 %v2226, 126
    %v2236 = vpop.permute.xlu0 %2235
    %v2237 = vsel %vm353, %v2228, %v2230
    %v2238 = vsel %vm353, %v2230, %v2232
    %v2239 = vsel %vm353, %v2234, %v2236
    %v2240 = vsel %vm353, %v2236, %v2232
    %v2245 = vadd.f32 %v2011, %v2237
    %v2246 = vadd.f32 %v2012, %v2238
    %v2247 = vadd.f32 %v2013, %v2239
    %v2248 = vadd.f32 %v2014, %v2240
    %s2249 = sld [smem:[#allocation2 + $0x5c]]
    %v2250 = vstv %s2249
    %v2251 = vmul.f32 %v2250, %v44
    %v2252 = vmul.f32 %v2250, %v45
    %v2253 = vmul.f32 %v2250, 0.0
    %v2254 = vmul.f32 %v2250, %v48
    %v2255 = vmul.f32 %v2250, %v49
    %v2261 = vrot.slane %v2251, 1
    %v2262 = vrot.slane %v2252, 1
    %v2263 = vrot.slane %v2253, 1
    %v2264 = vrot.slane %v2254, 1
    %v2265 = vrot.slane %v2255, 1
    %2266 = vrot.lane.b32.xlu0 %v2261, 126
    %v2267 = vpop.permute.xlu0 %2266
    %2268 = vrot.lane.b32.xlu0 %v2262, 126
    %v2269 = vpop.permute.xlu0 %2268
    %2270 = vrot.lane.b32.xlu0 %v2263, 126
    %v2271 = vpop.permute.xlu0 %2270
    %2272 = vrot.lane.b32.xlu0 %v2264, 126
    %v2273 = vpop.permute.xlu0 %2272
    %2274 = vrot.lane.b32.xlu0 %v2265, 126
    %v2275 = vpop.permute.xlu0 %2274
    %v2276 = vsel %vm353, %v2267, %v2269
    %v2277 = vsel %vm353, %v2269, %v2271
    %v2278 = vsel %vm353, %v2273, %v2275
    %v2279 = vsel %vm353, %v2275, %v2271
    %v2284 = vadd.f32 %v2050, %v2276
    %v2285 = vadd.f32 %v2051, %v2277
    %v2286 = vadd.f32 %v2052, %v2278
    %v2287 = vadd.f32 %v2053, %v2279
    %s2288 = sld [smem:[#allocation2 + $0x77]]
    %v2289 = vstv %s2288
    %v2290 = vmul.f32 %v2289, %v44
    %v2291 = vmul.f32 %v2289, %v45
    %v2292 = vmul.f32 %v2289, 0.0
    %v2293 = vmul.f32 %v2289, %v48
    %v2294 = vmul.f32 %v2289, %v49
    %v2300 = vrot.slane %v2290, 1
    %v2301 = vrot.slane %v2291, 1
    %v2302 = vrot.slane %v2292, 1
    %v2303 = vrot.slane %v2293, 1
    %v2304 = vrot.slane %v2294, 1
    %2305 = vrot.lane.b32.xlu0 %v2300, 126
    %v2306 = vpop.permute.xlu0 %2305
    %2307 = vrot.lane.b32.xlu0 %v2301, 126
    %v2308 = vpop.permute.xlu0 %2307
    %2309 = vrot.lane.b32.xlu0 %v2302, 126
    %v2310 = vpop.permute.xlu0 %2309
    %2311 = vrot.lane.b32.xlu0 %v2303, 126
    %v2312 = vpop.permute.xlu0 %2311
    %2313 = vrot.lane.b32.xlu0 %v2304, 126
    %v2314 = vpop.permute.xlu0 %2313
    %v2315 = vsel %vm353, %v2306, %v2308
    %v2316 = vsel %vm353, %v2308, %v2310
    %v2317 = vsel %vm353, %v2312, %v2314
    %v2318 = vsel %vm353, %v2314, %v2310
    %v2323 = vadd.f32 %v2089, %v2315
    %v2324 = vadd.f32 %v2090, %v2316
    %v2325 = vadd.f32 %v2091, %v2317
    %v2326 = vadd.f32 %v2092, %v2318
    %s2327 = sld [smem:[#allocation2 + $0x92]]
    %v2328 = vstv %s2327
    %v2329 = vmul.f32 %v2328, %v44
    %v2330 = vmul.f32 %v2328, %v45
    %v2331 = vmul.f32 %v2328, 0.0
    %v2332 = vmul.f32 %v2328, %v48
    %v2333 = vmul.f32 %v2328, %v49
    %v2339 = vrot.slane %v2329, 1
    %v2340 = vrot.slane %v2330, 1
    %v2341 = vrot.slane %v2331, 1
    %v2342 = vrot.slane %v2332, 1
    %v2343 = vrot.slane %v2333, 1
    %2344 = vrot.lane.b32.xlu0 %v2339, 126
    %v2345 = vpop.permute.xlu0 %2344
    %2346 = vrot.lane.b32.xlu0 %v2340, 126
    %v2347 = vpop.permute.xlu0 %2346
    %2348 = vrot.lane.b32.xlu0 %v2341, 126
    %v2349 = vpop.permute.xlu0 %2348
    %2350 = vrot.lane.b32.xlu0 %v2342, 126
    %v2351 = vpop.permute.xlu0 %2350
    %2352 = vrot.lane.b32.xlu0 %v2343, 126
    %v2353 = vpop.permute.xlu0 %2352
    %v2354 = vsel %vm353, %v2345, %v2347
    %v2355 = vsel %vm353, %v2347, %v2349
    %v2356 = vsel %vm353, %v2351, %v2353
    %v2357 = vsel %vm353, %v2353, %v2349
    %v2362 = vadd.f32 %v2128, %v2354
    %v2363 = vadd.f32 %v2129, %v2355
    %v2364 = vadd.f32 %v2130, %v2356
    %v2365 = vadd.f32 %v2131, %v2357
    %s2366 = sld [smem:[#allocation2 + $0xc]]
    %v2367 = vstv %s2366
    %v2368 = vmul.f32 %v2367, %v44
    %v2369 = vmul.f32 %v2367, %v45
    %v2370 = vmul.f32 %v2367, 0.0
    %v2371 = vmul.f32 %v2367, %v48
    %v2372 = vmul.f32 %v2367, %v49
    %v2378 = vrot.slane %v2368, 1
    %v2379 = vrot.slane %v2369, 1
    %v2380 = vrot.slane %v2370, 1
    %v2381 = vrot.slane %v2371, 1
    %v2382 = vrot.slane %v2372, 1
    %2383 = vrot.lane.b32.xlu0 %v2378, 112
    %v2384 = vpop.permute.xlu0 %2383
    %2385 = vrot.lane.b32.xlu0 %v2379, 112
    %v2386 = vpop.permute.xlu0 %2385
    %2387 = vrot.lane.b32.xlu0 %v2380, 112
    %v2388 = vpop.permute.xlu0 %2387
    %2389 = vrot.lane.b32.xlu0 %v2381, 112
    %v2390 = vpop.permute.xlu0 %2389
    %2391 = vrot.lane.b32.xlu0 %v2382, 112
    %v2392 = vpop.permute.xlu0 %2391
    %v2393 = vsel %vm558, %v2384, %v2386
    %v2394 = vsel %vm558, %v2386, %v2388
    %v2395 = vsel %vm558, %v2390, %v2392
    %v2396 = vsel %vm558, %v2392, %v2388
    %v2401 = vadd.f32 %v2167, %v2393
    %v2402 = vadd.f32 %v2168, %v2394
    %v2403 = vadd.f32 %v2169, %v2395
    %v2404 = vadd.f32 %v2170, %v2396
    %s2405 = sld [smem:[#allocation2 + $0x27]]
    %v2406 = vstv %s2405
    %v2407 = vmul.f32 %v2406, %v44
    %v2408 = vmul.f32 %v2406, %v45
    %v2409 = vmul.f32 %v2406, 0.0
    %v2410 = vmul.f32 %v2406, %v48
    %v2411 = vmul.f32 %v2406, %v49
    %v2417 = vrot.slane %v2407, 1
    %v2418 = vrot.slane %v2408, 1
    %v2419 = vrot.slane %v2409, 1
    %v2420 = vrot.slane %v2410, 1
    %v2421 = vrot.slane %v2411, 1
    %2422 = vrot.lane.b32.xlu0 %v2417, 112
    %v2423 = vpop.permute.xlu0 %2422
    %2424 = vrot.lane.b32.xlu0 %v2418, 112
    %v2425 = vpop.permute.xlu0 %2424
    %2426 = vrot.lane.b32.xlu0 %v2419, 112
    %v2427 = vpop.permute.xlu0 %2426
    %2428 = vrot.lane.b32.xlu0 %v2420, 112
    %v2429 = vpop.permute.xlu0 %2428
    %2430 = vrot.lane.b32.xlu0 %v2421, 112
    %v2431 = vpop.permute.xlu0 %2430
    %v2432 = vsel %vm558, %v2423, %v2425
    %v2433 = vsel %vm558, %v2425, %v2427
    %v2434 = vsel %vm558, %v2429, %v2431
    %v2435 = vsel %vm558, %v2431, %v2427
    %v2440 = vadd.f32 %v2206, %v2432
    %v2441 = vadd.f32 %v2207, %v2433
    %v2442 = vadd.f32 %v2208, %v2434
    %v2443 = vadd.f32 %v2209, %v2435
    %s2444 = sld [smem:[#allocation2 + $0x42]]
    %v2445 = vstv %s2444
    %v2446 = vmul.f32 %v2445, %v44
    %v2447 = vmul.f32 %v2445, %v45
    %v2448 = vmul.f32 %v2445, 0.0
    %v2449 = vmul.f32 %v2445, %v48
    %v2450 = vmul.f32 %v2445, %v49
    %v2456 = vrot.slane %v2446, 1
    %v2457 = vrot.slane %v2447, 1
    %v2458 = vrot.slane %v2448, 1
    %v2459 = vrot.slane %v2449, 1
    %v2460 = vrot.slane %v2450, 1
    %2461 = vrot.lane.b32.xlu0 %v2456, 112
    %v2462 = vpop.permute.xlu0 %2461
    %2463 = vrot.lane.b32.xlu0 %v2457, 112
    %v2464 = vpop.permute.xlu0 %2463
    %2465 = vrot.lane.b32.xlu0 %v2458, 112
    %v2466 = vpop.permute.xlu0 %2465
    %2467 = vrot.lane.b32.xlu0 %v2459, 112
    %v2468 = vpop.permute.xlu0 %2467
    %2469 = vrot.lane.b32.xlu0 %v2460, 112
    %v2470 = vpop.permute.xlu0 %2469
    %v2471 = vsel %vm558, %v2462, %v2464
    %v2472 = vsel %vm558, %v2464, %v2466
    %v2473 = vsel %vm558, %v2468, %v2470
    %v2474 = vsel %vm558, %v2470, %v2466
    %v2479 = vadd.f32 %v2245, %v2471
    %v2480 = vadd.f32 %v2246, %v2472
    %v2481 = vadd.f32 %v2247, %v2473
    %v2482 = vadd.f32 %v2248, %v2474
    %s2483 = sld [smem:[#allocation2 + $0x5d]]
    %v2484 = vstv %s2483
    %v2485 = vmul.f32 %v2484, %v44
    %v2486 = vmul.f32 %v2484, %v45
    %v2487 = vmul.f32 %v2484, 0.0
    %v2488 = vmul.f32 %v2484, %v48
    %v2489 = vmul.f32 %v2484, %v49
    %v2495 = vrot.slane %v2485, 1
    %v2496 = vrot.slane %v2486, 1
    %v2497 = vrot.slane %v2487, 1
    %v2498 = vrot.slane %v2488, 1
    %v2499 = vrot.slane %v2489, 1
    %2500 = vrot.lane.b32.xlu0 %v2495, 112
    %v2501 = vpop.permute.xlu0 %2500
    %2502 = vrot.lane.b32.xlu0 %v2496, 112
    %v2503 = vpop.permute.xlu0 %2502
    %2504 = vrot.lane.b32.xlu0 %v2497, 112
    %v2505 = vpop.permute.xlu0 %2504
    %2506 = vrot.lane.b32.xlu0 %v2498, 112
    %v2507 = vpop.permute.xlu0 %2506
    %2508 = vrot.lane.b32.xlu0 %v2499, 112
    %v2509 = vpop.permute.xlu0 %2508
    %v2510 = vsel %vm558, %v2501, %v2503
    %v2511 = vsel %vm558, %v2503, %v2505
    %v2512 = vsel %vm558, %v2507, %v2509
    %v2513 = vsel %vm558, %v2509, %v2505
    %v2518 = vadd.f32 %v2284, %v2510
    %v2519 = vadd.f32 %v2285, %v2511
    %v2520 = vadd.f32 %v2286, %v2512
    %v2521 = vadd.f32 %v2287, %v2513
    %s2522 = sld [smem:[#allocation2 + $0x78]]
    %v2523 = vstv %s2522
    %v2524 = vmul.f32 %v2523, %v44
    %v2525 = vmul.f32 %v2523, %v45
    %v2526 = vmul.f32 %v2523, 0.0
    %v2527 = vmul.f32 %v2523, %v48
    %v2528 = vmul.f32 %v2523, %v49
    %v2534 = vrot.slane %v2524, 1
    %v2535 = vrot.slane %v2525, 1
    %v2536 = vrot.slane %v2526, 1
    %v2537 = vrot.slane %v2527, 1
    %v2538 = vrot.slane %v2528, 1
    %2539 = vrot.lane.b32.xlu0 %v2534, 112
    %v2540 = vpop.permute.xlu0 %2539
    %2541 = vrot.lane.b32.xlu0 %v2535, 112
    %v2542 = vpop.permute.xlu0 %2541
    %2543 = vrot.lane.b32.xlu0 %v2536, 112
    %v2544 = vpop.permute.xlu0 %2543
    %2545 = vrot.lane.b32.xlu0 %v2537, 112
    %v2546 = vpop.permute.xlu0 %2545
    %2547 = vrot.lane.b32.xlu0 %v2538, 112
    %v2548 = vpop.permute.xlu0 %2547
    %v2549 = vsel %vm558, %v2540, %v2542
    %v2550 = vsel %vm558, %v2542, %v2544
    %v2551 = vsel %vm558, %v2546, %v2548
    %v2552 = vsel %vm558, %v2548, %v2544
    %v2557 = vadd.f32 %v2323, %v2549
    %v2558 = vadd.f32 %v2324, %v2550
    %v2559 = vadd.f32 %v2325, %v2551
    %v2560 = vadd.f32 %v2326, %v2552
    %s2561 = sld [smem:[#allocation2 + $0x93]]
    %v2562 = vstv %s2561
    %v2563 = vmul.f32 %v2562, %v44
    %v2564 = vmul.f32 %v2562, %v45
    %v2565 = vmul.f32 %v2562, 0.0
    %v2566 = vmul.f32 %v2562, %v48
    %v2567 = vmul.f32 %v2562, %v49
    %v2573 = vrot.slane %v2563, 1
    %v2574 = vrot.slane %v2564, 1
    %v2575 = vrot.slane %v2565, 1
    %v2576 = vrot.slane %v2566, 1
    %v2577 = vrot.slane %v2567, 1
    %2578 = vrot.lane.b32.xlu0 %v2573, 112
    %v2579 = vpop.permute.xlu0 %2578
    %2580 = vrot.lane.b32.xlu0 %v2574, 112
    %v2581 = vpop.permute.xlu0 %2580
    %2582 = vrot.lane.b32.xlu0 %v2575, 112
    %v2583 = vpop.permute.xlu0 %2582
    %2584 = vrot.lane.b32.xlu0 %v2576, 112
    %v2585 = vpop.permute.xlu0 %2584
    %2586 = vrot.lane.b32.xlu0 %v2577, 112
    %v2587 = vpop.permute.xlu0 %2586
    %v2588 = vsel %vm558, %v2579, %v2581
    %v2589 = vsel %vm558, %v2581, %v2583
    %v2590 = vsel %vm558, %v2585, %v2587
    %v2591 = vsel %vm558, %v2587, %v2583
    %v2596 = vadd.f32 %v2362, %v2588
    %v2597 = vadd.f32 %v2363, %v2589
    %v2598 = vadd.f32 %v2364, %v2590
    %v2599 = vadd.f32 %v2365, %v2591
    %s2600 = sld [smem:[#allocation2 + $0xd]]
    %v2601 = vstv %s2600
    %v2602 = vmul.f32 %v2601, %v44
    %v2603 = vmul.f32 %v2601, %v45
    %v2604 = vmul.f32 %v2601, 0.0
    %v2605 = vmul.f32 %v2601, %v48
    %v2606 = vmul.f32 %v2601, %v49
    %v2612 = vrot.slane %v2602, 1
    %v2613 = vrot.slane %v2603, 1
    %v2614 = vrot.slane %v2604, 1
    %v2615 = vrot.slane %v2605, 1
    %v2616 = vrot.slane %v2606, 1
    %2617 = vrot.lane.b32.xlu0 %v2612, 111
    %v2618 = vpop.permute.xlu0 %2617
    %2619 = vrot.lane.b32.xlu0 %v2613, 111
    %v2620 = vpop.permute.xlu0 %2619
    %2621 = vrot.lane.b32.xlu0 %v2614, 111
    %v2622 = vpop.permute.xlu0 %2621
    %2623 = vrot.lane.b32.xlu0 %v2615, 111
    %v2624 = vpop.permute.xlu0 %2623
    %2625 = vrot.lane.b32.xlu0 %v2616, 111
    %v2626 = vpop.permute.xlu0 %2625
    %v2627 = vsel %vm763, %v2618, %v2620
    %v2628 = vsel %vm763, %v2620, %v2622
    %v2629 = vsel %vm763, %v2624, %v2626
    %v2630 = vsel %vm763, %v2626, %v2622
    %v2635 = vadd.f32 %v2401, %v2627
    %v2636 = vadd.f32 %v2402, %v2628
    %v2637 = vadd.f32 %v2403, %v2629
    %v2638 = vadd.f32 %v2404, %v2630
    %s2639 = sld [smem:[#allocation2 + $0x28]]
    %v2640 = vstv %s2639
    %v2641 = vmul.f32 %v2640, %v44
    %v2642 = vmul.f32 %v2640, %v45
    %v2643 = vmul.f32 %v2640, 0.0
    %v2644 = vmul.f32 %v2640, %v48
    %v2645 = vmul.f32 %v2640, %v49
    %v2651 = vrot.slane %v2641, 1
    %v2652 = vrot.slane %v2642, 1
    %v2653 = vrot.slane %v2643, 1
    %v2654 = vrot.slane %v2644, 1
    %v2655 = vrot.slane %v2645, 1
    %2656 = vrot.lane.b32.xlu0 %v2651, 111
    %v2657 = vpop.permute.xlu0 %2656
    %2658 = vrot.lane.b32.xlu0 %v2652, 111
    %v2659 = vpop.permute.xlu0 %2658
    %2660 = vrot.lane.b32.xlu0 %v2653, 111
    %v2661 = vpop.permute.xlu0 %2660
    %2662 = vrot.lane.b32.xlu0 %v2654, 111
    %v2663 = vpop.permute.xlu0 %2662
    %2664 = vrot.lane.b32.xlu0 %v2655, 111
    %v2665 = vpop.permute.xlu0 %2664
    %v2666 = vsel %vm763, %v2657, %v2659
    %v2667 = vsel %vm763, %v2659, %v2661
    %v2668 = vsel %vm763, %v2663, %v2665
    %v2669 = vsel %vm763, %v2665, %v2661
    %v2674 = vadd.f32 %v2440, %v2666
    %v2675 = vadd.f32 %v2441, %v2667
    %v2676 = vadd.f32 %v2442, %v2668
    %v2677 = vadd.f32 %v2443, %v2669
    %s2678 = sld [smem:[#allocation2 + $0x43]]
    %v2679 = vstv %s2678
    %v2680 = vmul.f32 %v2679, %v44
    %v2681 = vmul.f32 %v2679, %v45
    %v2682 = vmul.f32 %v2679, 0.0
    %v2683 = vmul.f32 %v2679, %v48
    %v2684 = vmul.f32 %v2679, %v49
    %v2690 = vrot.slane %v2680, 1
    %v2691 = vrot.slane %v2681, 1
    %v2692 = vrot.slane %v2682, 1
    %v2693 = vrot.slane %v2683, 1
    %v2694 = vrot.slane %v2684, 1
    %2695 = vrot.lane.b32.xlu0 %v2690, 111
    %v2696 = vpop.permute.xlu0 %2695
    %2697 = vrot.lane.b32.xlu0 %v2691, 111
    %v2698 = vpop.permute.xlu0 %2697
    %2699 = vrot.lane.b32.xlu0 %v2692, 111
    %v2700 = vpop.permute.xlu0 %2699
    %2701 = vrot.lane.b32.xlu0 %v2693, 111
    %v2702 = vpop.permute.xlu0 %2701
    %2703 = vrot.lane.b32.xlu0 %v2694, 111
    %v2704 = vpop.permute.xlu0 %2703
    %v2705 = vsel %vm763, %v2696, %v2698
    %v2706 = vsel %vm763, %v2698, %v2700
    %v2707 = vsel %vm763, %v2702, %v2704
    %v2708 = vsel %vm763, %v2704, %v2700
    %v2713 = vadd.f32 %v2479, %v2705
    %v2714 = vadd.f32 %v2480, %v2706
    %v2715 = vadd.f32 %v2481, %v2707
    %v2716 = vadd.f32 %v2482, %v2708
    %s2717 = sld [smem:[#allocation2 + $0x5e]]
    %v2718 = vstv %s2717
    %v2719 = vmul.f32 %v2718, %v44
    %v2720 = vmul.f32 %v2718, %v45
    %v2721 = vmul.f32 %v2718, 0.0
    %v2722 = vmul.f32 %v2718, %v48
    %v2723 = vmul.f32 %v2718, %v49
    %v2729 = vrot.slane %v2719, 1
    %v2730 = vrot.slane %v2720, 1
    %v2731 = vrot.slane %v2721, 1
    %v2732 = vrot.slane %v2722, 1
    %v2733 = vrot.slane %v2723, 1
    %2734 = vrot.lane.b32.xlu0 %v2729, 111
    %v2735 = vpop.permute.xlu0 %2734
    %2736 = vrot.lane.b32.xlu0 %v2730, 111
    %v2737 = vpop.permute.xlu0 %2736
    %2738 = vrot.lane.b32.xlu0 %v2731, 111
    %v2739 = vpop.permute.xlu0 %2738
    %2740 = vrot.lane.b32.xlu0 %v2732, 111
    %v2741 = vpop.permute.xlu0 %2740
    %2742 = vrot.lane.b32.xlu0 %v2733, 111
    %v2743 = vpop.permute.xlu0 %2742
    %v2744 = vsel %vm763, %v2735, %v2737
    %v2745 = vsel %vm763, %v2737, %v2739
    %v2746 = vsel %vm763, %v2741, %v2743
    %v2747 = vsel %vm763, %v2743, %v2739
    %v2752 = vadd.f32 %v2518, %v2744
    %v2753 = vadd.f32 %v2519, %v2745
    %v2754 = vadd.f32 %v2520, %v2746
    %v2755 = vadd.f32 %v2521, %v2747
    %s2756 = sld [smem:[#allocation2 + $0x79]]
    %v2757 = vstv %s2756
    %v2758 = vmul.f32 %v2757, %v44
    %v2759 = vmul.f32 %v2757, %v45
    %v2760 = vmul.f32 %v2757, 0.0
    %v2761 = vmul.f32 %v2757, %v48
    %v2762 = vmul.f32 %v2757, %v49
    %v2768 = vrot.slane %v2758, 1
    %v2769 = vrot.slane %v2759, 1
    %v2770 = vrot.slane %v2760, 1
    %v2771 = vrot.slane %v2761, 1
    %v2772 = vrot.slane %v2762, 1
    %2773 = vrot.lane.b32.xlu0 %v2768, 111
    %v2774 = vpop.permute.xlu0 %2773
    %2775 = vrot.lane.b32.xlu0 %v2769, 111
    %v2776 = vpop.permute.xlu0 %2775
    %2777 = vrot.lane.b32.xlu0 %v2770, 111
    %v2778 = vpop.permute.xlu0 %2777
    %2779 = vrot.lane.b32.xlu0 %v2771, 111
    %v2780 = vpop.permute.xlu0 %2779
    %2781 = vrot.lane.b32.xlu0 %v2772, 111
    %v2782 = vpop.permute.xlu0 %2781
    %v2783 = vsel %vm763, %v2774, %v2776
    %v2784 = vsel %vm763, %v2776, %v2778
    %v2785 = vsel %vm763, %v2780, %v2782
    %v2786 = vsel %vm763, %v2782, %v2778
    %v2791 = vadd.f32 %v2557, %v2783
    %v2792 = vadd.f32 %v2558, %v2784
    %v2793 = vadd.f32 %v2559, %v2785
    %v2794 = vadd.f32 %v2560, %v2786
    %s2795 = sld [smem:[#allocation2 + $0x94]]
    %v2796 = vstv %s2795
    %v2797 = vmul.f32 %v2796, %v44
    %v2798 = vmul.f32 %v2796, %v45
    %v2799 = vmul.f32 %v2796, 0.0
    %v2800 = vmul.f32 %v2796, %v48
    %v2801 = vmul.f32 %v2796, %v49
    %v2807 = vrot.slane %v2797, 1
    %v2808 = vrot.slane %v2798, 1
    %v2809 = vrot.slane %v2799, 1
    %v2810 = vrot.slane %v2800, 1
    %v2811 = vrot.slane %v2801, 1
    %2812 = vrot.lane.b32.xlu0 %v2807, 111
    %v2813 = vpop.permute.xlu0 %2812
    %2814 = vrot.lane.b32.xlu0 %v2808, 111
    %v2815 = vpop.permute.xlu0 %2814
    %2816 = vrot.lane.b32.xlu0 %v2809, 111
    %v2817 = vpop.permute.xlu0 %2816
    %2818 = vrot.lane.b32.xlu0 %v2810, 111
    %v2819 = vpop.permute.xlu0 %2818
    %2820 = vrot.lane.b32.xlu0 %v2811, 111
    %v2821 = vpop.permute.xlu0 %2820
    %v2822 = vsel %vm763, %v2813, %v2815
    %v2823 = vsel %vm763, %v2815, %v2817
    %v2824 = vsel %vm763, %v2819, %v2821
    %v2825 = vsel %vm763, %v2821, %v2817
    %v2830 = vadd.f32 %v2596, %v2822
    %v2831 = vadd.f32 %v2597, %v2823
    %v2832 = vadd.f32 %v2598, %v2824
    %v2833 = vadd.f32 %v2599, %v2825
    %s2834 = sld [smem:[#allocation2 + $0xe]]
    %v2835 = vstv %s2834
    %v2836 = vmul.f32 %v2835, %v44
    %v2837 = vmul.f32 %v2835, %v45
    %v2838 = vmul.f32 %v2835, 0.0
    %v2839 = vmul.f32 %v2835, %v48
    %v2840 = vmul.f32 %v2835, %v49
    %v2846 = vrot.slane %v2836, 1
    %v2847 = vrot.slane %v2837, 1
    %v2848 = vrot.slane %v2838, 1
    %v2849 = vrot.slane %v2839, 1
    %v2850 = vrot.slane %v2840, 1
    %2851 = vrot.lane.b32.xlu0 %v2846, 110
    %v2852 = vpop.permute.xlu0 %2851
    %2853 = vrot.lane.b32.xlu0 %v2847, 110
    %v2854 = vpop.permute.xlu0 %2853
    %2855 = vrot.lane.b32.xlu0 %v2848, 110
    %v2856 = vpop.permute.xlu0 %2855
    %2857 = vrot.lane.b32.xlu0 %v2849, 110
    %v2858 = vpop.permute.xlu0 %2857
    %2859 = vrot.lane.b32.xlu0 %v2850, 110
    %v2860 = vpop.permute.xlu0 %2859
    %v2861 = vsel %vm968, %v2852, %v2854
    %v2862 = vsel %vm968, %v2854, %v2856
    %v2863 = vsel %vm968, %v2858, %v2860
    %v2864 = vsel %vm968, %v2860, %v2856
    %v2869 = vadd.f32 %v2635, %v2861
    %v2870 = vadd.f32 %v2636, %v2862
    %v2871 = vadd.f32 %v2637, %v2863
    %v2872 = vadd.f32 %v2638, %v2864
    %s2873 = sld [smem:[#allocation2 + $0x29]]
    %v2874 = vstv %s2873
    %v2875 = vmul.f32 %v2874, %v44
    %v2876 = vmul.f32 %v2874, %v45
    %v2877 = vmul.f32 %v2874, 0.0
    %v2878 = vmul.f32 %v2874, %v48
    %v2879 = vmul.f32 %v2874, %v49
    %v2885 = vrot.slane %v2875, 1
    %v2886 = vrot.slane %v2876, 1
    %v2887 = vrot.slane %v2877, 1
    %v2888 = vrot.slane %v2878, 1
    %v2889 = vrot.slane %v2879, 1
    %2890 = vrot.lane.b32.xlu0 %v2885, 110
    %v2891 = vpop.permute.xlu0 %2890
    %2892 = vrot.lane.b32.xlu0 %v2886, 110
    %v2893 = vpop.permute.xlu0 %2892
    %2894 = vrot.lane.b32.xlu0 %v2887, 110
    %v2895 = vpop.permute.xlu0 %2894
    %2896 = vrot.lane.b32.xlu0 %v2888, 110
    %v2897 = vpop.permute.xlu0 %2896
    %2898 = vrot.lane.b32.xlu0 %v2889, 110
    %v2899 = vpop.permute.xlu0 %2898
    %v2900 = vsel %vm968, %v2891, %v2893
    %v2901 = vsel %vm968, %v2893, %v2895
    %v2902 = vsel %vm968, %v2897, %v2899
    %v2903 = vsel %vm968, %v2899, %v2895
    %v2908 = vadd.f32 %v2674, %v2900
    %v2909 = vadd.f32 %v2675, %v2901
    %v2910 = vadd.f32 %v2676, %v2902
    %v2911 = vadd.f32 %v2677, %v2903
    %s2912 = sld [smem:[#allocation2 + $0x44]]
    %v2913 = vstv %s2912
    %v2914 = vmul.f32 %v2913, %v44
    %v2915 = vmul.f32 %v2913, %v45
    %v2916 = vmul.f32 %v2913, 0.0
    %v2917 = vmul.f32 %v2913, %v48
    %v2918 = vmul.f32 %v2913, %v49
    %v2924 = vrot.slane %v2914, 1
    %v2925 = vrot.slane %v2915, 1
    %v2926 = vrot.slane %v2916, 1
    %v2927 = vrot.slane %v2917, 1
    %v2928 = vrot.slane %v2918, 1
    %2929 = vrot.lane.b32.xlu0 %v2924, 110
    %v2930 = vpop.permute.xlu0 %2929
    %2931 = vrot.lane.b32.xlu0 %v2925, 110
    %v2932 = vpop.permute.xlu0 %2931
    %2933 = vrot.lane.b32.xlu0 %v2926, 110
    %v2934 = vpop.permute.xlu0 %2933
    %2935 = vrot.lane.b32.xlu0 %v2927, 110
    %v2936 = vpop.permute.xlu0 %2935
    %2937 = vrot.lane.b32.xlu0 %v2928, 110
    %v2938 = vpop.permute.xlu0 %2937
    %v2939 = vsel %vm968, %v2930, %v2932
    %v2940 = vsel %vm968, %v2932, %v2934
    %v2941 = vsel %vm968, %v2936, %v2938
    %v2942 = vsel %vm968, %v2938, %v2934
    %v2947 = vadd.f32 %v2713, %v2939
    %v2948 = vadd.f32 %v2714, %v2940
    %v2949 = vadd.f32 %v2715, %v2941
    %v2950 = vadd.f32 %v2716, %v2942
    %s2951 = sld [smem:[#allocation2 + $0x5f]]
    %v2952 = vstv %s2951
    %v2953 = vmul.f32 %v2952, %v44
    %v2954 = vmul.f32 %v2952, %v45
    %v2955 = vmul.f32 %v2952, 0.0
    %v2956 = vmul.f32 %v2952, %v48
    %v2957 = vmul.f32 %v2952, %v49
    %v2963 = vrot.slane %v2953, 1
    %v2964 = vrot.slane %v2954, 1
    %v2965 = vrot.slane %v2955, 1
    %v2966 = vrot.slane %v2956, 1
    %v2967 = vrot.slane %v2957, 1
    %2968 = vrot.lane.b32.xlu0 %v2963, 110
    %v2969 = vpop.permute.xlu0 %2968
    %2970 = vrot.lane.b32.xlu0 %v2964, 110
    %v2971 = vpop.permute.xlu0 %2970
    %2972 = vrot.lane.b32.xlu0 %v2965, 110
    %v2973 = vpop.permute.xlu0 %2972
    %2974 = vrot.lane.b32.xlu0 %v2966, 110
    %v2975 = vpop.permute.xlu0 %2974
    %2976 = vrot.lane.b32.xlu0 %v2967, 110
    %v2977 = vpop.permute.xlu0 %2976
    %v2978 = vsel %vm968, %v2969, %v2971
    %v2979 = vsel %vm968, %v2971, %v2973
    %v2980 = vsel %vm968, %v2975, %v2977
    %v2981 = vsel %vm968, %v2977, %v2973
    %v2986 = vadd.f32 %v2752, %v2978
    %v2987 = vadd.f32 %v2753, %v2979
    %v2988 = vadd.f32 %v2754, %v2980
    %v2989 = vadd.f32 %v2755, %v2981
    %s2990 = sld [smem:[#allocation2 + $0x7a]]
    %v2991 = vstv %s2990
    %v2992 = vmul.f32 %v2991, %v44
    %v2993 = vmul.f32 %v2991, %v45
    %v2994 = vmul.f32 %v2991, 0.0
    %v2995 = vmul.f32 %v2991, %v48
    %v2996 = vmul.f32 %v2991, %v49
    %v3002 = vrot.slane %v2992, 1
    %v3003 = vrot.slane %v2993, 1
    %v3004 = vrot.slane %v2994, 1
    %v3005 = vrot.slane %v2995, 1
    %v3006 = vrot.slane %v2996, 1
    %3007 = vrot.lane.b32.xlu0 %v3002, 110
    %v3008 = vpop.permute.xlu0 %3007
    %3009 = vrot.lane.b32.xlu0 %v3003, 110
    %v3010 = vpop.permute.xlu0 %3009
    %3011 = vrot.lane.b32.xlu0 %v3004, 110
    %v3012 = vpop.permute.xlu0 %3011
    %3013 = vrot.lane.b32.xlu0 %v3005, 110
    %v3014 = vpop.permute.xlu0 %3013
    %3015 = vrot.lane.b32.xlu0 %v3006, 110
    %v3016 = vpop.permute.xlu0 %3015
    %v3017 = vsel %vm968, %v3008, %v3010
    %v3018 = vsel %vm968, %v3010, %v3012
    %v3019 = vsel %vm968, %v3014, %v3016
    %v3020 = vsel %vm968, %v3016, %v3012
    %v3025 = vadd.f32 %v2791, %v3017
    %v3026 = vadd.f32 %v2792, %v3018
    %v3027 = vadd.f32 %v2793, %v3019
    %v3028 = vadd.f32 %v2794, %v3020
    %s3029 = sld [smem:[#allocation2 + $0x95]]
    %v3030 = vstv %s3029
    %v3031 = vmul.f32 %v3030, %v44
    %v3032 = vmul.f32 %v3030, %v45
    %v3033 = vmul.f32 %v3030, 0.0
    %v3034 = vmul.f32 %v3030, %v48
    %v3035 = vmul.f32 %v3030, %v49
    %v3041 = vrot.slane %v3031, 1
    %v3042 = vrot.slane %v3032, 1
    %v3043 = vrot.slane %v3033, 1
    %v3044 = vrot.slane %v3034, 1
    %v3045 = vrot.slane %v3035, 1
    %3046 = vrot.lane.b32.xlu0 %v3041, 110
    %v3047 = vpop.permute.xlu0 %3046
    %3048 = vrot.lane.b32.xlu0 %v3042, 110
    %v3049 = vpop.permute.xlu0 %3048
    %3050 = vrot.lane.b32.xlu0 %v3043, 110
    %v3051 = vpop.permute.xlu0 %3050
    %3052 = vrot.lane.b32.xlu0 %v3044, 110
    %v3053 = vpop.permute.xlu0 %3052
    %3054 = vrot.lane.b32.xlu0 %v3045, 110
    %v3055 = vpop.permute.xlu0 %3054
    %v3056 = vsel %vm968, %v3047, %v3049
    %v3057 = vsel %vm968, %v3049, %v3051
    %v3058 = vsel %vm968, %v3053, %v3055
    %v3059 = vsel %vm968, %v3055, %v3051
    %v3064 = vadd.f32 %v2830, %v3056
    %v3065 = vadd.f32 %v2831, %v3057
    %v3066 = vadd.f32 %v2832, %v3058
    %v3067 = vadd.f32 %v2833, %v3059
    %s3068 = sld [smem:[#allocation2 + $0xf]]
    %v3069 = vstv %s3068
    %v3070 = vmul.f32 %v3069, %v44
    %v3071 = vmul.f32 %v3069, %v45
    %v3072 = vmul.f32 %v3069, 0.0
    %v3073 = vmul.f32 %v3069, %v48
    %v3074 = vmul.f32 %v3069, %v49
    %v3080 = vrot.slane %v3070, 1
    %v3081 = vrot.slane %v3071, 1
    %v3082 = vrot.slane %v3072, 1
    %v3083 = vrot.slane %v3073, 1
    %v3084 = vrot.slane %v3074, 1
    %3085 = vrot.lane.b32.xlu0 %v3080, 96
    %v3086 = vpop.permute.xlu0 %3085
    %3087 = vrot.lane.b32.xlu0 %v3081, 96
    %v3088 = vpop.permute.xlu0 %3087
    %3089 = vrot.lane.b32.xlu0 %v3082, 96
    %v3090 = vpop.permute.xlu0 %3089
    %3091 = vrot.lane.b32.xlu0 %v3083, 96
    %v3092 = vpop.permute.xlu0 %3091
    %3093 = vrot.lane.b32.xlu0 %v3084, 96
    %v3094 = vpop.permute.xlu0 %3093
    %v3095 = vsel %vm1173, %v3086, %v3088
    %v3096 = vsel %vm1173, %v3088, %v3090
    %v3097 = vsel %vm1173, %v3092, %v3094
    %v3098 = vsel %vm1173, %v3094, %v3090
    %v3103 = vadd.f32 %v2869, %v3095
    %v3104 = vadd.f32 %v2870, %v3096
    %v3105 = vadd.f32 %v2871, %v3097
    %v3106 = vadd.f32 %v2872, %v3098
    %s3107 = sld [smem:[#allocation2 + $0x2a]]
    %v3108 = vstv %s3107
    %v3109 = vmul.f32 %v3108, %v44
    %v3110 = vmul.f32 %v3108, %v45
    %v3111 = vmul.f32 %v3108, 0.0
    %v3112 = vmul.f32 %v3108, %v48
    %v3113 = vmul.f32 %v3108, %v49
    %v3119 = vrot.slane %v3109, 1
    %v3120 = vrot.slane %v3110, 1
    %v3121 = vrot.slane %v3111, 1
    %v3122 = vrot.slane %v3112, 1
    %v3123 = vrot.slane %v3113, 1
    %3124 = vrot.lane.b32.xlu0 %v3119, 96
    %v3125 = vpop.permute.xlu0 %3124
    %3126 = vrot.lane.b32.xlu0 %v3120, 96
    %v3127 = vpop.permute.xlu0 %3126
    %3128 = vrot.lane.b32.xlu0 %v3121, 96
    %v3129 = vpop.permute.xlu0 %3128
    %3130 = vrot.lane.b32.xlu0 %v3122, 96
    %v3131 = vpop.permute.xlu0 %3130
    %3132 = vrot.lane.b32.xlu0 %v3123, 96
    %v3133 = vpop.permute.xlu0 %3132
    %v3134 = vsel %vm1173, %v3125, %v3127
    %v3135 = vsel %vm1173, %v3127, %v3129
    %v3136 = vsel %vm1173, %v3131, %v3133
    %v3137 = vsel %vm1173, %v3133, %v3129
    %v3142 = vadd.f32 %v2908, %v3134
    %v3143 = vadd.f32 %v2909, %v3135
    %v3144 = vadd.f32 %v2910, %v3136
    %v3145 = vadd.f32 %v2911, %v3137
    %s3146 = sld [smem:[#allocation2 + $0x45]]
    %v3147 = vstv %s3146
    %v3148 = vmul.f32 %v3147, %v44
    %v3149 = vmul.f32 %v3147, %v45
    %v3150 = vmul.f32 %v3147, 0.0
    %v3151 = vmul.f32 %v3147, %v48
    %v3152 = vmul.f32 %v3147, %v49
    %v3158 = vrot.slane %v3148, 1
    %v3159 = vrot.slane %v3149, 1
    %v3160 = vrot.slane %v3150, 1
    %v3161 = vrot.slane %v3151, 1
    %v3162 = vrot.slane %v3152, 1
    %3163 = vrot.lane.b32.xlu0 %v3158, 96
    %v3164 = vpop.permute.xlu0 %3163
    %3165 = vrot.lane.b32.xlu0 %v3159, 96
    %v3166 = vpop.permute.xlu0 %3165
    %3167 = vrot.lane.b32.xlu0 %v3160, 96
    %v3168 = vpop.permute.xlu0 %3167
    %3169 = vrot.lane.b32.xlu0 %v3161, 96
    %v3170 = vpop.permute.xlu0 %3169
    %3171 = vrot.lane.b32.xlu0 %v3162, 96
    %v3172 = vpop.permute.xlu0 %3171
    %v3173 = vsel %vm1173, %v3164, %v3166
    %v3174 = vsel %vm1173, %v3166, %v3168
    %v3175 = vsel %vm1173, %v3170, %v3172
    %v3176 = vsel %vm1173, %v3172, %v3168
    %v3181 = vadd.f32 %v2947, %v3173
    %v3182 = vadd.f32 %v2948, %v3174
    %v3183 = vadd.f32 %v2949, %v3175
    %v3184 = vadd.f32 %v2950, %v3176
    %s3185 = sld [smem:[#allocation2 + $0x60]]
    %v3186 = vstv %s3185
    %v3187 = vmul.f32 %v3186, %v44
    %v3188 = vmul.f32 %v3186, %v45
    %v3189 = vmul.f32 %v3186, 0.0
    %v3190 = vmul.f32 %v3186, %v48
    %v3191 = vmul.f32 %v3186, %v49
    %v3197 = vrot.slane %v3187, 1
    %v3198 = vrot.slane %v3188, 1
    %v3199 = vrot.slane %v3189, 1
    %v3200 = vrot.slane %v3190, 1
    %v3201 = vrot.slane %v3191, 1
    %3202 = vrot.lane.b32.xlu0 %v3197, 96
    %v3203 = vpop.permute.xlu0 %3202
    %3204 = vrot.lane.b32.xlu0 %v3198, 96
    %v3205 = vpop.permute.xlu0 %3204
    %3206 = vrot.lane.b32.xlu0 %v3199, 96
    %v3207 = vpop.permute.xlu0 %3206
    %3208 = vrot.lane.b32.xlu0 %v3200, 96
    %v3209 = vpop.permute.xlu0 %3208
    %3210 = vrot.lane.b32.xlu0 %v3201, 96
    %v3211 = vpop.permute.xlu0 %3210
    %v3212 = vsel %vm1173, %v3203, %v3205
    %v3213 = vsel %vm1173, %v3205, %v3207
    %v3214 = vsel %vm1173, %v3209, %v3211
    %v3215 = vsel %vm1173, %v3211, %v3207
    %v3220 = vadd.f32 %v2986, %v3212
    %v3221 = vadd.f32 %v2987, %v3213
    %v3222 = vadd.f32 %v2988, %v3214
    %v3223 = vadd.f32 %v2989, %v3215
    %s3224 = sld [smem:[#allocation2 + $0x7b]]
    %v3225 = vstv %s3224
    %v3226 = vmul.f32 %v3225, %v44
    %v3227 = vmul.f32 %v3225, %v45
    %v3228 = vmul.f32 %v3225, 0.0
    %v3229 = vmul.f32 %v3225, %v48
    %v3230 = vmul.f32 %v3225, %v49
    %v3236 = vrot.slane %v3226, 1
    %v3237 = vrot.slane %v3227, 1
    %v3238 = vrot.slane %v3228, 1
    %v3239 = vrot.slane %v3229, 1
    %v3240 = vrot.slane %v3230, 1
    %3241 = vrot.lane.b32.xlu0 %v3236, 96
    %v3242 = vpop.permute.xlu0 %3241
    %3243 = vrot.lane.b32.xlu0 %v3237, 96
    %v3244 = vpop.permute.xlu0 %3243
    %3245 = vrot.lane.b32.xlu0 %v3238, 96
    %v3246 = vpop.permute.xlu0 %3245
    %3247 = vrot.lane.b32.xlu0 %v3239, 96
    %v3248 = vpop.permute.xlu0 %3247
    %3249 = vrot.lane.b32.xlu0 %v3240, 96
    %v3250 = vpop.permute.xlu0 %3249
    %v3251 = vsel %vm1173, %v3242, %v3244
    %v3252 = vsel %vm1173, %v3244, %v3246
    %v3253 = vsel %vm1173, %v3248, %v3250
    %v3254 = vsel %vm1173, %v3250, %v3246
    %v3259 = vadd.f32 %v3025, %v3251
    %v3260 = vadd.f32 %v3026, %v3252
    %v3261 = vadd.f32 %v3027, %v3253
    %v3262 = vadd.f32 %v3028, %v3254
    %s3263 = sld [smem:[#allocation2 + $0x96]]
    %v3264 = vstv %s3263
    %v3265 = vmul.f32 %v3264, %v44
    %v3266 = vmul.f32 %v3264, %v45
    %v3267 = vmul.f32 %v3264, 0.0
    %v3268 = vmul.f32 %v3264, %v48
    %v3269 = vmul.f32 %v3264, %v49
    %v3275 = vrot.slane %v3265, 1
    %v3276 = vrot.slane %v3266, 1
    %v3277 = vrot.slane %v3267, 1
    %v3278 = vrot.slane %v3268, 1
    %v3279 = vrot.slane %v3269, 1
    %3280 = vrot.lane.b32.xlu0 %v3275, 96
    %v3281 = vpop.permute.xlu0 %3280
    %3282 = vrot.lane.b32.xlu0 %v3276, 96
    %v3283 = vpop.permute.xlu0 %3282
    %3284 = vrot.lane.b32.xlu0 %v3277, 96
    %v3285 = vpop.permute.xlu0 %3284
    %3286 = vrot.lane.b32.xlu0 %v3278, 96
    %v3287 = vpop.permute.xlu0 %3286
    %3288 = vrot.lane.b32.xlu0 %v3279, 96
    %v3289 = vpop.permute.xlu0 %3288
    %v3290 = vsel %vm1173, %v3281, %v3283
    %v3291 = vsel %vm1173, %v3283, %v3285
    %v3292 = vsel %vm1173, %v3287, %v3289
    %v3293 = vsel %vm1173, %v3289, %v3285
    %v3298 = vadd.f32 %v3064, %v3290
    %v3299 = vadd.f32 %v3065, %v3291
    %v3300 = vadd.f32 %v3066, %v3292
    %v3301 = vadd.f32 %v3067, %v3293
    %s3302 = sld [smem:[#allocation2 + $0x10]]
    %v3303 = vstv %s3302
    %v3304 = vmul.f32 %v3303, %v44
    %v3305 = vmul.f32 %v3303, %v45
    %v3306 = vmul.f32 %v3303, 0.0
    %v3307 = vmul.f32 %v3303, %v48
    %v3308 = vmul.f32 %v3303, %v49
    %v3314 = vrot.slane %v3304, 1
    %v3315 = vrot.slane %v3305, 1
    %v3316 = vrot.slane %v3306, 1
    %v3317 = vrot.slane %v3307, 1
    %v3318 = vrot.slane %v3308, 1
    %3319 = vrot.lane.b32.xlu0 %v3314, 95
    %v3320 = vpop.permute.xlu0 %3319
    %3321 = vrot.lane.b32.xlu0 %v3315, 95
    %v3322 = vpop.permute.xlu0 %3321
    %3323 = vrot.lane.b32.xlu0 %v3316, 95
    %v3324 = vpop.permute.xlu0 %3323
    %3325 = vrot.lane.b32.xlu0 %v3317, 95
    %v3326 = vpop.permute.xlu0 %3325
    %3327 = vrot.lane.b32.xlu0 %v3318, 95
    %v3328 = vpop.permute.xlu0 %3327
    %v3329 = vsel %vm1378, %v3320, %v3322
    %v3330 = vsel %vm1378, %v3322, %v3324
    %v3331 = vsel %vm1378, %v3326, %v3328
    %v3332 = vsel %vm1378, %v3328, %v3324
    %v3337 = vadd.f32 %v3103, %v3329
    %v3338 = vadd.f32 %v3104, %v3330
    %v3339 = vadd.f32 %v3105, %v3331
    %v3340 = vadd.f32 %v3106, %v3332
    %s3341 = sld [smem:[#allocation2 + $0x2b]]
    %v3342 = vstv %s3341
    %v3343 = vmul.f32 %v3342, %v44
    %v3344 = vmul.f32 %v3342, %v45
    %v3345 = vmul.f32 %v3342, 0.0
    %v3346 = vmul.f32 %v3342, %v48
    %v3347 = vmul.f32 %v3342, %v49
    %v3353 = vrot.slane %v3343, 1
    %v3354 = vrot.slane %v3344, 1
    %v3355 = vrot.slane %v3345, 1
    %v3356 = vrot.slane %v3346, 1
    %v3357 = vrot.slane %v3347, 1
    %3358 = vrot.lane.b32.xlu0 %v3353, 95
    %v3359 = vpop.permute.xlu0 %3358
    %3360 = vrot.lane.b32.xlu0 %v3354, 95
    %v3361 = vpop.permute.xlu0 %3360
    %3362 = vrot.lane.b32.xlu0 %v3355, 95
    %v3363 = vpop.permute.xlu0 %3362
    %3364 = vrot.lane.b32.xlu0 %v3356, 95
    %v3365 = vpop.permute.xlu0 %3364
    %3366 = vrot.lane.b32.xlu0 %v3357, 95
    %v3367 = vpop.permute.xlu0 %3366
    %v3368 = vsel %vm1378, %v3359, %v3361
    %v3369 = vsel %vm1378, %v3361, %v3363
    %v3370 = vsel %vm1378, %v3365, %v3367
    %v3371 = vsel %vm1378, %v3367, %v3363
    %v3376 = vadd.f32 %v3142, %v3368
    %v3377 = vadd.f32 %v3143, %v3369
    %v3378 = vadd.f32 %v3144, %v3370
    %v3379 = vadd.f32 %v3145, %v3371
    %s3380 = sld [smem:[#allocation2 + $0x46]]
    %v3381 = vstv %s3380
    %v3382 = vmul.f32 %v3381, %v44
    %v3383 = vmul.f32 %v3381, %v45
    %v3384 = vmul.f32 %v3381, 0.0
    %v3385 = vmul.f32 %v3381, %v48
    %v3386 = vmul.f32 %v3381, %v49
    %v3392 = vrot.slane %v3382, 1
    %v3393 = vrot.slane %v3383, 1
    %v3394 = vrot.slane %v3384, 1
    %v3395 = vrot.slane %v3385, 1
    %v3396 = vrot.slane %v3386, 1
    %3397 = vrot.lane.b32.xlu0 %v3392, 95
    %v3398 = vpop.permute.xlu0 %3397
    %3399 = vrot.lane.b32.xlu0 %v3393, 95
    %v3400 = vpop.permute.xlu0 %3399
    %3401 = vrot.lane.b32.xlu0 %v3394, 95
    %v3402 = vpop.permute.xlu0 %3401
    %3403 = vrot.lane.b32.xlu0 %v3395, 95
    %v3404 = vpop.permute.xlu0 %3403
    %3405 = vrot.lane.b32.xlu0 %v3396, 95
    %v3406 = vpop.permute.xlu0 %3405
    %v3407 = vsel %vm1378, %v3398, %v3400
    %v3408 = vsel %vm1378, %v3400, %v3402
    %v3409 = vsel %vm1378, %v3404, %v3406
    %v3410 = vsel %vm1378, %v3406, %v3402
    %v3415 = vadd.f32 %v3181, %v3407
    %v3416 = vadd.f32 %v3182, %v3408
    %v3417 = vadd.f32 %v3183, %v3409
    %v3418 = vadd.f32 %v3184, %v3410
    %s3419 = sld [smem:[#allocation2 + $0x61]]
    %v3420 = vstv %s3419
    %v3421 = vmul.f32 %v3420, %v44
    %v3422 = vmul.f32 %v3420, %v45
    %v3423 = vmul.f32 %v3420, 0.0
    %v3424 = vmul.f32 %v3420, %v48
    %v3425 = vmul.f32 %v3420, %v49
    %v3431 = vrot.slane %v3421, 1
    %v3432 = vrot.slane %v3422, 1
    %v3433 = vrot.slane %v3423, 1
    %v3434 = vrot.slane %v3424, 1
    %v3435 = vrot.slane %v3425, 1
    %3436 = vrot.lane.b32.xlu0 %v3431, 95
    %v3437 = vpop.permute.xlu0 %3436
    %3438 = vrot.lane.b32.xlu0 %v3432, 95
    %v3439 = vpop.permute.xlu0 %3438
    %3440 = vrot.lane.b32.xlu0 %v3433, 95
    %v3441 = vpop.permute.xlu0 %3440
    %3442 = vrot.lane.b32.xlu0 %v3434, 95
    %v3443 = vpop.permute.xlu0 %3442
    %3444 = vrot.lane.b32.xlu0 %v3435, 95
    %v3445 = vpop.permute.xlu0 %3444
    %v3446 = vsel %vm1378, %v3437, %v3439
    %v3447 = vsel %vm1378, %v3439, %v3441
    %v3448 = vsel %vm1378, %v3443, %v3445
    %v3449 = vsel %vm1378, %v3445, %v3441
    %v3454 = vadd.f32 %v3220, %v3446
    %v3455 = vadd.f32 %v3221, %v3447
    %v3456 = vadd.f32 %v3222, %v3448
    %v3457 = vadd.f32 %v3223, %v3449
    %s3458 = sld [smem:[#allocation2 + $0x7c]]
    %v3459 = vstv %s3458
    %v3460 = vmul.f32 %v3459, %v44
    %v3461 = vmul.f32 %v3459, %v45
    %v3462 = vmul.f32 %v3459, 0.0
    %v3463 = vmul.f32 %v3459, %v48
    %v3464 = vmul.f32 %v3459, %v49
    %v3470 = vrot.slane %v3460, 1
    %v3471 = vrot.slane %v3461, 1
    %v3472 = vrot.slane %v3462, 1
    %v3473 = vrot.slane %v3463, 1
    %v3474 = vrot.slane %v3464, 1
    %3475 = vrot.lane.b32.xlu0 %v3470, 95
    %v3476 = vpop.permute.xlu0 %3475
    %3477 = vrot.lane.b32.xlu0 %v3471, 95
    %v3478 = vpop.permute.xlu0 %3477
    %3479 = vrot.lane.b32.xlu0 %v3472, 95
    %v3480 = vpop.permute.xlu0 %3479
    %3481 = vrot.lane.b32.xlu0 %v3473, 95
    %v3482 = vpop.permute.xlu0 %3481
    %3483 = vrot.lane.b32.xlu0 %v3474, 95
    %v3484 = vpop.permute.xlu0 %3483
    %v3485 = vsel %vm1378, %v3476, %v3478
    %v3486 = vsel %vm1378, %v3478, %v3480
    %v3487 = vsel %vm1378, %v3482, %v3484
    %v3488 = vsel %vm1378, %v3484, %v3480
    %v3493 = vadd.f32 %v3259, %v3485
    %v3494 = vadd.f32 %v3260, %v3486
    %v3495 = vadd.f32 %v3261, %v3487
    %v3496 = vadd.f32 %v3262, %v3488
    %s3497 = sld [smem:[#allocation2 + $0x97]]
    %v3498 = vstv %s3497
    %v3499 = vmul.f32 %v3498, %v44
    %v3500 = vmul.f32 %v3498, %v45
    %v3501 = vmul.f32 %v3498, 0.0
    %v3502 = vmul.f32 %v3498, %v48
    %v3503 = vmul.f32 %v3498, %v49
    %v3509 = vrot.slane %v3499, 1
    %v3510 = vrot.slane %v3500, 1
    %v3511 = vrot.slane %v3501, 1
    %v3512 = vrot.slane %v3502, 1
    %v3513 = vrot.slane %v3503, 1
    %3514 = vrot.lane.b32.xlu0 %v3509, 95
    %v3515 = vpop.permute.xlu0 %3514
    %3516 = vrot.lane.b32.xlu0 %v3510, 95
    %v3517 = vpop.permute.xlu0 %3516
    %3518 = vrot.lane.b32.xlu0 %v3511, 95
    %v3519 = vpop.permute.xlu0 %3518
    %3520 = vrot.lane.b32.xlu0 %v3512, 95
    %v3521 = vpop.permute.xlu0 %3520
    %3522 = vrot.lane.b32.xlu0 %v3513, 95
    %v3523 = vpop.permute.xlu0 %3522
    %v3524 = vsel %vm1378, %v3515, %v3517
    %v3525 = vsel %vm1378, %v3517, %v3519
    %v3526 = vsel %vm1378, %v3521, %v3523
    %v3527 = vsel %vm1378, %v3523, %v3519
    %v3532 = vadd.f32 %v3298, %v3524
    %v3533 = vadd.f32 %v3299, %v3525
    %v3534 = vadd.f32 %v3300, %v3526
    %v3535 = vadd.f32 %v3301, %v3527
    %s3536 = sld [smem:[#allocation2 + $0x11]]
    %v3537 = vstv %s3536
    %v3538 = vmul.f32 %v3537, %v44
    %v3539 = vmul.f32 %v3537, %v45
    %v3540 = vmul.f32 %v3537, 0.0
    %v3541 = vmul.f32 %v3537, %v48
    %v3542 = vmul.f32 %v3537, %v49
    %v3548 = vrot.slane %v3538, 1
    %v3549 = vrot.slane %v3539, 1
    %v3550 = vrot.slane %v3540, 1
    %v3551 = vrot.slane %v3541, 1
    %v3552 = vrot.slane %v3542, 1
    %3553 = vrot.lane.b32.xlu0 %v3548, 94
    %v3554 = vpop.permute.xlu0 %3553
    %3555 = vrot.lane.b32.xlu0 %v3549, 94
    %v3556 = vpop.permute.xlu0 %3555
    %3557 = vrot.lane.b32.xlu0 %v3550, 94
    %v3558 = vpop.permute.xlu0 %3557
    %3559 = vrot.lane.b32.xlu0 %v3551, 94
    %v3560 = vpop.permute.xlu0 %3559
    %3561 = vrot.lane.b32.xlu0 %v3552, 94
    %v3562 = vpop.permute.xlu0 %3561
    %v3563 = vsel %vm1583, %v3554, %v3556
    %v3564 = vsel %vm1583, %v3556, %v3558
    %v3565 = vsel %vm1583, %v3560, %v3562
    %v3566 = vsel %vm1583, %v3562, %v3558
    %v3571 = vadd.f32 %v3337, %v3563
    %v3572 = vadd.f32 %v3338, %v3564
    %v3573 = vadd.f32 %v3339, %v3565
    %v3574 = vadd.f32 %v3340, %v3566
    %s3575 = sld [smem:[#allocation2 + $0x2c]]
    %v3576 = vstv %s3575
    %v3577 = vmul.f32 %v3576, %v44
    %v3578 = vmul.f32 %v3576, %v45
    %v3579 = vmul.f32 %v3576, 0.0
    %v3580 = vmul.f32 %v3576, %v48
    %v3581 = vmul.f32 %v3576, %v49
    %v3587 = vrot.slane %v3577, 1
    %v3588 = vrot.slane %v3578, 1
    %v3589 = vrot.slane %v3579, 1
    %v3590 = vrot.slane %v3580, 1
    %v3591 = vrot.slane %v3581, 1
    %3592 = vrot.lane.b32.xlu0 %v3587, 94
    %v3593 = vpop.permute.xlu0 %3592
    %3594 = vrot.lane.b32.xlu0 %v3588, 94
    %v3595 = vpop.permute.xlu0 %3594
    %3596 = vrot.lane.b32.xlu0 %v3589, 94
    %v3597 = vpop.permute.xlu0 %3596
    %3598 = vrot.lane.b32.xlu0 %v3590, 94
    %v3599 = vpop.permute.xlu0 %3598
    %3600 = vrot.lane.b32.xlu0 %v3591, 94
    %v3601 = vpop.permute.xlu0 %3600
    %v3602 = vsel %vm1583, %v3593, %v3595
    %v3603 = vsel %vm1583, %v3595, %v3597
    %v3604 = vsel %vm1583, %v3599, %v3601
    %v3605 = vsel %vm1583, %v3601, %v3597
    %v3610 = vadd.f32 %v3376, %v3602
    %v3611 = vadd.f32 %v3377, %v3603
    %v3612 = vadd.f32 %v3378, %v3604
    %v3613 = vadd.f32 %v3379, %v3605
    %s3614 = sld [smem:[#allocation2 + $0x47]]
    %v3615 = vstv %s3614
    %v3616 = vmul.f32 %v3615, %v44
    %v3617 = vmul.f32 %v3615, %v45
    %v3618 = vmul.f32 %v3615, 0.0
    %v3619 = vmul.f32 %v3615, %v48
    %v3620 = vmul.f32 %v3615, %v49
    %v3626 = vrot.slane %v3616, 1
    %v3627 = vrot.slane %v3617, 1
    %v3628 = vrot.slane %v3618, 1
    %v3629 = vrot.slane %v3619, 1
    %v3630 = vrot.slane %v3620, 1
    %3631 = vrot.lane.b32.xlu0 %v3626, 94
    %v3632 = vpop.permute.xlu0 %3631
    %3633 = vrot.lane.b32.xlu0 %v3627, 94
    %v3634 = vpop.permute.xlu0 %3633
    %3635 = vrot.lane.b32.xlu0 %v3628, 94
    %v3636 = vpop.permute.xlu0 %3635
    %3637 = vrot.lane.b32.xlu0 %v3629, 94
    %v3638 = vpop.permute.xlu0 %3637
    %3639 = vrot.lane.b32.xlu0 %v3630, 94
    %v3640 = vpop.permute.xlu0 %3639
    %v3641 = vsel %vm1583, %v3632, %v3634
    %v3642 = vsel %vm1583, %v3634, %v3636
    %v3643 = vsel %vm1583, %v3638, %v3640
    %v3644 = vsel %vm1583, %v3640, %v3636
    %v3649 = vadd.f32 %v3415, %v3641
    %v3650 = vadd.f32 %v3416, %v3642
    %v3651 = vadd.f32 %v3417, %v3643
    %v3652 = vadd.f32 %v3418, %v3644
    %s3653 = sld [smem:[#allocation2 + $0x62]]
    %v3654 = vstv %s3653
    %v3655 = vmul.f32 %v3654, %v44
    %v3656 = vmul.f32 %v3654, %v45
    %v3657 = vmul.f32 %v3654, 0.0
    %v3658 = vmul.f32 %v3654, %v48
    %v3659 = vmul.f32 %v3654, %v49
    %v3665 = vrot.slane %v3655, 1
    %v3666 = vrot.slane %v3656, 1
    %v3667 = vrot.slane %v3657, 1
    %v3668 = vrot.slane %v3658, 1
    %v3669 = vrot.slane %v3659, 1
    %3670 = vrot.lane.b32.xlu0 %v3665, 94
    %v3671 = vpop.permute.xlu0 %3670
    %3672 = vrot.lane.b32.xlu0 %v3666, 94
    %v3673 = vpop.permute.xlu0 %3672
    %3674 = vrot.lane.b32.xlu0 %v3667, 94
    %v3675 = vpop.permute.xlu0 %3674
    %3676 = vrot.lane.b32.xlu0 %v3668, 94
    %v3677 = vpop.permute.xlu0 %3676
    %3678 = vrot.lane.b32.xlu0 %v3669, 94
    %v3679 = vpop.permute.xlu0 %3678
    %v3680 = vsel %vm1583, %v3671, %v3673
    %v3681 = vsel %vm1583, %v3673, %v3675
    %v3682 = vsel %vm1583, %v3677, %v3679
    %v3683 = vsel %vm1583, %v3679, %v3675
    %v3688 = vadd.f32 %v3454, %v3680
    %v3689 = vadd.f32 %v3455, %v3681
    %v3690 = vadd.f32 %v3456, %v3682
    %v3691 = vadd.f32 %v3457, %v3683
    %s3692 = sld [smem:[#allocation2 + $0x7d]]
    %v3693 = vstv %s3692
    %v3694 = vmul.f32 %v3693, %v44
    %v3695 = vmul.f32 %v3693, %v45
    %v3696 = vmul.f32 %v3693, 0.0
    %v3697 = vmul.f32 %v3693, %v48
    %v3698 = vmul.f32 %v3693, %v49
    %v3704 = vrot.slane %v3694, 1
    %v3705 = vrot.slane %v3695, 1
    %v3706 = vrot.slane %v3696, 1
    %v3707 = vrot.slane %v3697, 1
    %v3708 = vrot.slane %v3698, 1
    %3709 = vrot.lane.b32.xlu0 %v3704, 94
    %v3710 = vpop.permute.xlu0 %3709
    %3711 = vrot.lane.b32.xlu0 %v3705, 94
    %v3712 = vpop.permute.xlu0 %3711
    %3713 = vrot.lane.b32.xlu0 %v3706, 94
    %v3714 = vpop.permute.xlu0 %3713
    %3715 = vrot.lane.b32.xlu0 %v3707, 94
    %v3716 = vpop.permute.xlu0 %3715
    %3717 = vrot.lane.b32.xlu0 %v3708, 94
    %v3718 = vpop.permute.xlu0 %3717
    %v3719 = vsel %vm1583, %v3710, %v3712
    %v3720 = vsel %vm1583, %v3712, %v3714
    %v3721 = vsel %vm1583, %v3716, %v3718
    %v3722 = vsel %vm1583, %v3718, %v3714
    %v3727 = vadd.f32 %v3493, %v3719
    %v3728 = vadd.f32 %v3494, %v3720
    %v3729 = vadd.f32 %v3495, %v3721
    %v3730 = vadd.f32 %v3496, %v3722
    %s3731 = sld [smem:[#allocation2 + $0x98]]
    %v3732 = vstv %s3731
    %v3733 = vmul.f32 %v3732, %v44
    %v3734 = vmul.f32 %v3732, %v45
    %v3735 = vmul.f32 %v3732, 0.0
    %v3736 = vmul.f32 %v3732, %v48
    %v3737 = vmul.f32 %v3732, %v49
    %v3743 = vrot.slane %v3733, 1
    %v3744 = vrot.slane %v3734, 1
    %v3745 = vrot.slane %v3735, 1
    %v3746 = vrot.slane %v3736, 1
    %v3747 = vrot.slane %v3737, 1
    %3748 = vrot.lane.b32.xlu0 %v3743, 94
    %v3749 = vpop.permute.xlu0 %3748
    %3750 = vrot.lane.b32.xlu0 %v3744, 94
    %v3751 = vpop.permute.xlu0 %3750
    %3752 = vrot.lane.b32.xlu0 %v3745, 94
    %v3753 = vpop.permute.xlu0 %3752
    %3754 = vrot.lane.b32.xlu0 %v3746, 94
    %v3755 = vpop.permute.xlu0 %3754
    %3756 = vrot.lane.b32.xlu0 %v3747, 94
    %v3757 = vpop.permute.xlu0 %3756
    %v3758 = vsel %vm1583, %v3749, %v3751
    %v3759 = vsel %vm1583, %v3751, %v3753
    %v3760 = vsel %vm1583, %v3755, %v3757
    %v3761 = vsel %vm1583, %v3757, %v3753
    %v3766 = vadd.f32 %v3532, %v3758
    %v3767 = vadd.f32 %v3533, %v3759
    %v3768 = vadd.f32 %v3534, %v3760
    %v3769 = vadd.f32 %v3535, %v3761
    %s3770 = sld [smem:[#allocation2 + $0x12]]
    %v3771 = vstv %s3770
    %v3772 = vmul.f32 %v3771, %v44
    %v3773 = vmul.f32 %v3771, %v45
    %v3774 = vmul.f32 %v3771, %v48
    %v3775 = vmul.f32 %v3771, %v49
    %v3780 = vrot.slane %v3772, 2
    %v3781 = vrot.slane %v3773, 2
    %v3782 = vrot.slane %v3774, 2
    %v3783 = vrot.slane %v3775, 2
    %v3788 = vadd.f32 %v3571, %v3780
    %v3789 = vadd.f32 %v3572, %v3781
    %v3790 = vadd.f32 %v3573, %v3782
    %v3791 = vadd.f32 %v3574, %v3783
    %s3792 = sld [smem:[#allocation2 + $0x2d]]
    %v3793 = vstv %s3792
    %v3794 = vmul.f32 %v3793, %v44
    %v3795 = vmul.f32 %v3793, %v45
    %v3796 = vmul.f32 %v3793, %v48
    %v3797 = vmul.f32 %v3793, %v49
    %v3802 = vrot.slane %v3794, 2
    %v3803 = vrot.slane %v3795, 2
    %v3804 = vrot.slane %v3796, 2
    %v3805 = vrot.slane %v3797, 2
    %v3810 = vadd.f32 %v3610, %v3802
    %v3811 = vadd.f32 %v3611, %v3803
    %v3812 = vadd.f32 %v3612, %v3804
    %v3813 = vadd.f32 %v3613, %v3805
    %s3814 = sld [smem:[#allocation2 + $0x48]]
    %v3815 = vstv %s3814
    %v3816 = vmul.f32 %v3815, %v44
    %v3817 = vmul.f32 %v3815, %v45
    %v3818 = vmul.f32 %v3815, %v48
    %v3819 = vmul.f32 %v3815, %v49
    %v3824 = vrot.slane %v3816, 2
    %v3825 = vrot.slane %v3817, 2
    %v3826 = vrot.slane %v3818, 2
    %v3827 = vrot.slane %v3819, 2
    %v3832 = vadd.f32 %v3649, %v3824
    %v3833 = vadd.f32 %v3650, %v3825
    %v3834 = vadd.f32 %v3651, %v3826
    %v3835 = vadd.f32 %v3652, %v3827
    %s3836 = sld [smem:[#allocation2 + $0x63]]
    %v3837 = vstv %s3836
    %v3838 = vmul.f32 %v3837, %v44
    %v3839 = vmul.f32 %v3837, %v45
    %v3840 = vmul.f32 %v3837, %v48
    %v3841 = vmul.f32 %v3837, %v49
    %v3846 = vrot.slane %v3838, 2
    %v3847 = vrot.slane %v3839, 2
    %v3848 = vrot.slane %v3840, 2
    %v3849 = vrot.slane %v3841, 2
    %v3854 = vadd.f32 %v3688, %v3846
    %v3855 = vadd.f32 %v3689, %v3847
    %v3856 = vadd.f32 %v3690, %v3848
    %v3857 = vadd.f32 %v3691, %v3849
    %s3858 = sld [smem:[#allocation2 + $0x7e]]
    %v3859 = vstv %s3858
    %v3860 = vmul.f32 %v3859, %v44
    %v3861 = vmul.f32 %v3859, %v45
    %v3862 = vmul.f32 %v3859, %v48
    %v3863 = vmul.f32 %v3859, %v49
    %v3868 = vrot.slane %v3860, 2
    %v3869 = vrot.slane %v3861, 2
    %v3870 = vrot.slane %v3862, 2
    %v3871 = vrot.slane %v3863, 2
    %v3876 = vadd.f32 %v3727, %v3868
    %v3877 = vadd.f32 %v3728, %v3869
    %v3878 = vadd.f32 %v3729, %v3870
    %v3879 = vadd.f32 %v3730, %v3871
    %s3880 = sld [smem:[#allocation2 + $0x99]]
    %v3881 = vstv %s3880
    %v3882 = vmul.f32 %v3881, %v44
    %v3883 = vmul.f32 %v3881, %v45
    %v3884 = vmul.f32 %v3881, %v48
    %v3885 = vmul.f32 %v3881, %v49
    %v3890 = vrot.slane %v3882, 2
    %v3891 = vrot.slane %v3883, 2
    %v3892 = vrot.slane %v3884, 2
    %v3893 = vrot.slane %v3885, 2
    %v3898 = vadd.f32 %v3766, %v3890
    %v3899 = vadd.f32 %v3767, %v3891
    %v3900 = vadd.f32 %v3768, %v3892
    %v3901 = vadd.f32 %v3769, %v3893
    %s3902 = sld [smem:[#allocation2 + $0x13]]
    %v3903 = vstv %s3902
    %v3904 = vmul.f32 %v3903, %v44
    %v3905 = vmul.f32 %v3903, %v45
    %v3906 = vmul.f32 %v3903, 0.0
    %v3907 = vmul.f32 %v3903, %v48
    %v3908 = vmul.f32 %v3903, %v49
    %v3914 = vrot.slane %v3904, 2
    %v3915 = vrot.slane %v3905, 2
    %v3916 = vrot.slane %v3906, 2
    %v3917 = vrot.slane %v3907, 2
    %v3918 = vrot.slane %v3908, 2
    %3919 = vrot.lane.b32.xlu0 %v3914, 127
    %v3920 = vpop.permute.xlu0 %3919
    %3921 = vrot.lane.b32.xlu0 %v3915, 127
    %v3922 = vpop.permute.xlu0 %3921
    %3923 = vrot.lane.b32.xlu0 %v3916, 127
    %v3924 = vpop.permute.xlu0 %3923
    %3925 = vrot.lane.b32.xlu0 %v3917, 127
    %v3926 = vpop.permute.xlu0 %3925
    %3927 = vrot.lane.b32.xlu0 %v3918, 127
    %v3928 = vpop.permute.xlu0 %3927
    %v3929 = vsel %vm148, %v3920, %v3922
    %v3930 = vsel %vm148, %v3922, %v3924
    %v3931 = vsel %vm148, %v3926, %v3928
    %v3932 = vsel %vm148, %v3928, %v3924
    %v3937 = vadd.f32 %v3788, %v3929
    %v3938 = vadd.f32 %v3789, %v3930
    %v3939 = vadd.f32 %v3790, %v3931
    %v3940 = vadd.f32 %v3791, %v3932
    %s3941 = sld [smem:[#allocation2 + $0x2e]]
    %v3942 = vstv %s3941
    %v3943 = vmul.f32 %v3942, %v44
    %v3944 = vmul.f32 %v3942, %v45
    %v3945 = vmul.f32 %v3942, 0.0
    %v3946 = vmul.f32 %v3942, %v48
    %v3947 = vmul.f32 %v3942, %v49
    %v3953 = vrot.slane %v3943, 2
    %v3954 = vrot.slane %v3944, 2
    %v3955 = vrot.slane %v3945, 2
    %v3956 = vrot.slane %v3946, 2
    %v3957 = vrot.slane %v3947, 2
    %3958 = vrot.lane.b32.xlu0 %v3953, 127
    %v3959 = vpop.permute.xlu0 %3958
    %3960 = vrot.lane.b32.xlu0 %v3954, 127
    %v3961 = vpop.permute.xlu0 %3960
    %3962 = vrot.lane.b32.xlu0 %v3955, 127
    %v3963 = vpop.permute.xlu0 %3962
    %3964 = vrot.lane.b32.xlu0 %v3956, 127
    %v3965 = vpop.permute.xlu0 %3964
    %3966 = vrot.lane.b32.xlu0 %v3957, 127
    %v3967 = vpop.permute.xlu0 %3966
    %v3968 = vsel %vm148, %v3959, %v3961
    %v3969 = vsel %vm148, %v3961, %v3963
    %v3970 = vsel %vm148, %v3965, %v3967
    %v3971 = vsel %vm148, %v3967, %v3963
    %v3976 = vadd.f32 %v3810, %v3968
    %v3977 = vadd.f32 %v3811, %v3969
    %v3978 = vadd.f32 %v3812, %v3970
    %v3979 = vadd.f32 %v3813, %v3971
    %s3980 = sld [smem:[#allocation2 + $0x49]]
    %v3981 = vstv %s3980
    %v3982 = vmul.f32 %v3981, %v44
    %v3983 = vmul.f32 %v3981, %v45
    %v3984 = vmul.f32 %v3981, 0.0
    %v3985 = vmul.f32 %v3981, %v48
    %v3986 = vmul.f32 %v3981, %v49
    %v3992 = vrot.slane %v3982, 2
    %v3993 = vrot.slane %v3983, 2
    %v3994 = vrot.slane %v3984, 2
    %v3995 = vrot.slane %v3985, 2
    %v3996 = vrot.slane %v3986, 2
    %3997 = vrot.lane.b32.xlu0 %v3992, 127
    %v3998 = vpop.permute.xlu0 %3997
    %3999 = vrot.lane.b32.xlu0 %v3993, 127
    %v4000 = vpop.permute.xlu0 %3999
    %4001 = vrot.lane.b32.xlu0 %v3994, 127
    %v4002 = vpop.permute.xlu0 %4001
    %4003 = vrot.lane.b32.xlu0 %v3995, 127
    %v4004 = vpop.permute.xlu0 %4003
    %4005 = vrot.lane.b32.xlu0 %v3996, 127
    %v4006 = vpop.permute.xlu0 %4005
    %v4007 = vsel %vm148, %v3998, %v4000
    %v4008 = vsel %vm148, %v4000, %v4002
    %v4009 = vsel %vm148, %v4004, %v4006
    %v4010 = vsel %vm148, %v4006, %v4002
    %v4015 = vadd.f32 %v3832, %v4007
    %v4016 = vadd.f32 %v3833, %v4008
    %v4017 = vadd.f32 %v3834, %v4009
    %v4018 = vadd.f32 %v3835, %v4010
    %s4019 = sld [smem:[#allocation2 + $0x64]]
    %v4020 = vstv %s4019
    %v4021 = vmul.f32 %v4020, %v44
    %v4022 = vmul.f32 %v4020, %v45
    %v4023 = vmul.f32 %v4020, 0.0
    %v4024 = vmul.f32 %v4020, %v48
    %v4025 = vmul.f32 %v4020, %v49
    %v4031 = vrot.slane %v4021, 2
    %v4032 = vrot.slane %v4022, 2
    %v4033 = vrot.slane %v4023, 2
    %v4034 = vrot.slane %v4024, 2
    %v4035 = vrot.slane %v4025, 2
    %4036 = vrot.lane.b32.xlu0 %v4031, 127
    %v4037 = vpop.permute.xlu0 %4036
    %4038 = vrot.lane.b32.xlu0 %v4032, 127
    %v4039 = vpop.permute.xlu0 %4038
    %4040 = vrot.lane.b32.xlu0 %v4033, 127
    %v4041 = vpop.permute.xlu0 %4040
    %4042 = vrot.lane.b32.xlu0 %v4034, 127
    %v4043 = vpop.permute.xlu0 %4042
    %4044 = vrot.lane.b32.xlu0 %v4035, 127
    %v4045 = vpop.permute.xlu0 %4044
    %v4046 = vsel %vm148, %v4037, %v4039
    %v4047 = vsel %vm148, %v4039, %v4041
    %v4048 = vsel %vm148, %v4043, %v4045
    %v4049 = vsel %vm148, %v4045, %v4041
    %v4054 = vadd.f32 %v3854, %v4046
    %v4055 = vadd.f32 %v3855, %v4047
    %v4056 = vadd.f32 %v3856, %v4048
    %v4057 = vadd.f32 %v3857, %v4049
    %s4058 = sld [smem:[#allocation2 + $0x7f]]
    %v4059 = vstv %s4058
    %v4060 = vmul.f32 %v4059, %v44
    %v4061 = vmul.f32 %v4059, %v45
    %v4062 = vmul.f32 %v4059, 0.0
    %v4063 = vmul.f32 %v4059, %v48
    %v4064 = vmul.f32 %v4059, %v49
    %v4070 = vrot.slane %v4060, 2
    %v4071 = vrot.slane %v4061, 2
    %v4072 = vrot.slane %v4062, 2
    %v4073 = vrot.slane %v4063, 2
    %v4074 = vrot.slane %v4064, 2
    %4075 = vrot.lane.b32.xlu0 %v4070, 127
    %v4076 = vpop.permute.xlu0 %4075
    %4077 = vrot.lane.b32.xlu0 %v4071, 127
    %v4078 = vpop.permute.xlu0 %4077
    %4079 = vrot.lane.b32.xlu0 %v4072, 127
    %v4080 = vpop.permute.xlu0 %4079
    %4081 = vrot.lane.b32.xlu0 %v4073, 127
    %v4082 = vpop.permute.xlu0 %4081
    %4083 = vrot.lane.b32.xlu0 %v4074, 127
    %v4084 = vpop.permute.xlu0 %4083
    %v4085 = vsel %vm148, %v4076, %v4078
    %v4086 = vsel %vm148, %v4078, %v4080
    %v4087 = vsel %vm148, %v4082, %v4084
    %v4088 = vsel %vm148, %v4084, %v4080
    %v4093 = vadd.f32 %v3876, %v4085
    %v4094 = vadd.f32 %v3877, %v4086
    %v4095 = vadd.f32 %v3878, %v4087
    %v4096 = vadd.f32 %v3879, %v4088
    %s4097 = sld [smem:[#allocation2 + $0x9a]]
    %v4098 = vstv %s4097
    %v4099 = vmul.f32 %v4098, %v44
    %v4100 = vmul.f32 %v4098, %v45
    %v4101 = vmul.f32 %v4098, 0.0
    %v4102 = vmul.f32 %v4098, %v48
    %v4103 = vmul.f32 %v4098, %v49
    %v4109 = vrot.slane %v4099, 2
    %v4110 = vrot.slane %v4100, 2
    %v4111 = vrot.slane %v4101, 2
    %v4112 = vrot.slane %v4102, 2
    %v4113 = vrot.slane %v4103, 2
    %4114 = vrot.lane.b32.xlu0 %v4109, 127
    %v4115 = vpop.permute.xlu0 %4114
    %4116 = vrot.lane.b32.xlu0 %v4110, 127
    %v4117 = vpop.permute.xlu0 %4116
    %4118 = vrot.lane.b32.xlu0 %v4111, 127
    %v4119 = vpop.permute.xlu0 %4118
    %4120 = vrot.lane.b32.xlu0 %v4112, 127
    %v4121 = vpop.permute.xlu0 %4120
    %4122 = vrot.lane.b32.xlu0 %v4113, 127
    %v4123 = vpop.permute.xlu0 %4122
    %v4124 = vsel %vm148, %v4115, %v4117
    %v4125 = vsel %vm148, %v4117, %v4119
    %v4126 = vsel %vm148, %v4121, %v4123
    %v4127 = vsel %vm148, %v4123, %v4119
    %v4132 = vadd.f32 %v3898, %v4124
    %v4133 = vadd.f32 %v3899, %v4125
    %v4134 = vadd.f32 %v3900, %v4126
    %v4135 = vadd.f32 %v3901, %v4127
    %s4136 = sld [smem:[#allocation2 + $0x14]]
    %v4137 = vstv %s4136
    %v4138 = vmul.f32 %v4137, %v44
    %v4139 = vmul.f32 %v4137, %v45
    %v4140 = vmul.f32 %v4137, 0.0
    %v4141 = vmul.f32 %v4137, %v48
    %v4142 = vmul.f32 %v4137, %v49
    %v4148 = vrot.slane %v4138, 2
    %v4149 = vrot.slane %v4139, 2
    %v4150 = vrot.slane %v4140, 2
    %v4151 = vrot.slane %v4141, 2
    %v4152 = vrot.slane %v4142, 2
    %4153 = vrot.lane.b32.xlu0 %v4148, 126
    %v4154 = vpop.permute.xlu0 %4153
    %4155 = vrot.lane.b32.xlu0 %v4149, 126
    %v4156 = vpop.permute.xlu0 %4155
    %4157 = vrot.lane.b32.xlu0 %v4150, 126
    %v4158 = vpop.permute.xlu0 %4157
    %4159 = vrot.lane.b32.xlu0 %v4151, 126
    %v4160 = vpop.permute.xlu0 %4159
    %4161 = vrot.lane.b32.xlu0 %v4152, 126
    %v4162 = vpop.permute.xlu0 %4161
    %v4163 = vsel %vm353, %v4154, %v4156
    %v4164 = vsel %vm353, %v4156, %v4158
    %v4165 = vsel %vm353, %v4160, %v4162
    %v4166 = vsel %vm353, %v4162, %v4158
    %v4171 = vadd.f32 %v3937, %v4163
    %v4172 = vadd.f32 %v3938, %v4164
    %v4173 = vadd.f32 %v3939, %v4165
    %v4174 = vadd.f32 %v3940, %v4166
    %s4175 = sld [smem:[#allocation2 + $0x2f]]
    %v4176 = vstv %s4175
    %v4177 = vmul.f32 %v4176, %v44
    %v4178 = vmul.f32 %v4176, %v45
    %v4179 = vmul.f32 %v4176, 0.0
    %v4180 = vmul.f32 %v4176, %v48
    %v4181 = vmul.f32 %v4176, %v49
    %v4187 = vrot.slane %v4177, 2
    %v4188 = vrot.slane %v4178, 2
    %v4189 = vrot.slane %v4179, 2
    %v4190 = vrot.slane %v4180, 2
    %v4191 = vrot.slane %v4181, 2
    %4192 = vrot.lane.b32.xlu0 %v4187, 126
    %v4193 = vpop.permute.xlu0 %4192
    %4194 = vrot.lane.b32.xlu0 %v4188, 126
    %v4195 = vpop.permute.xlu0 %4194
    %4196 = vrot.lane.b32.xlu0 %v4189, 126
    %v4197 = vpop.permute.xlu0 %4196
    %4198 = vrot.lane.b32.xlu0 %v4190, 126
    %v4199 = vpop.permute.xlu0 %4198
    %4200 = vrot.lane.b32.xlu0 %v4191, 126
    %v4201 = vpop.permute.xlu0 %4200
    %v4202 = vsel %vm353, %v4193, %v4195
    %v4203 = vsel %vm353, %v4195, %v4197
    %v4204 = vsel %vm353, %v4199, %v4201
    %v4205 = vsel %vm353, %v4201, %v4197
    %v4210 = vadd.f32 %v3976, %v4202
    %v4211 = vadd.f32 %v3977, %v4203
    %v4212 = vadd.f32 %v3978, %v4204
    %v4213 = vadd.f32 %v3979, %v4205
    %s4214 = sld [smem:[#allocation2 + $0x4a]]
    %v4215 = vstv %s4214
    %v4216 = vmul.f32 %v4215, %v44
    %v4217 = vmul.f32 %v4215, %v45
    %v4218 = vmul.f32 %v4215, 0.0
    %v4219 = vmul.f32 %v4215, %v48
    %v4220 = vmul.f32 %v4215, %v49
    %v4226 = vrot.slane %v4216, 2
    %v4227 = vrot.slane %v4217, 2
    %v4228 = vrot.slane %v4218, 2
    %v4229 = vrot.slane %v4219, 2
    %v4230 = vrot.slane %v4220, 2
    %4231 = vrot.lane.b32.xlu0 %v4226, 126
    %v4232 = vpop.permute.xlu0 %4231
    %4233 = vrot.lane.b32.xlu0 %v4227, 126
    %v4234 = vpop.permute.xlu0 %4233
    %4235 = vrot.lane.b32.xlu0 %v4228, 126
    %v4236 = vpop.permute.xlu0 %4235
    %4237 = vrot.lane.b32.xlu0 %v4229, 126
    %v4238 = vpop.permute.xlu0 %4237
    %4239 = vrot.lane.b32.xlu0 %v4230, 126
    %v4240 = vpop.permute.xlu0 %4239
    %v4241 = vsel %vm353, %v4232, %v4234
    %v4242 = vsel %vm353, %v4234, %v4236
    %v4243 = vsel %vm353, %v4238, %v4240
    %v4244 = vsel %vm353, %v4240, %v4236
    %v4249 = vadd.f32 %v4015, %v4241
    %v4250 = vadd.f32 %v4016, %v4242
    %v4251 = vadd.f32 %v4017, %v4243
    %v4252 = vadd.f32 %v4018, %v4244
    %s4253 = sld [smem:[#allocation2 + $0x65]]
    %v4254 = vstv %s4253
    %v4255 = vmul.f32 %v4254, %v44
    %v4256 = vmul.f32 %v4254, %v45
    %v4257 = vmul.f32 %v4254, 0.0
    %v4258 = vmul.f32 %v4254, %v48
    %v4259 = vmul.f32 %v4254, %v49
    %v4265 = vrot.slane %v4255, 2
    %v4266 = vrot.slane %v4256, 2
    %v4267 = vrot.slane %v4257, 2
    %v4268 = vrot.slane %v4258, 2
    %v4269 = vrot.slane %v4259, 2
    %4270 = vrot.lane.b32.xlu0 %v4265, 126
    %v4271 = vpop.permute.xlu0 %4270
    %4272 = vrot.lane.b32.xlu0 %v4266, 126
    %v4273 = vpop.permute.xlu0 %4272
    %4274 = vrot.lane.b32.xlu0 %v4267, 126
    %v4275 = vpop.permute.xlu0 %4274
    %4276 = vrot.lane.b32.xlu0 %v4268, 126
    %v4277 = vpop.permute.xlu0 %4276
    %4278 = vrot.lane.b32.xlu0 %v4269, 126
    %v4279 = vpop.permute.xlu0 %4278
    %v4280 = vsel %vm353, %v4271, %v4273
    %v4281 = vsel %vm353, %v4273, %v4275
    %v4282 = vsel %vm353, %v4277, %v4279
    %v4283 = vsel %vm353, %v4279, %v4275
    %v4288 = vadd.f32 %v4054, %v4280
    %v4289 = vadd.f32 %v4055, %v4281
    %v4290 = vadd.f32 %v4056, %v4282
    %v4291 = vadd.f32 %v4057, %v4283
    %s4292 = sld [smem:[#allocation2 + $0x80]]
    %v4293 = vstv %s4292
    %v4294 = vmul.f32 %v4293, %v44
    %v4295 = vmul.f32 %v4293, %v45
    %v4296 = vmul.f32 %v4293, 0.0
    %v4297 = vmul.f32 %v4293, %v48
    %v4298 = vmul.f32 %v4293, %v49
    %v4304 = vrot.slane %v4294, 2
    %v4305 = vrot.slane %v4295, 2
    %v4306 = vrot.slane %v4296, 2
    %v4307 = vrot.slane %v4297, 2
    %v4308 = vrot.slane %v4298, 2
    %4309 = vrot.lane.b32.xlu0 %v4304, 126
    %v4310 = vpop.permute.xlu0 %4309
    %4311 = vrot.lane.b32.xlu0 %v4305, 126
    %v4312 = vpop.permute.xlu0 %4311
    %4313 = vrot.lane.b32.xlu0 %v4306, 126
    %v4314 = vpop.permute.xlu0 %4313
    %4315 = vrot.lane.b32.xlu0 %v4307, 126
    %v4316 = vpop.permute.xlu0 %4315
    %4317 = vrot.lane.b32.xlu0 %v4308, 126
    %v4318 = vpop.permute.xlu0 %4317
    %v4319 = vsel %vm353, %v4310, %v4312
    %v4320 = vsel %vm353, %v4312, %v4314
    %v4321 = vsel %vm353, %v4316, %v4318
    %v4322 = vsel %vm353, %v4318, %v4314
    %v4327 = vadd.f32 %v4093, %v4319
    %v4328 = vadd.f32 %v4094, %v4320
    %v4329 = vadd.f32 %v4095, %v4321
    %v4330 = vadd.f32 %v4096, %v4322
    %s4331 = sld [smem:[#allocation2 + $0x9b]]
    %v4332 = vstv %s4331
    %v4333 = vmul.f32 %v4332, %v44
    %v4334 = vmul.f32 %v4332, %v45
    %v4335 = vmul.f32 %v4332, 0.0
    %v4336 = vmul.f32 %v4332, %v48
    %v4337 = vmul.f32 %v4332, %v49
    %v4343 = vrot.slane %v4333, 2
    %v4344 = vrot.slane %v4334, 2
    %v4345 = vrot.slane %v4335, 2
    %v4346 = vrot.slane %v4336, 2
    %v4347 = vrot.slane %v4337, 2
    %4348 = vrot.lane.b32.xlu0 %v4343, 126
    %v4349 = vpop.permute.xlu0 %4348
    %4350 = vrot.lane.b32.xlu0 %v4344, 126
    %v4351 = vpop.permute.xlu0 %4350
    %4352 = vrot.lane.b32.xlu0 %v4345, 126
    %v4353 = vpop.permute.xlu0 %4352
    %4354 = vrot.lane.b32.xlu0 %v4346, 126
    %v4355 = vpop.permute.xlu0 %4354
    %4356 = vrot.lane.b32.xlu0 %v4347, 126
    %v4357 = vpop.permute.xlu0 %4356
    %v4358 = vsel %vm353, %v4349, %v4351
    %v4359 = vsel %vm353, %v4351, %v4353
    %v4360 = vsel %vm353, %v4355, %v4357
    %v4361 = vsel %vm353, %v4357, %v4353
    %v4366 = vadd.f32 %v4132, %v4358
    %v4367 = vadd.f32 %v4133, %v4359
    %v4368 = vadd.f32 %v4134, %v4360
    %v4369 = vadd.f32 %v4135, %v4361
    %s4370 = sld [smem:[#allocation2 + $0x15]]
    %v4371 = vstv %s4370
    %v4372 = vmul.f32 %v4371, %v44
    %v4373 = vmul.f32 %v4371, %v45
    %v4374 = vmul.f32 %v4371, 0.0
    %v4375 = vmul.f32 %v4371, %v48
    %v4376 = vmul.f32 %v4371, %v49
    %v4382 = vrot.slane %v4372, 2
    %v4383 = vrot.slane %v4373, 2
    %v4384 = vrot.slane %v4374, 2
    %v4385 = vrot.slane %v4375, 2
    %v4386 = vrot.slane %v4376, 2
    %4387 = vrot.lane.b32.xlu0 %v4382, 112
    %v4388 = vpop.permute.xlu0 %4387
    %4389 = vrot.lane.b32.xlu0 %v4383, 112
    %v4390 = vpop.permute.xlu0 %4389
    %4391 = vrot.lane.b32.xlu0 %v4384, 112
    %v4392 = vpop.permute.xlu0 %4391
    %4393 = vrot.lane.b32.xlu0 %v4385, 112
    %v4394 = vpop.permute.xlu0 %4393
    %4395 = vrot.lane.b32.xlu0 %v4386, 112
    %v4396 = vpop.permute.xlu0 %4395
    %v4397 = vsel %vm558, %v4388, %v4390
    %v4398 = vsel %vm558, %v4390, %v4392
    %v4399 = vsel %vm558, %v4394, %v4396
    %v4400 = vsel %vm558, %v4396, %v4392
    %v4405 = vadd.f32 %v4171, %v4397
    %v4406 = vadd.f32 %v4172, %v4398
    %v4407 = vadd.f32 %v4173, %v4399
    %v4408 = vadd.f32 %v4174, %v4400
    %s4409 = sld [smem:[#allocation2 + $0x30]]
    %v4410 = vstv %s4409
    %v4411 = vmul.f32 %v4410, %v44
    %v4412 = vmul.f32 %v4410, %v45
    %v4413 = vmul.f32 %v4410, 0.0
    %v4414 = vmul.f32 %v4410, %v48
    %v4415 = vmul.f32 %v4410, %v49
    %v4421 = vrot.slane %v4411, 2
    %v4422 = vrot.slane %v4412, 2
    %v4423 = vrot.slane %v4413, 2
    %v4424 = vrot.slane %v4414, 2
    %v4425 = vrot.slane %v4415, 2
    %4426 = vrot.lane.b32.xlu0 %v4421, 112
    %v4427 = vpop.permute.xlu0 %4426
    %4428 = vrot.lane.b32.xlu0 %v4422, 112
    %v4429 = vpop.permute.xlu0 %4428
    %4430 = vrot.lane.b32.xlu0 %v4423, 112
    %v4431 = vpop.permute.xlu0 %4430
    %4432 = vrot.lane.b32.xlu0 %v4424, 112
    %v4433 = vpop.permute.xlu0 %4432
    %4434 = vrot.lane.b32.xlu0 %v4425, 112
    %v4435 = vpop.permute.xlu0 %4434
    %v4436 = vsel %vm558, %v4427, %v4429
    %v4437 = vsel %vm558, %v4429, %v4431
    %v4438 = vsel %vm558, %v4433, %v4435
    %v4439 = vsel %vm558, %v4435, %v4431
    %v4444 = vadd.f32 %v4210, %v4436
    %v4445 = vadd.f32 %v4211, %v4437
    %v4446 = vadd.f32 %v4212, %v4438
    %v4447 = vadd.f32 %v4213, %v4439
    %s4448 = sld [smem:[#allocation2 + $0x4b]]
    %v4449 = vstv %s4448
    %v4450 = vmul.f32 %v4449, %v44
    %v4451 = vmul.f32 %v4449, %v45
    %v4452 = vmul.f32 %v4449, 0.0
    %v4453 = vmul.f32 %v4449, %v48
    %v4454 = vmul.f32 %v4449, %v49
    %v4460 = vrot.slane %v4450, 2
    %v4461 = vrot.slane %v4451, 2
    %v4462 = vrot.slane %v4452, 2
    %v4463 = vrot.slane %v4453, 2
    %v4464 = vrot.slane %v4454, 2
    %4465 = vrot.lane.b32.xlu0 %v4460, 112
    %v4466 = vpop.permute.xlu0 %4465
    %4467 = vrot.lane.b32.xlu0 %v4461, 112
    %v4468 = vpop.permute.xlu0 %4467
    %4469 = vrot.lane.b32.xlu0 %v4462, 112
    %v4470 = vpop.permute.xlu0 %4469
    %4471 = vrot.lane.b32.xlu0 %v4463, 112
    %v4472 = vpop.permute.xlu0 %4471
    %4473 = vrot.lane.b32.xlu0 %v4464, 112
    %v4474 = vpop.permute.xlu0 %4473
    %v4475 = vsel %vm558, %v4466, %v4468
    %v4476 = vsel %vm558, %v4468, %v4470
    %v4477 = vsel %vm558, %v4472, %v4474
    %v4478 = vsel %vm558, %v4474, %v4470
    %v4483 = vadd.f32 %v4249, %v4475
    %v4484 = vadd.f32 %v4250, %v4476
    %v4485 = vadd.f32 %v4251, %v4477
    %v4486 = vadd.f32 %v4252, %v4478
    %s4487 = sld [smem:[#allocation2 + $0x66]]
    %v4488 = vstv %s4487
    %v4489 = vmul.f32 %v4488, %v44
    %v4490 = vmul.f32 %v4488, %v45
    %v4491 = vmul.f32 %v4488, 0.0
    %v4492 = vmul.f32 %v4488, %v48
    %v4493 = vmul.f32 %v4488, %v49
    %v4499 = vrot.slane %v4489, 2
    %v4500 = vrot.slane %v4490, 2
    %v4501 = vrot.slane %v4491, 2
    %v4502 = vrot.slane %v4492, 2
    %v4503 = vrot.slane %v4493, 2
    %4504 = vrot.lane.b32.xlu0 %v4499, 112
    %v4505 = vpop.permute.xlu0 %4504
    %4506 = vrot.lane.b32.xlu0 %v4500, 112
    %v4507 = vpop.permute.xlu0 %4506
    %4508 = vrot.lane.b32.xlu0 %v4501, 112
    %v4509 = vpop.permute.xlu0 %4508
    %4510 = vrot.lane.b32.xlu0 %v4502, 112
    %v4511 = vpop.permute.xlu0 %4510
    %4512 = vrot.lane.b32.xlu0 %v4503, 112
    %v4513 = vpop.permute.xlu0 %4512
    %v4514 = vsel %vm558, %v4505, %v4507
    %v4515 = vsel %vm558, %v4507, %v4509
    %v4516 = vsel %vm558, %v4511, %v4513
    %v4517 = vsel %vm558, %v4513, %v4509
    %v4522 = vadd.f32 %v4288, %v4514
    %v4523 = vadd.f32 %v4289, %v4515
    %v4524 = vadd.f32 %v4290, %v4516
    %v4525 = vadd.f32 %v4291, %v4517
    %s4526 = sld [smem:[#allocation2 + $0x81]]
    %v4527 = vstv %s4526
    %v4528 = vmul.f32 %v4527, %v44
    %v4529 = vmul.f32 %v4527, %v45
    %v4530 = vmul.f32 %v4527, 0.0
    %v4531 = vmul.f32 %v4527, %v48
    %v4532 = vmul.f32 %v4527, %v49
    %v4538 = vrot.slane %v4528, 2
    %v4539 = vrot.slane %v4529, 2
    %v4540 = vrot.slane %v4530, 2
    %v4541 = vrot.slane %v4531, 2
    %v4542 = vrot.slane %v4532, 2
    %4543 = vrot.lane.b32.xlu0 %v4538, 112
    %v4544 = vpop.permute.xlu0 %4543
    %4545 = vrot.lane.b32.xlu0 %v4539, 112
    %v4546 = vpop.permute.xlu0 %4545
    %4547 = vrot.lane.b32.xlu0 %v4540, 112
    %v4548 = vpop.permute.xlu0 %4547
    %4549 = vrot.lane.b32.xlu0 %v4541, 112
    %v4550 = vpop.permute.xlu0 %4549
    %4551 = vrot.lane.b32.xlu0 %v4542, 112
    %v4552 = vpop.permute.xlu0 %4551
    %v4553 = vsel %vm558, %v4544, %v4546
    %v4554 = vsel %vm558, %v4546, %v4548
    %v4555 = vsel %vm558, %v4550, %v4552
    %v4556 = vsel %vm558, %v4552, %v4548
    %v4561 = vadd.f32 %v4327, %v4553
    %v4562 = vadd.f32 %v4328, %v4554
    %v4563 = vadd.f32 %v4329, %v4555
    %v4564 = vadd.f32 %v4330, %v4556
    %s4565 = sld [smem:[#allocation2 + $0x9c]]
    %v4566 = vstv %s4565
    %v4567 = vmul.f32 %v4566, %v44
    %v4568 = vmul.f32 %v4566, %v45
    %v4569 = vmul.f32 %v4566, 0.0
    %v4570 = vmul.f32 %v4566, %v48
    %v4571 = vmul.f32 %v4566, %v49
    %v4577 = vrot.slane %v4567, 2
    %v4578 = vrot.slane %v4568, 2
    %v4579 = vrot.slane %v4569, 2
    %v4580 = vrot.slane %v4570, 2
    %v4581 = vrot.slane %v4571, 2
    %4582 = vrot.lane.b32.xlu0 %v4577, 112
    %v4583 = vpop.permute.xlu0 %4582
    %4584 = vrot.lane.b32.xlu0 %v4578, 112
    %v4585 = vpop.permute.xlu0 %4584
    %4586 = vrot.lane.b32.xlu0 %v4579, 112
    %v4587 = vpop.permute.xlu0 %4586
    %4588 = vrot.lane.b32.xlu0 %v4580, 112
    %v4589 = vpop.permute.xlu0 %4588
    %4590 = vrot.lane.b32.xlu0 %v4581, 112
    %v4591 = vpop.permute.xlu0 %4590
    %v4592 = vsel %vm558, %v4583, %v4585
    %v4593 = vsel %vm558, %v4585, %v4587
    %v4594 = vsel %vm558, %v4589, %v4591
    %v4595 = vsel %vm558, %v4591, %v4587
    %v4600 = vadd.f32 %v4366, %v4592
    %v4601 = vadd.f32 %v4367, %v4593
    %v4602 = vadd.f32 %v4368, %v4594
    %v4603 = vadd.f32 %v4369, %v4595
    %s4604 = sld [smem:[#allocation2 + $0x16]]
    %v4605 = vstv %s4604
    %v4606 = vmul.f32 %v4605, %v44
    %v4607 = vmul.f32 %v4605, %v45
    %v4608 = vmul.f32 %v4605, 0.0
    %v4609 = vmul.f32 %v4605, %v48
    %v4610 = vmul.f32 %v4605, %v49
    %v4616 = vrot.slane %v4606, 2
    %v4617 = vrot.slane %v4607, 2
    %v4618 = vrot.slane %v4608, 2
    %v4619 = vrot.slane %v4609, 2
    %v4620 = vrot.slane %v4610, 2
    %4621 = vrot.lane.b32.xlu0 %v4616, 111
    %v4622 = vpop.permute.xlu0 %4621
    %4623 = vrot.lane.b32.xlu0 %v4617, 111
    %v4624 = vpop.permute.xlu0 %4623
    %4625 = vrot.lane.b32.xlu0 %v4618, 111
    %v4626 = vpop.permute.xlu0 %4625
    %4627 = vrot.lane.b32.xlu0 %v4619, 111
    %v4628 = vpop.permute.xlu0 %4627
    %4629 = vrot.lane.b32.xlu0 %v4620, 111
    %v4630 = vpop.permute.xlu0 %4629
    %v4631 = vsel %vm763, %v4622, %v4624
    %v4632 = vsel %vm763, %v4624, %v4626
    %v4633 = vsel %vm763, %v4628, %v4630
    %v4634 = vsel %vm763, %v4630, %v4626
    %v4639 = vadd.f32 %v4405, %v4631
    %v4640 = vadd.f32 %v4406, %v4632
    %v4641 = vadd.f32 %v4407, %v4633
    %v4642 = vadd.f32 %v4408, %v4634
    %s4643 = sld [smem:[#allocation2 + $0x31]]
    %v4644 = vstv %s4643
    %v4645 = vmul.f32 %v4644, %v44
    %v4646 = vmul.f32 %v4644, %v45
    %v4647 = vmul.f32 %v4644, 0.0
    %v4648 = vmul.f32 %v4644, %v48
    %v4649 = vmul.f32 %v4644, %v49
    %v4655 = vrot.slane %v4645, 2
    %v4656 = vrot.slane %v4646, 2
    %v4657 = vrot.slane %v4647, 2
    %v4658 = vrot.slane %v4648, 2
    %v4659 = vrot.slane %v4649, 2
    %4660 = vrot.lane.b32.xlu0 %v4655, 111
    %v4661 = vpop.permute.xlu0 %4660
    %4662 = vrot.lane.b32.xlu0 %v4656, 111
    %v4663 = vpop.permute.xlu0 %4662
    %4664 = vrot.lane.b32.xlu0 %v4657, 111
    %v4665 = vpop.permute.xlu0 %4664
    %4666 = vrot.lane.b32.xlu0 %v4658, 111
    %v4667 = vpop.permute.xlu0 %4666
    %4668 = vrot.lane.b32.xlu0 %v4659, 111
    %v4669 = vpop.permute.xlu0 %4668
    %v4670 = vsel %vm763, %v4661, %v4663
    %v4671 = vsel %vm763, %v4663, %v4665
    %v4672 = vsel %vm763, %v4667, %v4669
    %v4673 = vsel %vm763, %v4669, %v4665
    %v4678 = vadd.f32 %v4444, %v4670
    %v4679 = vadd.f32 %v4445, %v4671
    %v4680 = vadd.f32 %v4446, %v4672
    %v4681 = vadd.f32 %v4447, %v4673
    %s4682 = sld [smem:[#allocation2 + $0x4c]]
    %v4683 = vstv %s4682
    %v4684 = vmul.f32 %v4683, %v44
    %v4685 = vmul.f32 %v4683, %v45
    %v4686 = vmul.f32 %v4683, 0.0
    %v4687 = vmul.f32 %v4683, %v48
    %v4688 = vmul.f32 %v4683, %v49
    %v4694 = vrot.slane %v4684, 2
    %v4695 = vrot.slane %v4685, 2
    %v4696 = vrot.slane %v4686, 2
    %v4697 = vrot.slane %v4687, 2
    %v4698 = vrot.slane %v4688, 2
    %4699 = vrot.lane.b32.xlu0 %v4694, 111
    %v4700 = vpop.permute.xlu0 %4699
    %4701 = vrot.lane.b32.xlu0 %v4695, 111
    %v4702 = vpop.permute.xlu0 %4701
    %4703 = vrot.lane.b32.xlu0 %v4696, 111
    %v4704 = vpop.permute.xlu0 %4703
    %4705 = vrot.lane.b32.xlu0 %v4697, 111
    %v4706 = vpop.permute.xlu0 %4705
    %4707 = vrot.lane.b32.xlu0 %v4698, 111
    %v4708 = vpop.permute.xlu0 %4707
    %v4709 = vsel %vm763, %v4700, %v4702
    %v4710 = vsel %vm763, %v4702, %v4704
    %v4711 = vsel %vm763, %v4706, %v4708
    %v4712 = vsel %vm763, %v4708, %v4704
    %v4717 = vadd.f32 %v4483, %v4709
    %v4718 = vadd.f32 %v4484, %v4710
    %v4719 = vadd.f32 %v4485, %v4711
    %v4720 = vadd.f32 %v4486, %v4712
    %s4721 = sld [smem:[#allocation2 + $0x67]]
    %v4722 = vstv %s4721
    %v4723 = vmul.f32 %v4722, %v44
    %v4724 = vmul.f32 %v4722, %v45
    %v4725 = vmul.f32 %v4722, 0.0
    %v4726 = vmul.f32 %v4722, %v48
    %v4727 = vmul.f32 %v4722, %v49
    %v4733 = vrot.slane %v4723, 2
    %v4734 = vrot.slane %v4724, 2
    %v4735 = vrot.slane %v4725, 2
    %v4736 = vrot.slane %v4726, 2
    %v4737 = vrot.slane %v4727, 2
    %4738 = vrot.lane.b32.xlu0 %v4733, 111
    %v4739 = vpop.permute.xlu0 %4738
    %4740 = vrot.lane.b32.xlu0 %v4734, 111
    %v4741 = vpop.permute.xlu0 %4740
    %4742 = vrot.lane.b32.xlu0 %v4735, 111
    %v4743 = vpop.permute.xlu0 %4742
    %4744 = vrot.lane.b32.xlu0 %v4736, 111
    %v4745 = vpop.permute.xlu0 %4744
    %4746 = vrot.lane.b32.xlu0 %v4737, 111
    %v4747 = vpop.permute.xlu0 %4746
    %v4748 = vsel %vm763, %v4739, %v4741
    %v4749 = vsel %vm763, %v4741, %v4743
    %v4750 = vsel %vm763, %v4745, %v4747
    %v4751 = vsel %vm763, %v4747, %v4743
    %v4756 = vadd.f32 %v4522, %v4748
    %v4757 = vadd.f32 %v4523, %v4749
    %v4758 = vadd.f32 %v4524, %v4750
    %v4759 = vadd.f32 %v4525, %v4751
    %s4760 = sld [smem:[#allocation2 + $0x82]]
    %v4761 = vstv %s4760
    %v4762 = vmul.f32 %v4761, %v44
    %v4763 = vmul.f32 %v4761, %v45
    %v4764 = vmul.f32 %v4761, 0.0
    %v4765 = vmul.f32 %v4761, %v48
    %v4766 = vmul.f32 %v4761, %v49
    %v4772 = vrot.slane %v4762, 2
    %v4773 = vrot.slane %v4763, 2
    %v4774 = vrot.slane %v4764, 2
    %v4775 = vrot.slane %v4765, 2
    %v4776 = vrot.slane %v4766, 2
    %4777 = vrot.lane.b32.xlu0 %v4772, 111
    %v4778 = vpop.permute.xlu0 %4777
    %4779 = vrot.lane.b32.xlu0 %v4773, 111
    %v4780 = vpop.permute.xlu0 %4779
    %4781 = vrot.lane.b32.xlu0 %v4774, 111
    %v4782 = vpop.permute.xlu0 %4781
    %4783 = vrot.lane.b32.xlu0 %v4775, 111
    %v4784 = vpop.permute.xlu0 %4783
    %4785 = vrot.lane.b32.xlu0 %v4776, 111
    %v4786 = vpop.permute.xlu0 %4785
    %v4787 = vsel %vm763, %v4778, %v4780
    %v4788 = vsel %vm763, %v4780, %v4782
    %v4789 = vsel %vm763, %v4784, %v4786
    %v4790 = vsel %vm763, %v4786, %v4782
    %v4795 = vadd.f32 %v4561, %v4787
    %v4796 = vadd.f32 %v4562, %v4788
    %v4797 = vadd.f32 %v4563, %v4789
    %v4798 = vadd.f32 %v4564, %v4790
    %s4799 = sld [smem:[#allocation2 + $0x9d]]
    %v4800 = vstv %s4799
    %v4801 = vmul.f32 %v4800, %v44
    %v4802 = vmul.f32 %v4800, %v45
    %v4803 = vmul.f32 %v4800, 0.0
    %v4804 = vmul.f32 %v4800, %v48
    %v4805 = vmul.f32 %v4800, %v49
    %v4811 = vrot.slane %v4801, 2
    %v4812 = vrot.slane %v4802, 2
    %v4813 = vrot.slane %v4803, 2
    %v4814 = vrot.slane %v4804, 2
    %v4815 = vrot.slane %v4805, 2
    %4816 = vrot.lane.b32.xlu0 %v4811, 111
    %v4817 = vpop.permute.xlu0 %4816
    %4818 = vrot.lane.b32.xlu0 %v4812, 111
    %v4819 = vpop.permute.xlu0 %4818
    %4820 = vrot.lane.b32.xlu0 %v4813, 111
    %v4821 = vpop.permute.xlu0 %4820
    %4822 = vrot.lane.b32.xlu0 %v4814, 111
    %v4823 = vpop.permute.xlu0 %4822
    %4824 = vrot.lane.b32.xlu0 %v4815, 111
    %v4825 = vpop.permute.xlu0 %4824
    %v4826 = vsel %vm763, %v4817, %v4819
    %v4827 = vsel %vm763, %v4819, %v4821
    %v4828 = vsel %vm763, %v4823, %v4825
    %v4829 = vsel %vm763, %v4825, %v4821
    %v4834 = vadd.f32 %v4600, %v4826
    %v4835 = vadd.f32 %v4601, %v4827
    %v4836 = vadd.f32 %v4602, %v4828
    %v4837 = vadd.f32 %v4603, %v4829
    %s4838 = sld [smem:[#allocation2 + $0x17]]
    %v4839 = vstv %s4838
    %v4840 = vmul.f32 %v4839, %v44
    %v4841 = vmul.f32 %v4839, %v45
    %v4842 = vmul.f32 %v4839, 0.0
    %v4843 = vmul.f32 %v4839, %v48
    %v4844 = vmul.f32 %v4839, %v49
    %v4850 = vrot.slane %v4840, 2
    %v4851 = vrot.slane %v4841, 2
    %v4852 = vrot.slane %v4842, 2
    %v4853 = vrot.slane %v4843, 2
    %v4854 = vrot.slane %v4844, 2
    %4855 = vrot.lane.b32.xlu0 %v4850, 110
    %v4856 = vpop.permute.xlu0 %4855
    %4857 = vrot.lane.b32.xlu0 %v4851, 110
    %v4858 = vpop.permute.xlu0 %4857
    %4859 = vrot.lane.b32.xlu0 %v4852, 110
    %v4860 = vpop.permute.xlu0 %4859
    %4861 = vrot.lane.b32.xlu0 %v4853, 110
    %v4862 = vpop.permute.xlu0 %4861
    %4863 = vrot.lane.b32.xlu0 %v4854, 110
    %v4864 = vpop.permute.xlu0 %4863
    %v4865 = vsel %vm968, %v4856, %v4858
    %v4866 = vsel %vm968, %v4858, %v4860
    %v4867 = vsel %vm968, %v4862, %v4864
    %v4868 = vsel %vm968, %v4864, %v4860
    %v4873 = vadd.f32 %v4639, %v4865
    %v4874 = vadd.f32 %v4640, %v4866
    %v4875 = vadd.f32 %v4641, %v4867
    %v4876 = vadd.f32 %v4642, %v4868
    %s4877 = sld [smem:[#allocation2 + $0x32]]
    %v4878 = vstv %s4877
    %v4879 = vmul.f32 %v4878, %v44
    %v4880 = vmul.f32 %v4878, %v45
    %v4881 = vmul.f32 %v4878, 0.0
    %v4882 = vmul.f32 %v4878, %v48
    %v4883 = vmul.f32 %v4878, %v49
    %v4889 = vrot.slane %v4879, 2
    %v4890 = vrot.slane %v4880, 2
    %v4891 = vrot.slane %v4881, 2
    %v4892 = vrot.slane %v4882, 2
    %v4893 = vrot.slane %v4883, 2
    %4894 = vrot.lane.b32.xlu0 %v4889, 110
    %v4895 = vpop.permute.xlu0 %4894
    %4896 = vrot.lane.b32.xlu0 %v4890, 110
    %v4897 = vpop.permute.xlu0 %4896
    %4898 = vrot.lane.b32.xlu0 %v4891, 110
    %v4899 = vpop.permute.xlu0 %4898
    %4900 = vrot.lane.b32.xlu0 %v4892, 110
    %v4901 = vpop.permute.xlu0 %4900
    %4902 = vrot.lane.b32.xlu0 %v4893, 110
    %v4903 = vpop.permute.xlu0 %4902
    %v4904 = vsel %vm968, %v4895, %v4897
    %v4905 = vsel %vm968, %v4897, %v4899
    %v4906 = vsel %vm968, %v4901, %v4903
    %v4907 = vsel %vm968, %v4903, %v4899
    %v4912 = vadd.f32 %v4678, %v4904
    %v4913 = vadd.f32 %v4679, %v4905
    %v4914 = vadd.f32 %v4680, %v4906
    %v4915 = vadd.f32 %v4681, %v4907
    %s4916 = sld [smem:[#allocation2 + $0x4d]]
    %v4917 = vstv %s4916
    %v4918 = vmul.f32 %v4917, %v44
    %v4919 = vmul.f32 %v4917, %v45
    %v4920 = vmul.f32 %v4917, 0.0
    %v4921 = vmul.f32 %v4917, %v48
    %v4922 = vmul.f32 %v4917, %v49
    %v4928 = vrot.slane %v4918, 2
    %v4929 = vrot.slane %v4919, 2
    %v4930 = vrot.slane %v4920, 2
    %v4931 = vrot.slane %v4921, 2
    %v4932 = vrot.slane %v4922, 2
    %4933 = vrot.lane.b32.xlu0 %v4928, 110
    %v4934 = vpop.permute.xlu0 %4933
    %4935 = vrot.lane.b32.xlu0 %v4929, 110
    %v4936 = vpop.permute.xlu0 %4935
    %4937 = vrot.lane.b32.xlu0 %v4930, 110
    %v4938 = vpop.permute.xlu0 %4937
    %4939 = vrot.lane.b32.xlu0 %v4931, 110
    %v4940 = vpop.permute.xlu0 %4939
    %4941 = vrot.lane.b32.xlu0 %v4932, 110
    %v4942 = vpop.permute.xlu0 %4941
    %v4943 = vsel %vm968, %v4934, %v4936
    %v4944 = vsel %vm968, %v4936, %v4938
    %v4945 = vsel %vm968, %v4940, %v4942
    %v4946 = vsel %vm968, %v4942, %v4938
    %v4951 = vadd.f32 %v4717, %v4943
    %v4952 = vadd.f32 %v4718, %v4944
    %v4953 = vadd.f32 %v4719, %v4945
    %v4954 = vadd.f32 %v4720, %v4946
    %s4955 = sld [smem:[#allocation2 + $0x68]]
    %v4956 = vstv %s4955
    %v4957 = vmul.f32 %v4956, %v44
    %v4958 = vmul.f32 %v4956, %v45
    %v4959 = vmul.f32 %v4956, 0.0
    %v4960 = vmul.f32 %v4956, %v48
    %v4961 = vmul.f32 %v4956, %v49
    %v4967 = vrot.slane %v4957, 2
    %v4968 = vrot.slane %v4958, 2
    %v4969 = vrot.slane %v4959, 2
    %v4970 = vrot.slane %v4960, 2
    %v4971 = vrot.slane %v4961, 2
    %4972 = vrot.lane.b32.xlu0 %v4967, 110
    %v4973 = vpop.permute.xlu0 %4972
    %4974 = vrot.lane.b32.xlu0 %v4968, 110
    %v4975 = vpop.permute.xlu0 %4974
    %4976 = vrot.lane.b32.xlu0 %v4969, 110
    %v4977 = vpop.permute.xlu0 %4976
    %4978 = vrot.lane.b32.xlu0 %v4970, 110
    %v4979 = vpop.permute.xlu0 %4978
    %4980 = vrot.lane.b32.xlu0 %v4971, 110
    %v4981 = vpop.permute.xlu0 %4980
    %v4982 = vsel %vm968, %v4973, %v4975
    %v4983 = vsel %vm968, %v4975, %v4977
    %v4984 = vsel %vm968, %v4979, %v4981
    %v4985 = vsel %vm968, %v4981, %v4977
    %v4990 = vadd.f32 %v4756, %v4982
    %v4991 = vadd.f32 %v4757, %v4983
    %v4992 = vadd.f32 %v4758, %v4984
    %v4993 = vadd.f32 %v4759, %v4985
    %s4994 = sld [smem:[#allocation2 + $0x83]]
    %v4995 = vstv %s4994
    %v4996 = vmul.f32 %v4995, %v44
    %v4997 = vmul.f32 %v4995, %v45
    %v4998 = vmul.f32 %v4995, 0.0
    %v4999 = vmul.f32 %v4995, %v48
    %v5000 = vmul.f32 %v4995, %v49
    %v5006 = vrot.slane %v4996, 2
    %v5007 = vrot.slane %v4997, 2
    %v5008 = vrot.slane %v4998, 2
    %v5009 = vrot.slane %v4999, 2
    %v5010 = vrot.slane %v5000, 2
    %5011 = vrot.lane.b32.xlu0 %v5006, 110
    %v5012 = vpop.permute.xlu0 %5011
    %5013 = vrot.lane.b32.xlu0 %v5007, 110
    %v5014 = vpop.permute.xlu0 %5013
    %5015 = vrot.lane.b32.xlu0 %v5008, 110
    %v5016 = vpop.permute.xlu0 %5015
    %5017 = vrot.lane.b32.xlu0 %v5009, 110
    %v5018 = vpop.permute.xlu0 %5017
    %5019 = vrot.lane.b32.xlu0 %v5010, 110
    %v5020 = vpop.permute.xlu0 %5019
    %v5021 = vsel %vm968, %v5012, %v5014
    %v5022 = vsel %vm968, %v5014, %v5016
    %v5023 = vsel %vm968, %v5018, %v5020
    %v5024 = vsel %vm968, %v5020, %v5016
    %v5029 = vadd.f32 %v4795, %v5021
    %v5030 = vadd.f32 %v4796, %v5022
    %v5031 = vadd.f32 %v4797, %v5023
    %v5032 = vadd.f32 %v4798, %v5024
    %s5033 = sld [smem:[#allocation2 + $0x9e]]
    %v5034 = vstv %s5033
    %v5035 = vmul.f32 %v5034, %v44
    %v5036 = vmul.f32 %v5034, %v45
    %v5037 = vmul.f32 %v5034, 0.0
    %v5038 = vmul.f32 %v5034, %v48
    %v5039 = vmul.f32 %v5034, %v49
    %v5045 = vrot.slane %v5035, 2
    %v5046 = vrot.slane %v5036, 2
    %v5047 = vrot.slane %v5037, 2
    %v5048 = vrot.slane %v5038, 2
    %v5049 = vrot.slane %v5039, 2
    %5050 = vrot.lane.b32.xlu0 %v5045, 110
    %v5051 = vpop.permute.xlu0 %5050
    %5052 = vrot.lane.b32.xlu0 %v5046, 110
    %v5053 = vpop.permute.xlu0 %5052
    %5054 = vrot.lane.b32.xlu0 %v5047, 110
    %v5055 = vpop.permute.xlu0 %5054
    %5056 = vrot.lane.b32.xlu0 %v5048, 110
    %v5057 = vpop.permute.xlu0 %5056
    %5058 = vrot.lane.b32.xlu0 %v5049, 110
    %v5059 = vpop.permute.xlu0 %5058
    %v5060 = vsel %vm968, %v5051, %v5053
    %v5061 = vsel %vm968, %v5053, %v5055
    %v5062 = vsel %vm968, %v5057, %v5059
    %v5063 = vsel %vm968, %v5059, %v5055
    %v5068 = vadd.f32 %v4834, %v5060
    %v5069 = vadd.f32 %v4835, %v5061
    %v5070 = vadd.f32 %v4836, %v5062
    %v5071 = vadd.f32 %v4837, %v5063
    %s5072 = sld [smem:[#allocation2 + $0x18]]
    %v5073 = vstv %s5072
    %v5074 = vmul.f32 %v5073, %v44
    %v5075 = vmul.f32 %v5073, %v45
    %v5076 = vmul.f32 %v5073, 0.0
    %v5077 = vmul.f32 %v5073, %v48
    %v5078 = vmul.f32 %v5073, %v49
    %v5084 = vrot.slane %v5074, 2
    %v5085 = vrot.slane %v5075, 2
    %v5086 = vrot.slane %v5076, 2
    %v5087 = vrot.slane %v5077, 2
    %v5088 = vrot.slane %v5078, 2
    %5089 = vrot.lane.b32.xlu0 %v5084, 96
    %v5090 = vpop.permute.xlu0 %5089
    %5091 = vrot.lane.b32.xlu0 %v5085, 96
    %v5092 = vpop.permute.xlu0 %5091
    %5093 = vrot.lane.b32.xlu0 %v5086, 96
    %v5094 = vpop.permute.xlu0 %5093
    %5095 = vrot.lane.b32.xlu0 %v5087, 96
    %v5096 = vpop.permute.xlu0 %5095
    %5097 = vrot.lane.b32.xlu0 %v5088, 96
    %v5098 = vpop.permute.xlu0 %5097
    %v5099 = vsel %vm1173, %v5090, %v5092
    %v5100 = vsel %vm1173, %v5092, %v5094
    %v5101 = vsel %vm1173, %v5096, %v5098
    %v5102 = vsel %vm1173, %v5098, %v5094
    %v5107 = vadd.f32 %v4873, %v5099
    %v5108 = vadd.f32 %v4874, %v5100
    %v5109 = vadd.f32 %v4875, %v5101
    %v5110 = vadd.f32 %v4876, %v5102
    %s5111 = sld [smem:[#allocation2 + $0x33]]
    %v5112 = vstv %s5111
    %v5113 = vmul.f32 %v5112, %v44
    %v5114 = vmul.f32 %v5112, %v45
    %v5115 = vmul.f32 %v5112, 0.0
    %v5116 = vmul.f32 %v5112, %v48
    %v5117 = vmul.f32 %v5112, %v49
    %v5123 = vrot.slane %v5113, 2
    %v5124 = vrot.slane %v5114, 2
    %v5125 = vrot.slane %v5115, 2
    %v5126 = vrot.slane %v5116, 2
    %v5127 = vrot.slane %v5117, 2
    %5128 = vrot.lane.b32.xlu0 %v5123, 96
    %v5129 = vpop.permute.xlu0 %5128
    %5130 = vrot.lane.b32.xlu0 %v5124, 96
    %v5131 = vpop.permute.xlu0 %5130
    %5132 = vrot.lane.b32.xlu0 %v5125, 96
    %v5133 = vpop.permute.xlu0 %5132
    %5134 = vrot.lane.b32.xlu0 %v5126, 96
    %v5135 = vpop.permute.xlu0 %5134
    %5136 = vrot.lane.b32.xlu0 %v5127, 96
    %v5137 = vpop.permute.xlu0 %5136
    %v5138 = vsel %vm1173, %v5129, %v5131
    %v5139 = vsel %vm1173, %v5131, %v5133
    %v5140 = vsel %vm1173, %v5135, %v5137
    %v5141 = vsel %vm1173, %v5137, %v5133
    %v5146 = vadd.f32 %v4912, %v5138
    %v5147 = vadd.f32 %v4913, %v5139
    %v5148 = vadd.f32 %v4914, %v5140
    %v5149 = vadd.f32 %v4915, %v5141
    %s5150 = sld [smem:[#allocation2 + $0x4e]]
    %v5151 = vstv %s5150
    %v5152 = vmul.f32 %v5151, %v44
    %v5153 = vmul.f32 %v5151, %v45
    %v5154 = vmul.f32 %v5151, 0.0
    %v5155 = vmul.f32 %v5151, %v48
    %v5156 = vmul.f32 %v5151, %v49
    %v5162 = vrot.slane %v5152, 2
    %v5163 = vrot.slane %v5153, 2
    %v5164 = vrot.slane %v5154, 2
    %v5165 = vrot.slane %v5155, 2
    %v5166 = vrot.slane %v5156, 2
    %5167 = vrot.lane.b32.xlu0 %v5162, 96
    %v5168 = vpop.permute.xlu0 %5167
    %5169 = vrot.lane.b32.xlu0 %v5163, 96
    %v5170 = vpop.permute.xlu0 %5169
    %5171 = vrot.lane.b32.xlu0 %v5164, 96
    %v5172 = vpop.permute.xlu0 %5171
    %5173 = vrot.lane.b32.xlu0 %v5165, 96
    %v5174 = vpop.permute.xlu0 %5173
    %5175 = vrot.lane.b32.xlu0 %v5166, 96
    %v5176 = vpop.permute.xlu0 %5175
    %v5177 = vsel %vm1173, %v5168, %v5170
    %v5178 = vsel %vm1173, %v5170, %v5172
    %v5179 = vsel %vm1173, %v5174, %v5176
    %v5180 = vsel %vm1173, %v5176, %v5172
    %v5185 = vadd.f32 %v4951, %v5177
    %v5186 = vadd.f32 %v4952, %v5178
    %v5187 = vadd.f32 %v4953, %v5179
    %v5188 = vadd.f32 %v4954, %v5180
    %s5189 = sld [smem:[#allocation2 + $0x69]]
    %v5190 = vstv %s5189
    %v5191 = vmul.f32 %v5190, %v44
    %v5192 = vmul.f32 %v5190, %v45
    %v5193 = vmul.f32 %v5190, 0.0
    %v5194 = vmul.f32 %v5190, %v48
    %v5195 = vmul.f32 %v5190, %v49
    %v5201 = vrot.slane %v5191, 2
    %v5202 = vrot.slane %v5192, 2
    %v5203 = vrot.slane %v5193, 2
    %v5204 = vrot.slane %v5194, 2
    %v5205 = vrot.slane %v5195, 2
    %5206 = vrot.lane.b32.xlu0 %v5201, 96
    %v5207 = vpop.permute.xlu0 %5206
    %5208 = vrot.lane.b32.xlu0 %v5202, 96
    %v5209 = vpop.permute.xlu0 %5208
    %5210 = vrot.lane.b32.xlu0 %v5203, 96
    %v5211 = vpop.permute.xlu0 %5210
    %5212 = vrot.lane.b32.xlu0 %v5204, 96
    %v5213 = vpop.permute.xlu0 %5212
    %5214 = vrot.lane.b32.xlu0 %v5205, 96
    %v5215 = vpop.permute.xlu0 %5214
    %v5216 = vsel %vm1173, %v5207, %v5209
    %v5217 = vsel %vm1173, %v5209, %v5211
    %v5218 = vsel %vm1173, %v5213, %v5215
    %v5219 = vsel %vm1173, %v5215, %v5211
    %v5224 = vadd.f32 %v4990, %v5216
    %v5225 = vadd.f32 %v4991, %v5217
    %v5226 = vadd.f32 %v4992, %v5218
    %v5227 = vadd.f32 %v4993, %v5219
    %s5228 = sld [smem:[#allocation2 + $0x84]]
    %v5229 = vstv %s5228
    %v5230 = vmul.f32 %v5229, %v44
    %v5231 = vmul.f32 %v5229, %v45
    %v5232 = vmul.f32 %v5229, 0.0
    %v5233 = vmul.f32 %v5229, %v48
    %v5234 = vmul.f32 %v5229, %v49
    %v5240 = vrot.slane %v5230, 2
    %v5241 = vrot.slane %v5231, 2
    %v5242 = vrot.slane %v5232, 2
    %v5243 = vrot.slane %v5233, 2
    %v5244 = vrot.slane %v5234, 2
    %5245 = vrot.lane.b32.xlu0 %v5240, 96
    %v5246 = vpop.permute.xlu0 %5245
    %5247 = vrot.lane.b32.xlu0 %v5241, 96
    %v5248 = vpop.permute.xlu0 %5247
    %5249 = vrot.lane.b32.xlu0 %v5242, 96
    %v5250 = vpop.permute.xlu0 %5249
    %5251 = vrot.lane.b32.xlu0 %v5243, 96
    %v5252 = vpop.permute.xlu0 %5251
    %5253 = vrot.lane.b32.xlu0 %v5244, 96
    %v5254 = vpop.permute.xlu0 %5253
    %v5255 = vsel %vm1173, %v5246, %v5248
    %v5256 = vsel %vm1173, %v5248, %v5250
    %v5257 = vsel %vm1173, %v5252, %v5254
    %v5258 = vsel %vm1173, %v5254, %v5250
    %v5263 = vadd.f32 %v5029, %v5255
    %v5264 = vadd.f32 %v5030, %v5256
    %v5265 = vadd.f32 %v5031, %v5257
    %v5266 = vadd.f32 %v5032, %v5258
    %s5267 = sld [smem:[#allocation2 + $0x9f]]
    %v5268 = vstv %s5267
    %v5269 = vmul.f32 %v5268, %v44
    %v5270 = vmul.f32 %v5268, %v45
    %v5271 = vmul.f32 %v5268, 0.0
    %v5272 = vmul.f32 %v5268, %v48
    %v5273 = vmul.f32 %v5268, %v49
    %v5279 = vrot.slane %v5269, 2
    %v5280 = vrot.slane %v5270, 2
    %v5281 = vrot.slane %v5271, 2
    %v5282 = vrot.slane %v5272, 2
    %v5283 = vrot.slane %v5273, 2
    %5284 = vrot.lane.b32.xlu0 %v5279, 96
    %v5285 = vpop.permute.xlu0 %5284
    %5286 = vrot.lane.b32.xlu0 %v5280, 96
    %v5287 = vpop.permute.xlu0 %5286
    %5288 = vrot.lane.b32.xlu0 %v5281, 96
    %v5289 = vpop.permute.xlu0 %5288
    %5290 = vrot.lane.b32.xlu0 %v5282, 96
    %v5291 = vpop.permute.xlu0 %5290
    %5292 = vrot.lane.b32.xlu0 %v5283, 96
    %v5293 = vpop.permute.xlu0 %5292
    %v5294 = vsel %vm1173, %v5285, %v5287
    %v5295 = vsel %vm1173, %v5287, %v5289
    %v5296 = vsel %vm1173, %v5291, %v5293
    %v5297 = vsel %vm1173, %v5293, %v5289
    %v5302 = vadd.f32 %v5068, %v5294
    %v5303 = vadd.f32 %v5069, %v5295
    %v5304 = vadd.f32 %v5070, %v5296
    %v5305 = vadd.f32 %v5071, %v5297
    %s5306 = sld [smem:[#allocation2 + $0x19]]
    %v5307 = vstv %s5306
    %v5308 = vmul.f32 %v5307, %v44
    %v5309 = vmul.f32 %v5307, %v45
    %v5310 = vmul.f32 %v5307, 0.0
    %v5311 = vmul.f32 %v5307, %v48
    %v5312 = vmul.f32 %v5307, %v49
    %v5318 = vrot.slane %v5308, 2
    %v5319 = vrot.slane %v5309, 2
    %v5320 = vrot.slane %v5310, 2
    %v5321 = vrot.slane %v5311, 2
    %v5322 = vrot.slane %v5312, 2
    %5323 = vrot.lane.b32.xlu0 %v5318, 95
    %v5324 = vpop.permute.xlu0 %5323
    %5325 = vrot.lane.b32.xlu0 %v5319, 95
    %v5326 = vpop.permute.xlu0 %5325
    %5327 = vrot.lane.b32.xlu0 %v5320, 95
    %v5328 = vpop.permute.xlu0 %5327
    %5329 = vrot.lane.b32.xlu0 %v5321, 95
    %v5330 = vpop.permute.xlu0 %5329
    %5331 = vrot.lane.b32.xlu0 %v5322, 95
    %v5332 = vpop.permute.xlu0 %5331
    %v5333 = vsel %vm1378, %v5324, %v5326
    %v5334 = vsel %vm1378, %v5326, %v5328
    %v5335 = vsel %vm1378, %v5330, %v5332
    %v5336 = vsel %vm1378, %v5332, %v5328
    %v5341 = vadd.f32 %v5107, %v5333
    %v5342 = vadd.f32 %v5108, %v5334
    %v5343 = vadd.f32 %v5109, %v5335
    %v5344 = vadd.f32 %v5110, %v5336
    %s5345 = sld [smem:[#allocation2 + $0x34]]
    %v5346 = vstv %s5345
    %v5347 = vmul.f32 %v5346, %v44
    %v5348 = vmul.f32 %v5346, %v45
    %v5349 = vmul.f32 %v5346, 0.0
    %v5350 = vmul.f32 %v5346, %v48
    %v5351 = vmul.f32 %v5346, %v49
    %v5357 = vrot.slane %v5347, 2
    %v5358 = vrot.slane %v5348, 2
    %v5359 = vrot.slane %v5349, 2
    %v5360 = vrot.slane %v5350, 2
    %v5361 = vrot.slane %v5351, 2
    %5362 = vrot.lane.b32.xlu0 %v5357, 95
    %v5363 = vpop.permute.xlu0 %5362
    %5364 = vrot.lane.b32.xlu0 %v5358, 95
    %v5365 = vpop.permute.xlu0 %5364
    %5366 = vrot.lane.b32.xlu0 %v5359, 95
    %v5367 = vpop.permute.xlu0 %5366
    %5368 = vrot.lane.b32.xlu0 %v5360, 95
    %v5369 = vpop.permute.xlu0 %5368
    %5370 = vrot.lane.b32.xlu0 %v5361, 95
    %v5371 = vpop.permute.xlu0 %5370
    %v5372 = vsel %vm1378, %v5363, %v5365
    %v5373 = vsel %vm1378, %v5365, %v5367
    %v5374 = vsel %vm1378, %v5369, %v5371
    %v5375 = vsel %vm1378, %v5371, %v5367
    %v5380 = vadd.f32 %v5146, %v5372
    %v5381 = vadd.f32 %v5147, %v5373
    %v5382 = vadd.f32 %v5148, %v5374
    %v5383 = vadd.f32 %v5149, %v5375
    %s5384 = sld [smem:[#allocation2 + $0x4f]]
    %v5385 = vstv %s5384
    %v5386 = vmul.f32 %v5385, %v44
    %v5387 = vmul.f32 %v5385, %v45
    %v5388 = vmul.f32 %v5385, 0.0
    %v5389 = vmul.f32 %v5385, %v48
    %v5390 = vmul.f32 %v5385, %v49
    %v5396 = vrot.slane %v5386, 2
    %v5397 = vrot.slane %v5387, 2
    %v5398 = vrot.slane %v5388, 2
    %v5399 = vrot.slane %v5389, 2
    %v5400 = vrot.slane %v5390, 2
    %5401 = vrot.lane.b32.xlu0 %v5396, 95
    %v5402 = vpop.permute.xlu0 %5401
    %5403 = vrot.lane.b32.xlu0 %v5397, 95
    %v5404 = vpop.permute.xlu0 %5403
    %5405 = vrot.lane.b32.xlu0 %v5398, 95
    %v5406 = vpop.permute.xlu0 %5405
    %5407 = vrot.lane.b32.xlu0 %v5399, 95
    %v5408 = vpop.permute.xlu0 %5407
    %5409 = vrot.lane.b32.xlu0 %v5400, 95
    %v5410 = vpop.permute.xlu0 %5409
    %v5411 = vsel %vm1378, %v5402, %v5404
    %v5412 = vsel %vm1378, %v5404, %v5406
    %v5413 = vsel %vm1378, %v5408, %v5410
    %v5414 = vsel %vm1378, %v5410, %v5406
    %v5419 = vadd.f32 %v5185, %v5411
    %v5420 = vadd.f32 %v5186, %v5412
    %v5421 = vadd.f32 %v5187, %v5413
    %v5422 = vadd.f32 %v5188, %v5414
    %s5423 = sld [smem:[#allocation2 + $0x6a]]
    %v5424 = vstv %s5423
    %v5425 = vmul.f32 %v5424, %v44
    %v5426 = vmul.f32 %v5424, %v45
    %v5427 = vmul.f32 %v5424, 0.0
    %v5428 = vmul.f32 %v5424, %v48
    %v5429 = vmul.f32 %v5424, %v49
    %v5435 = vrot.slane %v5425, 2
    %v5436 = vrot.slane %v5426, 2
    %v5437 = vrot.slane %v5427, 2
    %v5438 = vrot.slane %v5428, 2
    %v5439 = vrot.slane %v5429, 2
    %5440 = vrot.lane.b32.xlu0 %v5435, 95
    %v5441 = vpop.permute.xlu0 %5440
    %5442 = vrot.lane.b32.xlu0 %v5436, 95
    %v5443 = vpop.permute.xlu0 %5442
    %5444 = vrot.lane.b32.xlu0 %v5437, 95
    %v5445 = vpop.permute.xlu0 %5444
    %5446 = vrot.lane.b32.xlu0 %v5438, 95
    %v5447 = vpop.permute.xlu0 %5446
    %5448 = vrot.lane.b32.xlu0 %v5439, 95
    %v5449 = vpop.permute.xlu0 %5448
    %v5450 = vsel %vm1378, %v5441, %v5443
    %v5451 = vsel %vm1378, %v5443, %v5445
    %v5452 = vsel %vm1378, %v5447, %v5449
    %v5453 = vsel %vm1378, %v5449, %v5445
    %v5458 = vadd.f32 %v5224, %v5450
    %v5459 = vadd.f32 %v5225, %v5451
    %v5460 = vadd.f32 %v5226, %v5452
    %v5461 = vadd.f32 %v5227, %v5453
    %s5462 = sld [smem:[#allocation2 + $0x85]]
    %v5463 = vstv %s5462
    %v5464 = vmul.f32 %v5463, %v44
    %v5465 = vmul.f32 %v5463, %v45
    %v5466 = vmul.f32 %v5463, 0.0
    %v5467 = vmul.f32 %v5463, %v48
    %v5468 = vmul.f32 %v5463, %v49
    %v5474 = vrot.slane %v5464, 2
    %v5475 = vrot.slane %v5465, 2
    %v5476 = vrot.slane %v5466, 2
    %v5477 = vrot.slane %v5467, 2
    %v5478 = vrot.slane %v5468, 2
    %5479 = vrot.lane.b32.xlu0 %v5474, 95
    %v5480 = vpop.permute.xlu0 %5479
    %5481 = vrot.lane.b32.xlu0 %v5475, 95
    %v5482 = vpop.permute.xlu0 %5481
    %5483 = vrot.lane.b32.xlu0 %v5476, 95
    %v5484 = vpop.permute.xlu0 %5483
    %5485 = vrot.lane.b32.xlu0 %v5477, 95
    %v5486 = vpop.permute.xlu0 %5485
    %5487 = vrot.lane.b32.xlu0 %v5478, 95
    %v5488 = vpop.permute.xlu0 %5487
    %v5489 = vsel %vm1378, %v5480, %v5482
    %v5490 = vsel %vm1378, %v5482, %v5484
    %v5491 = vsel %vm1378, %v5486, %v5488
    %v5492 = vsel %vm1378, %v5488, %v5484
    %v5497 = vadd.f32 %v5263, %v5489
    %v5498 = vadd.f32 %v5264, %v5490
    %v5499 = vadd.f32 %v5265, %v5491
    %v5500 = vadd.f32 %v5266, %v5492
    %s5501 = sld [smem:[#allocation2 + $0xa0]]
    %v5502 = vstv %s5501
    %v5503 = vmul.f32 %v5502, %v44
    %v5504 = vmul.f32 %v5502, %v45
    %v5505 = vmul.f32 %v5502, 0.0
    %v5506 = vmul.f32 %v5502, %v48
    %v5507 = vmul.f32 %v5502, %v49
    %v5513 = vrot.slane %v5503, 2
    %v5514 = vrot.slane %v5504, 2
    %v5515 = vrot.slane %v5505, 2
    %v5516 = vrot.slane %v5506, 2
    %v5517 = vrot.slane %v5507, 2
    %5518 = vrot.lane.b32.xlu0 %v5513, 95
    %v5519 = vpop.permute.xlu0 %5518
    %5520 = vrot.lane.b32.xlu0 %v5514, 95
    %v5521 = vpop.permute.xlu0 %5520
    %5522 = vrot.lane.b32.xlu0 %v5515, 95
    %v5523 = vpop.permute.xlu0 %5522
    %5524 = vrot.lane.b32.xlu0 %v5516, 95
    %v5525 = vpop.permute.xlu0 %5524
    %5526 = vrot.lane.b32.xlu0 %v5517, 95
    %v5527 = vpop.permute.xlu0 %5526
    %v5528 = vsel %vm1378, %v5519, %v5521
    %v5529 = vsel %vm1378, %v5521, %v5523
    %v5530 = vsel %vm1378, %v5525, %v5527
    %v5531 = vsel %vm1378, %v5527, %v5523
    %v5536 = vadd.f32 %v5302, %v5528
    %v5537 = vadd.f32 %v5303, %v5529
    %v5538 = vadd.f32 %v5304, %v5530
    %v5539 = vadd.f32 %v5305, %v5531
    %s5540 = sld [smem:[#allocation2 + $0x1a]]
    %v5541 = vstv %s5540
    %v5542 = vmul.f32 %v5541, %v44
    %v5543 = vmul.f32 %v5541, %v45
    %v5544 = vmul.f32 %v5541, 0.0
    %v5545 = vmul.f32 %v5541, %v48
    %v5546 = vmul.f32 %v5541, %v49
    %v5552 = vrot.slane %v5542, 2
    %v5553 = vrot.slane %v5543, 2
    %v5554 = vrot.slane %v5544, 2
    %v5555 = vrot.slane %v5545, 2
    %v5556 = vrot.slane %v5546, 2
    %5557 = vrot.lane.b32.xlu0 %v5552, 94
    %v5558 = vpop.permute.xlu0 %5557
    %5559 = vrot.lane.b32.xlu0 %v5553, 94
    %v5560 = vpop.permute.xlu0 %5559
    %5561 = vrot.lane.b32.xlu0 %v5554, 94
    %v5562 = vpop.permute.xlu0 %5561
    %5563 = vrot.lane.b32.xlu0 %v5555, 94
    %v5564 = vpop.permute.xlu0 %5563
    %5565 = vrot.lane.b32.xlu0 %v5556, 94
    %v5566 = vpop.permute.xlu0 %5565
    %v5567 = vsel %vm1583, %v5558, %v5560
    %v5568 = vsel %vm1583, %v5560, %v5562
    %v5569 = vsel %vm1583, %v5564, %v5566
    %v5570 = vsel %vm1583, %v5566, %v5562
    %v5575 = vadd.f32 %v5341, %v5567
    %v5576 = vadd.f32 %v5342, %v5568
    %v5577 = vadd.f32 %v5343, %v5569
    %v5578 = vadd.f32 %v5344, %v5570
    %s5579 = sld [smem:[#allocation2 + $0x35]]
    %v5580 = vstv %s5579
    %v5581 = vmul.f32 %v5580, %v44
    %v5582 = vmul.f32 %v5580, %v45
    %v5583 = vmul.f32 %v5580, 0.0
    %v5584 = vmul.f32 %v5580, %v48
    %v5585 = vmul.f32 %v5580, %v49
    %v5591 = vrot.slane %v5581, 2
    %v5592 = vrot.slane %v5582, 2
    %v5593 = vrot.slane %v5583, 2
    %v5594 = vrot.slane %v5584, 2
    %v5595 = vrot.slane %v5585, 2
    %5596 = vrot.lane.b32.xlu0 %v5591, 94
    %v5597 = vpop.permute.xlu0 %5596
    %5598 = vrot.lane.b32.xlu0 %v5592, 94
    %v5599 = vpop.permute.xlu0 %5598
    %5600 = vrot.lane.b32.xlu0 %v5593, 94
    %v5601 = vpop.permute.xlu0 %5600
    %5602 = vrot.lane.b32.xlu0 %v5594, 94
    %v5603 = vpop.permute.xlu0 %5602
    %5604 = vrot.lane.b32.xlu0 %v5595, 94
    %v5605 = vpop.permute.xlu0 %5604
    %v5606 = vsel %vm1583, %v5597, %v5599
    %v5607 = vsel %vm1583, %v5599, %v5601
    %v5608 = vsel %vm1583, %v5603, %v5605
    %v5609 = vsel %vm1583, %v5605, %v5601
    %v5614 = vadd.f32 %v5380, %v5606
    %v5615 = vadd.f32 %v5381, %v5607
    %v5616 = vadd.f32 %v5382, %v5608
    %v5617 = vadd.f32 %v5383, %v5609
    %s5618 = sld [smem:[#allocation2 + $0x50]]
    %v5619 = vstv %s5618
    %v5620 = vmul.f32 %v5619, %v44
    %v5621 = vmul.f32 %v5619, %v45
    %v5622 = vmul.f32 %v5619, 0.0
    %v5623 = vmul.f32 %v5619, %v48
    %v5624 = vmul.f32 %v5619, %v49
    %v5630 = vrot.slane %v5620, 2
    %v5631 = vrot.slane %v5621, 2
    %v5632 = vrot.slane %v5622, 2
    %v5633 = vrot.slane %v5623, 2
    %v5634 = vrot.slane %v5624, 2
    %5635 = vrot.lane.b32.xlu0 %v5630, 94
    %v5636 = vpop.permute.xlu0 %5635
    %5637 = vrot.lane.b32.xlu0 %v5631, 94
    %v5638 = vpop.permute.xlu0 %5637
    %5639 = vrot.lane.b32.xlu0 %v5632, 94
    %v5640 = vpop.permute.xlu0 %5639
    %5641 = vrot.lane.b32.xlu0 %v5633, 94
    %v5642 = vpop.permute.xlu0 %5641
    %5643 = vrot.lane.b32.xlu0 %v5634, 94
    %v5644 = vpop.permute.xlu0 %5643
    %v5645 = vsel %vm1583, %v5636, %v5638
    %v5646 = vsel %vm1583, %v5638, %v5640
    %v5647 = vsel %vm1583, %v5642, %v5644
    %v5648 = vsel %vm1583, %v5644, %v5640
    %v5653 = vadd.f32 %v5419, %v5645
    %v5654 = vadd.f32 %v5420, %v5646
    %v5655 = vadd.f32 %v5421, %v5647
    %v5656 = vadd.f32 %v5422, %v5648
    %s5657 = sld [smem:[#allocation2 + $0x6b]]
    %v5658 = vstv %s5657
    %v5659 = vmul.f32 %v5658, %v44
    %v5660 = vmul.f32 %v5658, %v45
    %v5661 = vmul.f32 %v5658, 0.0
    %v5662 = vmul.f32 %v5658, %v48
    %v5663 = vmul.f32 %v5658, %v49
    %v5669 = vrot.slane %v5659, 2
    %v5670 = vrot.slane %v5660, 2
    %v5671 = vrot.slane %v5661, 2
    %v5672 = vrot.slane %v5662, 2
    %v5673 = vrot.slane %v5663, 2
    %5674 = vrot.lane.b32.xlu0 %v5669, 94
    %v5675 = vpop.permute.xlu0 %5674
    %5676 = vrot.lane.b32.xlu0 %v5670, 94
    %v5677 = vpop.permute.xlu0 %5676
    %5678 = vrot.lane.b32.xlu0 %v5671, 94
    %v5679 = vpop.permute.xlu0 %5678
    %5680 = vrot.lane.b32.xlu0 %v5672, 94
    %v5681 = vpop.permute.xlu0 %5680
    %5682 = vrot.lane.b32.xlu0 %v5673, 94
    %v5683 = vpop.permute.xlu0 %5682
    %v5684 = vsel %vm1583, %v5675, %v5677
    %v5685 = vsel %vm1583, %v5677, %v5679
    %v5686 = vsel %vm1583, %v5681, %v5683
    %v5687 = vsel %vm1583, %v5683, %v5679
    %v5692 = vadd.f32 %v5458, %v5684
    %v5693 = vadd.f32 %v5459, %v5685
    %v5694 = vadd.f32 %v5460, %v5686
    %v5695 = vadd.f32 %v5461, %v5687
    %s5696 = sld [smem:[#allocation2 + $0x86]]
    %v5697 = vstv %s5696
    %v5698 = vmul.f32 %v5697, %v44
    %v5699 = vmul.f32 %v5697, %v45
    %v5700 = vmul.f32 %v5697, 0.0
    %v5701 = vmul.f32 %v5697, %v48
    %v5702 = vmul.f32 %v5697, %v49
    %v5708 = vrot.slane %v5698, 2
    %v5709 = vrot.slane %v5699, 2
    %v5710 = vrot.slane %v5700, 2
    %v5711 = vrot.slane %v5701, 2
    %v5712 = vrot.slane %v5702, 2
    %5713 = vrot.lane.b32.xlu0 %v5708, 94
    %v5714 = vpop.permute.xlu0 %5713
    %5715 = vrot.lane.b32.xlu0 %v5709, 94
    %v5716 = vpop.permute.xlu0 %5715
    %5717 = vrot.lane.b32.xlu0 %v5710, 94
    %v5718 = vpop.permute.xlu0 %5717
    %5719 = vrot.lane.b32.xlu0 %v5711, 94
    %v5720 = vpop.permute.xlu0 %5719
    %5721 = vrot.lane.b32.xlu0 %v5712, 94
    %v5722 = vpop.permute.xlu0 %5721
    %v5723 = vsel %vm1583, %v5714, %v5716
    %v5724 = vsel %vm1583, %v5716, %v5718
    %v5725 = vsel %vm1583, %v5720, %v5722
    %v5726 = vsel %vm1583, %v5722, %v5718
    %v5731 = vadd.f32 %v5497, %v5723
    %v5732 = vadd.f32 %v5498, %v5724
    %v5733 = vadd.f32 %v5499, %v5725
    %v5734 = vadd.f32 %v5500, %v5726
    %s5735 = sld [smem:[#allocation2 + $0xa1]]
    %v5736 = vstv %s5735
    %v5737 = vmul.f32 %v5736, %v44
    %v5738 = vmul.f32 %v5736, %v45
    %v5739 = vmul.f32 %v5736, 0.0
    %v5740 = vmul.f32 %v5736, %v48
    %v5741 = vmul.f32 %v5736, %v49
    %v5747 = vrot.slane %v5737, 2
    %v5748 = vrot.slane %v5738, 2
    %v5749 = vrot.slane %v5739, 2
    %v5750 = vrot.slane %v5740, 2
    %v5751 = vrot.slane %v5741, 2
    %5752 = vrot.lane.b32.xlu0 %v5747, 94
    %v5753 = vpop.permute.xlu0 %5752
    %5754 = vrot.lane.b32.xlu0 %v5748, 94
    %v5755 = vpop.permute.xlu0 %5754
    %5756 = vrot.lane.b32.xlu0 %v5749, 94
    %v5757 = vpop.permute.xlu0 %5756
    %5758 = vrot.lane.b32.xlu0 %v5750, 94
    %v5759 = vpop.permute.xlu0 %5758
    %5760 = vrot.lane.b32.xlu0 %v5751, 94
    %v5761 = vpop.permute.xlu0 %5760
    %v5762 = vsel %vm1583, %v5753, %v5755
    %v5763 = vsel %vm1583, %v5755, %v5757
    %v5764 = vsel %vm1583, %v5759, %v5761
    %v5765 = vsel %vm1583, %v5761, %v5757
    %v5770 = vadd.f32 %v5536, %v5762
    %v5771 = vadd.f32 %v5537, %v5763
    %v5772 = vadd.f32 %v5538, %v5764
    %v5773 = vadd.f32 %v5539, %v5765
    %v5778 = vrot.slane %v5576, 6
    %v5779 = vrot.slane %v5578, 6
    %vm5780 = vcmask 1041408
    %v5781 = vsel %vm5780, %v5575, %v5778
    %v5782 = vsel %vm5780, %v5577, %v5779
    %vm5783 = vcmask 1044484
    %v5784 = vsel %vm5783, %v5781, %v5781
    %vm5785 = vcmask 1046534
    %v5786 = vsel %vm5785, %v5781, %v5784
    %v5787 = vrot.slane %v5782, 7
    %vm5788 = vcmask 1041409
    %v5789 = vsel %vm5788, %v5787, %v5786
    %vm5790 = vcmask 1043459
    %v5791 = vsel %vm5790, %v5787, %v5789
    %vm5792 = vcmask 1045509
    %v5793 = vsel %vm5792, %v5787, %v5791
    %vm5794 = vcmask 1047559
    %v5795 = vsel %vm5794, %v5787, %v5793
    %5797 = vst [vmem:[%s3] sm:$0xf] %v5795
    %v5802 = vrot.slane %v5615, 6
    %v5803 = vrot.slane %v5617, 6
    %v5804 = vsel %vm5780, %v5614, %v5802
    %v5805 = vsel %vm5780, %v5616, %v5803
    %v5806 = vsel %vm5783, %v5804, %v5804
    %v5807 = vsel %vm5785, %v5804, %v5806
    %v5808 = vrot.slane %v5805, 7
    %v5809 = vsel %vm5788, %v5808, %v5807
    %v5810 = vsel %vm5790, %v5808, %v5809
    %v5811 = vsel %vm5792, %v5808, %v5810
    %v5812 = vsel %vm5794, %v5808, %v5811
    %s5814 = scalar_lea.vmem %s3, 4
    %5815 = vst [vmem:[%s5814] sm:$0xf] %v5812
    %v5820 = vrot.slane %v5654, 6
    %v5821 = vrot.slane %v5656, 6
    %v5822 = vsel %vm5780, %v5653, %v5820
    %v5823 = vsel %vm5780, %v5655, %v5821
    %v5824 = vsel %vm5783, %v5822, %v5822
    %v5825 = vsel %vm5785, %v5822, %v5824
    %v5826 = vrot.slane %v5823, 7
    %v5827 = vsel %vm5788, %v5826, %v5825
    %v5828 = vsel %vm5790, %v5826, %v5827
    %v5829 = vsel %vm5792, %v5826, %v5828
    %v5830 = vsel %vm5794, %v5826, %v5829
    %s5832 = scalar_lea.vmem %s3, 8
    %5833 = vst [vmem:[%s5832] sm:$0xf] %v5830
    %v5838 = vrot.slane %v5693, 6
    %v5839 = vrot.slane %v5695, 6
    %v5840 = vsel %vm5780, %v5692, %v5838
    %v5841 = vsel %vm5780, %v5694, %v5839
    %v5842 = vsel %vm5783, %v5840, %v5840
    %v5843 = vsel %vm5785, %v5840, %v5842
    %v5844 = vrot.slane %v5841, 7
    %v5845 = vsel %vm5788, %v5844, %v5843
    %v5846 = vsel %vm5790, %v5844, %v5845
    %v5847 = vsel %vm5792, %v5844, %v5846
    %v5848 = vsel %vm5794, %v5844, %v5847
    %s5850 = scalar_lea.vmem %s3, 12
    %5851 = vst [vmem:[%s5850] sm:$0xf] %v5848
    %v5856 = vrot.slane %v5732, 6
    %v5857 = vrot.slane %v5734, 6
    %v5858 = vsel %vm5780, %v5731, %v5856
    %v5859 = vsel %vm5780, %v5733, %v5857
    %v5860 = vsel %vm5783, %v5858, %v5858
    %v5861 = vsel %vm5785, %v5858, %v5860
    %v5862 = vrot.slane %v5859, 7
    %v5863 = vsel %vm5788, %v5862, %v5861
    %v5864 = vsel %vm5790, %v5862, %v5863
    %v5865 = vsel %vm5792, %v5862, %v5864
    %v5866 = vsel %vm5794, %v5862, %v5865
    %s5868 = scalar_lea.vmem %s3, 16
    %5869 = vst [vmem:[%s5868] sm:$0xf] %v5866
    %v5874 = vrot.slane %v5771, 6
    %v5875 = vrot.slane %v5773, 6
    %v5876 = vsel %vm5780, %v5770, %v5874
    %v5877 = vsel %vm5780, %v5772, %v5875
    %v5878 = vsel %vm5783, %v5876, %v5876
    %v5879 = vsel %vm5785, %v5876, %v5878
    %v5880 = vrot.slane %v5877, 7
    %v5881 = vsel %vm5788, %v5880, %v5879
    %v5882 = vsel %vm5790, %v5880, %v5881
    %v5883 = vsel %vm5792, %v5880, %v5882
    %v5884 = vsel %vm5794, %v5880, %v5883
    %s5886 = scalar_lea.vmem %s3, 20
    %5887 = vst [vmem:[%s5886] sm:$0xf] %v5884
    // Predicated region
    $region22: #{conv2d_pallas.1} parent=1 // pred_check
      _
    $region23: #{conv2d_pallas.1} parent=1 // pred_check_branch
      %5889 = sbr.rel (0) target = $region25
    $region24: #{conv2d_pallas.1} parent=1 // pred_region
      _
    $region25: #{conv2d_pallas.1} parent=1 // pred_fallthru
      _
    // Predicated region
    $region26: #{conv2d_pallas.1} parent=1 // pred_check
      _
    $region27: #{conv2d_pallas.1} parent=1 // pred_check_branch
      %5891 = sbr.rel (0) target = $region29
    $region28: #{conv2d_pallas.1} parent=1 // pred_region
      _
    $region29: #{conv2d_pallas.1} parent=1 // pred_fallthru
      _
    %5892 = vsyncpa [#allocation3], 1
    %5893 = vsyncpa [#allocation5], 1

</llo_original>
